<compile_context>
chip_gen: v7x
topology: tpu7x:2x2x1
jax: 0.10.0
libtpu: 0.0.40
codegen_flags: <defaults>
</compile_context>

<pallas_src>
import functools

import jax
import jax.numpy as jnp
from jax import lax
from jax.experimental import pallas as pl
from jax.experimental.pallas import tpu as pltpu


# --------------------------------------------------------------------------
# Fused Pallas kernel: the whole TFCM stack for one batch element (grid step).
# --------------------------------------------------------------------------
def tfcm_fused_kernel(x_ref, masks_ref, w1_ref, b1_ref, a1_ref, dw_ref,
                      bdw_ref, a2_ref, w2_ref, b2_ref, o_ref, *,
                      n_layers, T, causal_rows):
    x = x_ref[...].astype(jnp.float32)            # (C, N), N = F*T
    N = x.shape[1]

    def roll_lanes(v, shift):
        # result[:, n] = v[:, (n - shift) mod N]   (jnp.roll semantics)
        shift = shift % N
        return v if shift == 0 else pltpu.roll(v, shift, axis=1)

    # Precomputed 0/1 masks (layer/batch invariant): rows 0,1 are the frequency
    # validity masks, remaining rows are causal masks (t >= d).
    f_top_ok = masks_ref[0:1, :]                  # valid where f >= 1   (df = -1)
    f_bot_ok = masks_ref[1:2, :]                  # valid where f <= F-2 (df = +1)

    for l in range(n_layers):
        dila = 2 ** l

        # ---- pconv1: 1x1 conv (BN folded) + PReLU; bf16 operands on the MXU --
        h = jnp.dot(w1_ref[l], x.astype(jnp.bfloat16),
                    preferred_element_type=jnp.float32) + b1_ref[l]
        h = jnp.where(h >= 0, h, a1_ref[l] * h)

        # ---- depthwise dilated causal 3x3 conv (BN folded) + PReLU -----------
        # Tap (kh, kw) reads h[c, f + kh - 1, t - (2 - kw) * dila].
        # Build the 3 freq-shifted / freq-masked buffers once per layer; per kw
        # column, weight-and-sum over kh FIRST, then a single time roll + causal
        # mask (the lane-constant (C,1) tap weight commutes with the roll).
        hf = (f_top_ok * roll_lanes(h, T),        # df = -1 (reads f-1)
              h,                                  # df =  0
              f_bot_ok * roll_lanes(h, -T))       # df = +1 (reads f+1)
        acc = None
        for kw in range(3):
            d = (2 - kw) * dila                   # causal time offset (>= 0)
            if d >= T:
                continue                          # tap reads only the zero pad
            u = None
            for kh in range(3):
                w_tap = dw_ref[l * 9 + kh * 3 + kw]     # (C, 1), BN-folded
                term = w_tap * hf[kh]
                u = term if u is None else u + term
            if d > 0:
                r = causal_rows[d]
                u = roll_lanes(u, d) * masks_ref[r:r + 1, :]
            acc = u if acc is None else acc + u
        g = acc + bdw_ref[l]
        g = jnp.where(g >= 0, g, a2_ref[l] * g)

        # ---- pconv2: 1x1 conv + residual --------------------------------------
        y = jnp.dot(w2_ref[l], g.astype(jnp.bfloat16),
                    preferred_element_type=jnp.float32) + b2_ref[l]
        x = y + x

    o_ref[...] = x.astype(o_ref.dtype)


# --------------------------------------------------------------------------
# Host-side parameter folding / stacking (BN folded into conv weights).
# --------------------------------------------------------------------------
def pack_params(layer_params):
    C = layer_params[0]["w1"].shape[0]
    w1s, b1s, a1s, dws, bdws, a2s, w2s, b2s = [], [], [], [], [], [], [], []
    for p in layer_params:
        s1, bias1 = p["bn1_scale"], p["bn1_bias"]      # (C, 1)
        s2, bias2 = p["bn2_scale"], p["bn2_bias"]      # (C, 1)
        w1s.append((s1 * p["w1"]).astype(jnp.bfloat16))     # row-scaled, bf16
        b1s.append(s1 * p["b1"] + bias1)
        a1s.append(p["a1"])
        dw = p["dw"] * s2[:, :, None]                  # (C, 3, 3) BN-scaled
        # tap-major layout: index j = kh*3 + kw -> one (C, 1) column per tap
        dws.append(jnp.transpose(dw, (1, 2, 0)).reshape(9, C, 1))
        bdws.append(s2 * p["bdw"] + bias2)
        a2s.append(p["a2"])
        w2s.append(p["w2"].astype(jnp.bfloat16))
        b2s.append(p["b2"])
    return dict(
        w1=jnp.stack(w1s),             # (L, C, C)  bf16
        b1=jnp.stack(b1s),             # (L, C, 1)  f32
        a1=jnp.stack(a1s),             # (L, C, 1)  f32
        dw=jnp.concatenate(dws, 0),    # (L*9, C, 1) f32
        bdw=jnp.stack(bdws),           # (L, C, 1)  f32
        a2=jnp.stack(a2s),             # (L, C, 1)  f32
        w2=jnp.stack(w2s),             # (L, C, C)  bf16
        b2=jnp.stack(b2s),             # (L, C, 1)  f32
    )


def build_masks(F, T, n_layers):
    """0/1 f32 masks over the flattened (F*T,) plane, shared by all layers."""
    N = F * T
    n = jnp.arange(N, dtype=jnp.int32)
    t = n % T
    f = n // T
    rows = [(f >= 1).astype(jnp.float32),           # row 0: df = -1 valid
            (f <= F - 2).astype(jnp.float32)]       # row 1: df = +1 valid
    causal_rows = {}
    dists = sorted({(2 - kw) * (2 ** l) for l in range(n_layers) for kw in (0, 1)})
    for d in dists:
        if 0 < d < T:
            causal_rows[d] = len(rows)
            rows.append((t >= d).astype(jnp.float32))
    return jnp.stack(rows), causal_rows             # (n_rows, N)


# --------------------------------------------------------------------------
# Wrapper: grid over batch; weights/masks resident via constant index maps.
# --------------------------------------------------------------------------
def tfcm_forward(x, layer_params):
    """x: (B, C, F, T) float32 (PyTorch NCHW, H=F, W=T)."""
    B, C, F, T = x.shape
    L = len(layer_params)
    N = F * T
    packed = pack_params(layer_params)
    masks, causal_rows = build_masks(F, T, L)

    xr = x.reshape(B, C, N)                          # reshape only, no transpose

    def full_spec(a):
        nd = a.ndim
        return pl.BlockSpec(a.shape, lambda b, _nd=nd: (0,) * _nd)

    act_spec = pl.BlockSpec((None, C, N), lambda b: (b, 0, 0))

    kern = functools.partial(tfcm_fused_kernel, n_layers=L, T=T,
                             causal_rows=causal_rows)
    args = (xr, masks, packed["w1"], packed["b1"], packed["a1"], packed["dw"],
            packed["bdw"], packed["a2"], packed["w2"], packed["b2"])

    out = pl.pallas_call(
        kern,
        out_shape=jax.ShapeDtypeStruct((B, C, N), x.dtype),
        grid=(B,),
        in_specs=[act_spec] + [full_spec(a) for a in args[1:]],
        out_specs=act_spec,
        input_output_aliases={0: 0},                 # reuse the activation buffer
        compiler_params=pltpu.CompilerParams(
            dimension_semantics=("parallel",)),      # megacore on v7x
    )(*args)

    return out.reshape(B, C, F, T)


# --------------------------------------------------------------------------
# Deterministic synthetic parameters (shapes match TFCM_Block.__init__).
# --------------------------------------------------------------------------
def init_params(key, cin, n_layers):
    eps = 1e-5
    layers = []
    for _ in range(n_layers):
        key, *ks = jax.random.split(key, 15)

        def bn_fold(kg, kb, km, kv):
            gamma = 1.0 + 0.1 * jax.random.normal(kg, (cin,), jnp.float32)
            beta = 0.05 * jax.random.normal(kb, (cin,), jnp.float32)
            mean = 0.05 * jax.random.normal(km, (cin,), jnp.float32)
            var = 1.0 + 0.1 * jax.random.uniform(kv, (cin,), jnp.float32)
            scale = gamma / jnp.sqrt(var + eps)
            bias = beta - mean * scale
            return scale.reshape(cin, 1), bias.reshape(cin, 1)

        bn1_s, bn1_b = bn_fold(ks[0], ks[1], ks[2], ks[3])
        bn2_s, bn2_b = bn_fold(ks[4], ks[5], ks[6], ks[7])
        p = {
            "w1": 0.15 * jax.random.normal(ks[8], (cin, cin), jnp.float32),
            "b1": 0.05 * jax.random.normal(ks[9], (cin, 1), jnp.float32),
            "bn1_scale": bn1_s, "bn1_bias": bn1_b,
            "a1": 0.25 * jnp.ones((cin, 1), jnp.float32),     # PReLU default
            "dw": 0.2 * jax.random.normal(ks[10], (cin, 3, 3), jnp.float32),
            "bdw": 0.05 * jax.random.normal(ks[11], (cin, 1), jnp.float32),
            "bn2_scale": bn2_s, "bn2_bias": bn2_b,
            "a2": 0.25 * jnp.ones((cin, 1), jnp.float32),
            "w2": 0.15 * jax.random.normal(ks[12], (cin, cin), jnp.float32),
            "b2": 0.05 * jax.random.normal(ks[13], (cin, 1), jnp.float32),
        }
        layers.append(p)
    return layers


# --------------------------------------------------------------------------
# Pure-JAX reference (unfolded BN, f32 HIGHEST precision; correctness only).
# --------------------------------------------------------------------------
def _tfcm_block_ref(x, p, dila):
    C = x.shape[1]
    dn = ("NCHW", "OIHW", "NCHW")
    prec = lax.Precision.HIGHEST

    def bcast(v):
        return v.reshape(1, C, 1, 1)

    def prelu(v, a):
        return jnp.where(v >= 0, v, bcast(a) * v)

    h = lax.conv_general_dilated(x, p["w1"][:, :, None, None], (1, 1), "VALID",
                                 dimension_numbers=dn, precision=prec)
    h = h + bcast(p["b1"])
    h = h * bcast(p["bn1_scale"]) + bcast(p["bn1_bias"])
    h = prelu(h, p["a1"])

    hp = jnp.pad(h, ((0, 0), (0, 0), (1, 1), (2 * dila, 0)))
    g = lax.conv_general_dilated(hp, p["dw"][:, None, :, :], (1, 1), "VALID",
                                 rhs_dilation=(1, dila), dimension_numbers=dn,
                                 feature_group_count=C, precision=prec)
    g = g + bcast(p["bdw"])
    g = g * bcast(p["bn2_scale"]) + bcast(p["bn2_bias"])
    g = prelu(g, p["a2"])

    y = lax.conv_general_dilated(g, p["w2"][:, :, None, None], (1, 1), "VALID",
                                 dimension_numbers=dn, precision=prec)
    y = y + bcast(p["b2"])
    return y + x


def tfcm_ref(x, layer_params):
    out = x
    for idx, p in enumerate(layer_params):
        out = _tfcm_block_ref(out, p, 2 ** idx)
    return out


if __name__ == "__main__":
    B, C, F, T = 2, 8, 16, 64          # small shapes; cin=8, 6 layers, causal
    n_layers = 6
    key = jax.random.PRNGKey(0)
    kx, kp = jax.random.split(key)
    x = jax.random.normal(kx, (B, C, F, T), jnp.float32)
    params = init_params(kp, C, n_layers)

    # Reference first (the kernel's flattened activation input is aliased/donated).
    ref = tfcm_ref(x, params)

    out = tfcm_forward(x, params)
    out = jax.block_until_ready(out)

    assert out.shape == (B, C, F, T)
    # Tolerance accounts for the intentional bf16 MXU operands in the 1x1 convs.
    err = float(jnp.max(jnp.abs(out - ref)))
    assert err < 5e-2, f"max abs err too large: {err}"
    print("KERNEL_OK")
</pallas_src>

<mosaic_0001>
module attributes {stable_mosaic.version = 11 : i64} {
  func.func @tfcm_fused_kernel(%arg0: i32, %arg1: memref<1x8x1024xf32, #tpu.memory_space<vmem>>, %arg2: memref<8x1024xf32, #tpu.memory_space<vmem>>, %arg3: memref<6x8x8xbf16, #tpu.memory_space<vmem>>, %arg4: memref<6x8x1xf32, #tpu.memory_space<vmem>>, %arg5: memref<6x8x1xf32, #tpu.memory_space<vmem>>, %arg6: memref<54x8x1xf32, #tpu.memory_space<vmem>>, %arg7: memref<6x8x1xf32, #tpu.memory_space<vmem>>, %arg8: memref<6x8x1xf32, #tpu.memory_space<vmem>>, %arg9: memref<6x8x8xbf16, #tpu.memory_space<vmem>>, %arg10: memref<6x8x1xf32, #tpu.memory_space<vmem>>, %arg11: memref<1x8x1024xf32, #tpu.memory_space<vmem>>) attributes {dimension_semantics = [#tpu.dimension_semantics<parallel>], iteration_bounds = array<i64: 2>, scalar_prefetch = 0 : i64, scratch_operands = 0 : i64, tpu.core_type = #tpu.core_type<tc>, window_params = [{transform_indices = @transform_0, window_bounds = array<i64: 1, 8, 1024>}, {pipeline_mode = #tpu.pipeline_mode<synchronous>, transform_indices = @transform_1, window_bounds = array<i64: 8, 1024>}, {pipeline_mode = #tpu.pipeline_mode<synchronous>, transform_indices = @transform_2, window_bounds = array<i64: 6, 8, 8>}, {pipeline_mode = #tpu.pipeline_mode<synchronous>, transform_indices = @transform_3, window_bounds = array<i64: 6, 8, 1>}, {pipeline_mode = #tpu.pipeline_mode<synchronous>, transform_indices = @transform_4, window_bounds = array<i64: 6, 8, 1>}, {pipeline_mode = #tpu.pipeline_mode<synchronous>, transform_indices = @transform_5, window_bounds = array<i64: 54, 8, 1>}, {pipeline_mode = #tpu.pipeline_mode<synchronous>, transform_indices = @transform_6, window_bounds = array<i64: 6, 8, 1>}, {pipeline_mode = #tpu.pipeline_mode<synchronous>, transform_indices = @transform_7, window_bounds = array<i64: 6, 8, 1>}, {pipeline_mode = #tpu.pipeline_mode<synchronous>, transform_indices = @transform_8, window_bounds = array<i64: 6, 8, 8>}, {pipeline_mode = #tpu.pipeline_mode<synchronous>, transform_indices = @transform_9, window_bounds = array<i64: 6, 8, 1>}, {transform_indices = @transform_10, window_bounds = array<i64: 1, 8, 1024>}]} {
    %c0 = arith.constant 0 : index
    %c0_0 = arith.constant 0 : index
    %c0_1 = arith.constant 0 : index
    %0 = vector.load %arg1[%c0, %c0_0, %c0_1] : memref<1x8x1024xf32, #tpu.memory_space<vmem>>, vector<1x8x1024xf32>
    %1 = vector.shape_cast %0 : vector<1x8x1024xf32> to vector<8x1024xf32>
    %c0_2 = arith.constant 0 : index
    %c0_3 = arith.constant 0 : index
    %2 = vector.load %arg2[%c0_2, %c0_3] : memref<8x1024xf32, #tpu.memory_space<vmem>>, vector<1x1024xf32>
    %c1 = arith.constant 1 : index
    %c0_4 = arith.constant 0 : index
    %3 = vector.load %arg2[%c1, %c0_4] : memref<8x1024xf32, #tpu.memory_space<vmem>>, vector<1x1024xf32>
    %c0_5 = arith.constant 0 : index
    %c0_6 = arith.constant 0 : index
    %c0_7 = arith.constant 0 : index
    %4 = vector.load %arg3[%c0_5, %c0_6, %c0_7] : memref<6x8x8xbf16, #tpu.memory_space<vmem>>, vector<1x8x8xbf16>
    %5 = vector.shape_cast %4 : vector<1x8x8xbf16> to vector<8x8xbf16>
    %6 = arith.truncf %1 : vector<8x1024xf32> to vector<8x1024xbf16>
    %cst = arith.constant dense<0.000000e+00> : vector<8x1024xf32>
    %7 = tpu.matmul %5, %6, %cst {dimension_numbers = #tpu.dot_dimension_numbers<[1], [0], [0], [1], [0, 0, 1, 1], [], []>} : vector<8x8xbf16>, vector<8x1024xbf16>, vector<8x1024xf32> -> vector<8x1024xf32>
    %c0_8 = arith.constant 0 : index
    %c0_9 = arith.constant 0 : index
    %c0_10 = arith.constant 0 : index
    %8 = vector.load %arg4[%c0_8, %c0_9, %c0_10] : memref<6x8x1xf32, #tpu.memory_space<vmem>>, vector<1x8x1xf32>
    %9 = vector.shape_cast %8 : vector<1x8x1xf32> to vector<8x1xf32>
    %10 = vector.broadcast %9 : vector<8x1xf32> to vector<8x1024xf32>
    %11 = arith.addf %7, %10 : vector<8x1024xf32>
    %cst_11 = arith.constant 0.000000e+00 : f32
    %12 = vector.broadcast %cst_11 : f32 to vector<8x1024xf32>
    %13 = arith.cmpf oge, %11, %12 : vector<8x1024xf32>
    %c0_12 = arith.constant 0 : index
    %c0_13 = arith.constant 0 : index
    %c0_14 = arith.constant 0 : index
    %14 = vector.load %arg5[%c0_12, %c0_13, %c0_14] : memref<6x8x1xf32, #tpu.memory_space<vmem>>, vector<1x8x1xf32>
    %15 = vector.shape_cast %14 : vector<1x8x1xf32> to vector<8x1xf32>
    %16 = vector.broadcast %15 : vector<8x1xf32> to vector<8x1024xf32>
    %17 = arith.mulf %16, %11 : vector<8x1024xf32>
    %18 = arith.select %13, %11, %17 : vector<8x1024xi1>, vector<8x1024xf32>
    %c64_i32 = arith.constant 64 : i32
    %19 = tpu.dynamic_rotate %18 by %c64_i32 dim 1 : vector<8x1024xf32>, i32 -> vector<8x1024xf32>
    %20 = vector.broadcast %2 : vector<1x1024xf32> to vector<8x1024xf32>
    %21 = arith.mulf %20, %19 : vector<8x1024xf32>
    %c960_i32 = arith.constant 960 : i32
    %22 = tpu.dynamic_rotate %18 by %c960_i32 dim 1 : vector<8x1024xf32>, i32 -> vector<8x1024xf32>
    %23 = vector.broadcast %3 : vector<1x1024xf32> to vector<8x1024xf32>
    %24 = arith.mulf %23, %22 : vector<8x1024xf32>
    %c0_15 = arith.constant 0 : index
    %c0_16 = arith.constant 0 : index
    %c0_17 = arith.constant 0 : index
    %25 = vector.load %arg6[%c0_15, %c0_16, %c0_17] : memref<54x8x1xf32, #tpu.memory_space<vmem>>, vector<1x8x1xf32>
    %26 = vector.shape_cast %25 : vector<1x8x1xf32> to vector<8x1xf32>
    %27 = vector.broadcast %26 : vector<8x1xf32> to vector<8x1024xf32>
    %28 = arith.mulf %27, %21 : vector<8x1024xf32>
    %c3 = arith.constant 3 : index
    %c0_18 = arith.constant 0 : index
    %c0_19 = arith.constant 0 : index
    %29 = vector.load %arg6[%c3, %c0_18, %c0_19] : memref<54x8x1xf32, #tpu.memory_space<vmem>>, vector<1x8x1xf32>
    %30 = vector.shape_cast %29 : vector<1x8x1xf32> to vector<8x1xf32>
    %31 = vector.broadcast %30 : vector<8x1xf32> to vector<8x1024xf32>
    %32 = arith.mulf %31, %18 : vector<8x1024xf32>
    %33 = arith.addf %28, %32 : vector<8x1024xf32>
    %c6 = arith.constant 6 : index
    %c0_20 = arith.constant 0 : index
    %c0_21 = arith.constant 0 : index
    %34 = vector.load %arg6[%c6, %c0_20, %c0_21] : memref<54x8x1xf32, #tpu.memory_space<vmem>>, vector<1x8x1xf32>
    %35 = vector.shape_cast %34 : vector<1x8x1xf32> to vector<8x1xf32>
    %36 = vector.broadcast %35 : vector<8x1xf32> to vector<8x1024xf32>
    %37 = arith.mulf %36, %24 : vector<8x1024xf32>
    %38 = arith.addf %33, %37 : vector<8x1024xf32>
    %c2_i32 = arith.constant 2 : i32
    %39 = tpu.dynamic_rotate %38 by %c2_i32 dim 1 : vector<8x1024xf32>, i32 -> vector<8x1024xf32>
    %c3_22 = arith.constant 3 : index
    %c0_23 = arith.constant 0 : index
    %40 = vector.load %arg2[%c3_22, %c0_23] : memref<8x1024xf32, #tpu.memory_space<vmem>>, vector<1x1024xf32>
    %41 = vector.broadcast %40 : vector<1x1024xf32> to vector<8x1024xf32>
    %42 = arith.mulf %39, %41 : vector<8x1024xf32>
    %c1_24 = arith.constant 1 : index
    %c0_25 = arith.constant 0 : index
    %c0_26 = arith.constant 0 : index
    %43 = vector.load %arg6[%c1_24, %c0_25, %c0_26] : memref<54x8x1xf32, #tpu.memory_space<vmem>>, vector<1x8x1xf32>
    %44 = vector.shape_cast %43 : vector<1x8x1xf32> to vector<8x1xf32>
    %45 = vector.broadcast %44 : vector<8x1xf32> to vector<8x1024xf32>
    %46 = arith.mulf %45, %21 : vector<8x1024xf32>
    %c4 = arith.constant 4 : index
    %c0_27 = arith.constant 0 : index
    %c0_28 = arith.constant 0 : index
    %47 = vector.load %arg6[%c4, %c0_27, %c0_28] : memref<54x8x1xf32, #tpu.memory_space<vmem>>, vector<1x8x1xf32>
    %48 = vector.shape_cast %47 : vector<1x8x1xf32> to vector<8x1xf32>
    %49 = vector.broadcast %48 : vector<8x1xf32> to vector<8x1024xf32>
    %50 = arith.mulf %49, %18 : vector<8x1024xf32>
    %51 = arith.addf %46, %50 : vector<8x1024xf32>
    %c7 = arith.constant 7 : index
    %c0_29 = arith.constant 0 : index
    %c0_30 = arith.constant 0 : index
    %52 = vector.load %arg6[%c7, %c0_29, %c0_30] : memref<54x8x1xf32, #tpu.memory_space<vmem>>, vector<1x8x1xf32>
    %53 = vector.shape_cast %52 : vector<1x8x1xf32> to vector<8x1xf32>
    %54 = vector.broadcast %53 : vector<8x1xf32> to vector<8x1024xf32>
    %55 = arith.mulf %54, %24 : vector<8x1024xf32>
    %56 = arith.addf %51, %55 : vector<8x1024xf32>
    %c1_i32 = arith.constant 1 : i32
    %57 = tpu.dynamic_rotate %56 by %c1_i32 dim 1 : vector<8x1024xf32>, i32 -> vector<8x1024xf32>
    %c2 = arith.constant 2 : index
    %c0_31 = arith.constant 0 : index
    %58 = vector.load %arg2[%c2, %c0_31] : memref<8x1024xf32, #tpu.memory_space<vmem>>, vector<1x1024xf32>
    %59 = vector.broadcast %58 : vector<1x1024xf32> to vector<8x1024xf32>
    %60 = arith.mulf %57, %59 : vector<8x1024xf32>
    %61 = arith.addf %42, %60 : vector<8x1024xf32>
    %c2_32 = arith.constant 2 : index
    %c0_33 = arith.constant 0 : index
    %c0_34 = arith.constant 0 : index
    %62 = vector.load %arg6[%c2_32, %c0_33, %c0_34] : memref<54x8x1xf32, #tpu.memory_space<vmem>>, vector<1x8x1xf32>
    %63 = vector.shape_cast %62 : vector<1x8x1xf32> to vector<8x1xf32>
    %64 = vector.broadcast %63 : vector<8x1xf32> to vector<8x1024xf32>
    %65 = arith.mulf %64, %21 : vector<8x1024xf32>
    %c5 = arith.constant 5 : index
    %c0_35 = arith.constant 0 : index
    %c0_36 = arith.constant 0 : index
    %66 = vector.load %arg6[%c5, %c0_35, %c0_36] : memref<54x8x1xf32, #tpu.memory_space<vmem>>, vector<1x8x1xf32>
    %67 = vector.shape_cast %66 : vector<1x8x1xf32> to vector<8x1xf32>
    %68 = vector.broadcast %67 : vector<8x1xf32> to vector<8x1024xf32>
    %69 = arith.mulf %68, %18 : vector<8x1024xf32>
    %70 = arith.addf %65, %69 : vector<8x1024xf32>
    %c8 = arith.constant 8 : index
    %c0_37 = arith.constant 0 : index
    %c0_38 = arith.constant 0 : index
    %71 = vector.load %arg6[%c8, %c0_37, %c0_38] : memref<54x8x1xf32, #tpu.memory_space<vmem>>, vector<1x8x1xf32>
    %72 = vector.shape_cast %71 : vector<1x8x1xf32> to vector<8x1xf32>
    %73 = vector.broadcast %72 : vector<8x1xf32> to vector<8x1024xf32>
    %74 = arith.mulf %73, %24 : vector<8x1024xf32>
    %75 = arith.addf %70, %74 : vector<8x1024xf32>
    %76 = arith.addf %61, %75 : vector<8x1024xf32>
    %c0_39 = arith.constant 0 : index
    %c0_40 = arith.constant 0 : index
    %c0_41 = arith.constant 0 : index
    %77 = vector.load %arg7[%c0_39, %c0_40, %c0_41] : memref<6x8x1xf32, #tpu.memory_space<vmem>>, vector<1x8x1xf32>
    %78 = vector.shape_cast %77 : vector<1x8x1xf32> to vector<8x1xf32>
    %79 = vector.broadcast %78 : vector<8x1xf32> to vector<8x1024xf32>
    %80 = arith.addf %76, %79 : vector<8x1024xf32>
    %cst_42 = arith.constant 0.000000e+00 : f32
    %81 = vector.broadcast %cst_42 : f32 to vector<8x1024xf32>
    %82 = arith.cmpf oge, %80, %81 : vector<8x1024xf32>
    %c0_43 = arith.constant 0 : index
    %c0_44 = arith.constant 0 : index
    %c0_45 = arith.constant 0 : index
    %83 = vector.load %arg8[%c0_43, %c0_44, %c0_45] : memref<6x8x1xf32, #tpu.memory_space<vmem>>, vector<1x8x1xf32>
    %84 = vector.shape_cast %83 : vector<1x8x1xf32> to vector<8x1xf32>
    %85 = vector.broadcast %84 : vector<8x1xf32> to vector<8x1024xf32>
    %86 = arith.mulf %85, %80 : vector<8x1024xf32>
    %87 = arith.select %82, %80, %86 : vector<8x1024xi1>, vector<8x1024xf32>
    %c0_46 = arith.constant 0 : index
    %c0_47 = arith.constant 0 : index
    %c0_48 = arith.constant 0 : index
    %88 = vector.load %arg9[%c0_46, %c0_47, %c0_48] : memref<6x8x8xbf16, #tpu.memory_space<vmem>>, vector<1x8x8xbf16>
    %89 = vector.shape_cast %88 : vector<1x8x8xbf16> to vector<8x8xbf16>
    %90 = arith.truncf %87 : vector<8x1024xf32> to vector<8x1024xbf16>
    %cst_49 = arith.constant dense<0.000000e+00> : vector<8x1024xf32>
    %91 = tpu.matmul %89, %90, %cst_49 {dimension_numbers = #tpu.dot_dimension_numbers<[1], [0], [0], [1], [0, 0, 1, 1], [], []>} : vector<8x8xbf16>, vector<8x1024xbf16>, vector<8x1024xf32> -> vector<8x1024xf32>
    %c0_50 = arith.constant 0 : index
    %c0_51 = arith.constant 0 : index
    %c0_52 = arith.constant 0 : index
    %92 = vector.load %arg10[%c0_50, %c0_51, %c0_52] : memref<6x8x1xf32, #tpu.memory_space<vmem>>, vector<1x8x1xf32>
    %93 = vector.shape_cast %92 : vector<1x8x1xf32> to vector<8x1xf32>
    %94 = vector.broadcast %93 : vector<8x1xf32> to vector<8x1024xf32>
    %95 = arith.addf %91, %94 : vector<8x1024xf32>
    %96 = arith.addf %95, %1 : vector<8x1024xf32>
    %c1_53 = arith.constant 1 : index
    %c0_54 = arith.constant 0 : index
    %c0_55 = arith.constant 0 : index
    %97 = vector.load %arg3[%c1_53, %c0_54, %c0_55] : memref<6x8x8xbf16, #tpu.memory_space<vmem>>, vector<1x8x8xbf16>
    %98 = vector.shape_cast %97 : vector<1x8x8xbf16> to vector<8x8xbf16>
    %99 = arith.truncf %96 : vector<8x1024xf32> to vector<8x1024xbf16>
    %cst_56 = arith.constant dense<0.000000e+00> : vector<8x1024xf32>
    %100 = tpu.matmul %98, %99, %cst_56 {dimension_numbers = #tpu.dot_dimension_numbers<[1], [0], [0], [1], [0, 0, 1, 1], [], []>} : vector<8x8xbf16>, vector<8x1024xbf16>, vector<8x1024xf32> -> vector<8x1024xf32>
    %c1_57 = arith.constant 1 : index
    %c0_58 = arith.constant 0 : index
    %c0_59 = arith.constant 0 : index
    %101 = vector.load %arg4[%c1_57, %c0_58, %c0_59] : memref<6x8x1xf32, #tpu.memory_space<vmem>>, vector<1x8x1xf32>
    %102 = vector.shape_cast %101 : vector<1x8x1xf32> to vector<8x1xf32>
    %103 = vector.broadcast %102 : vector<8x1xf32> to vector<8x1024xf32>
    %104 = arith.addf %100, %103 : vector<8x1024xf32>
    %cst_60 = arith.constant 0.000000e+00 : f32
    %105 = vector.broadcast %cst_60 : f32 to vector<8x1024xf32>
    %106 = arith.cmpf oge, %104, %105 : vector<8x1024xf32>
    %c1_61 = arith.constant 1 : index
    %c0_62 = arith.constant 0 : index
    %c0_63 = arith.constant 0 : index
    %107 = vector.load %arg5[%c1_61, %c0_62, %c0_63] : memref<6x8x1xf32, #tpu.memory_space<vmem>>, vector<1x8x1xf32>
    %108 = vector.shape_cast %107 : vector<1x8x1xf32> to vector<8x1xf32>
    %109 = vector.broadcast %108 : vector<8x1xf32> to vector<8x1024xf32>
    %110 = arith.mulf %109, %104 : vector<8x1024xf32>
    %111 = arith.select %106, %104, %110 : vector<8x1024xi1>, vector<8x1024xf32>
    %c64_i32_64 = arith.constant 64 : i32
    %112 = tpu.dynamic_rotate %111 by %c64_i32_64 dim 1 : vector<8x1024xf32>, i32 -> vector<8x1024xf32>
    %113 = vector.broadcast %2 : vector<1x1024xf32> to vector<8x1024xf32>
    %114 = arith.mulf %113, %112 : vector<8x1024xf32>
    %c960_i32_65 = arith.constant 960 : i32
    %115 = tpu.dynamic_rotate %111 by %c960_i32_65 dim 1 : vector<8x1024xf32>, i32 -> vector<8x1024xf32>
    %116 = vector.broadcast %3 : vector<1x1024xf32> to vector<8x1024xf32>
    %117 = arith.mulf %116, %115 : vector<8x1024xf32>
    %c9 = arith.constant 9 : index
    %c0_66 = arith.constant 0 : index
    %c0_67 = arith.constant 0 : index
    %118 = vector.load %arg6[%c9, %c0_66, %c0_67] : memref<54x8x1xf32, #tpu.memory_space<vmem>>, vector<1x8x1xf32>
    %119 = vector.shape_cast %118 : vector<1x8x1xf32> to vector<8x1xf32>
    %120 = vector.broadcast %119 : vector<8x1xf32> to vector<8x1024xf32>
    %121 = arith.mulf %120, %114 : vector<8x1024xf32>
    %c12 = arith.constant 12 : index
    %c0_68 = arith.constant 0 : index
    %c0_69 = arith.constant 0 : index
    %122 = vector.load %arg6[%c12, %c0_68, %c0_69] : memref<54x8x1xf32, #tpu.memory_space<vmem>>, vector<1x8x1xf32>
    %123 = vector.shape_cast %122 : vector<1x8x1xf32> to vector<8x1xf32>
    %124 = vector.broadcast %123 : vector<8x1xf32> to vector<8x1024xf32>
    %125 = arith.mulf %124, %111 : vector<8x1024xf32>
    %126 = arith.addf %121, %125 : vector<8x1024xf32>
    %c15 = arith.constant 15 : index
    %c0_70 = arith.constant 0 : index
    %c0_71 = arith.constant 0 : index
    %127 = vector.load %arg6[%c15, %c0_70, %c0_71] : memref<54x8x1xf32, #tpu.memory_space<vmem>>, vector<1x8x1xf32>
    %128 = vector.shape_cast %127 : vector<1x8x1xf32> to vector<8x1xf32>
    %129 = vector.broadcast %128 : vector<8x1xf32> to vector<8x1024xf32>
    %130 = arith.mulf %129, %117 : vector<8x1024xf32>
    %131 = arith.addf %126, %130 : vector<8x1024xf32>
    %c4_i32 = arith.constant 4 : i32
    %132 = tpu.dynamic_rotate %131 by %c4_i32 dim 1 : vector<8x1024xf32>, i32 -> vector<8x1024xf32>
    %c4_72 = arith.constant 4 : index
    %c0_73 = arith.constant 0 : index
    %133 = vector.load %arg2[%c4_72, %c0_73] : memref<8x1024xf32, #tpu.memory_space<vmem>>, vector<1x1024xf32>
    %134 = vector.broadcast %133 : vector<1x1024xf32> to vector<8x1024xf32>
    %135 = arith.mulf %132, %134 : vector<8x1024xf32>
    %c10 = arith.constant 10 : index
    %c0_74 = arith.constant 0 : index
    %c0_75 = arith.constant 0 : index
    %136 = vector.load %arg6[%c10, %c0_74, %c0_75] : memref<54x8x1xf32, #tpu.memory_space<vmem>>, vector<1x8x1xf32>
    %137 = vector.shape_cast %136 : vector<1x8x1xf32> to vector<8x1xf32>
    %138 = vector.broadcast %137 : vector<8x1xf32> to vector<8x1024xf32>
    %139 = arith.mulf %138, %114 : vector<8x1024xf32>
    %c13 = arith.constant 13 : index
    %c0_76 = arith.constant 0 : index
    %c0_77 = arith.constant 0 : index
    %140 = vector.load %arg6[%c13, %c0_76, %c0_77] : memref<54x8x1xf32, #tpu.memory_space<vmem>>, vector<1x8x1xf32>
    %141 = vector.shape_cast %140 : vector<1x8x1xf32> to vector<8x1xf32>
    %142 = vector.broadcast %141 : vector<8x1xf32> to vector<8x1024xf32>
    %143 = arith.mulf %142, %111 : vector<8x1024xf32>
    %144 = arith.addf %139, %143 : vector<8x1024xf32>
    %c16 = arith.constant 16 : index
    %c0_78 = arith.constant 0 : index
    %c0_79 = arith.constant 0 : index
    %145 = vector.load %arg6[%c16, %c0_78, %c0_79] : memref<54x8x1xf32, #tpu.memory_space<vmem>>, vector<1x8x1xf32>
    %146 = vector.shape_cast %145 : vector<1x8x1xf32> to vector<8x1xf32>
    %147 = vector.broadcast %146 : vector<8x1xf32> to vector<8x1024xf32>
    %148 = arith.mulf %147, %117 : vector<8x1024xf32>
    %149 = arith.addf %144, %148 : vector<8x1024xf32>
    %c2_i32_80 = arith.constant 2 : i32
    %150 = tpu.dynamic_rotate %149 by %c2_i32_80 dim 1 : vector<8x1024xf32>, i32 -> vector<8x1024xf32>
    %c3_81 = arith.constant 3 : index
    %c0_82 = arith.constant 0 : index
    %151 = vector.load %arg2[%c3_81, %c0_82] : memref<8x1024xf32, #tpu.memory_space<vmem>>, vector<1x1024xf32>
    %152 = vector.broadcast %151 : vector<1x1024xf32> to vector<8x1024xf32>
    %153 = arith.mulf %150, %152 : vector<8x1024xf32>
    %154 = arith.addf %135, %153 : vector<8x1024xf32>
    %c11 = arith.constant 11 : index
    %c0_83 = arith.constant 0 : index
    %c0_84 = arith.constant 0 : index
    %155 = vector.load %arg6[%c11, %c0_83, %c0_84] : memref<54x8x1xf32, #tpu.memory_space<vmem>>, vector<1x8x1xf32>
    %156 = vector.shape_cast %155 : vector<1x8x1xf32> to vector<8x1xf32>
    %157 = vector.broadcast %156 : vector<8x1xf32> to vector<8x1024xf32>
    %158 = arith.mulf %157, %114 : vector<8x1024xf32>
    %c14 = arith.constant 14 : index
    %c0_85 = arith.constant 0 : index
    %c0_86 = arith.constant 0 : index
    %159 = vector.load %arg6[%c14, %c0_85, %c0_86] : memref<54x8x1xf32, #tpu.memory_space<vmem>>, vector<1x8x1xf32>
    %160 = vector.shape_cast %159 : vector<1x8x1xf32> to vector<8x1xf32>
    %161 = vector.broadcast %160 : vector<8x1xf32> to vector<8x1024xf32>
    %162 = arith.mulf %161, %111 : vector<8x1024xf32>
    %163 = arith.addf %158, %162 : vector<8x1024xf32>
    %c17 = arith.constant 17 : index
    %c0_87 = arith.constant 0 : index
    %c0_88 = arith.constant 0 : index
    %164 = vector.load %arg6[%c17, %c0_87, %c0_88] : memref<54x8x1xf32, #tpu.memory_space<vmem>>, vector<1x8x1xf32>
    %165 = vector.shape_cast %164 : vector<1x8x1xf32> to vector<8x1xf32>
    %166 = vector.broadcast %165 : vector<8x1xf32> to vector<8x1024xf32>
    %167 = arith.mulf %166, %117 : vector<8x1024xf32>
    %168 = arith.addf %163, %167 : vector<8x1024xf32>
    %169 = arith.addf %154, %168 : vector<8x1024xf32>
    %c1_89 = arith.constant 1 : index
    %c0_90 = arith.constant 0 : index
    %c0_91 = arith.constant 0 : index
    %170 = vector.load %arg7[%c1_89, %c0_90, %c0_91] : memref<6x8x1xf32, #tpu.memory_space<vmem>>, vector<1x8x1xf32>
    %171 = vector.shape_cast %170 : vector<1x8x1xf32> to vector<8x1xf32>
    %172 = vector.broadcast %171 : vector<8x1xf32> to vector<8x1024xf32>
    %173 = arith.addf %169, %172 : vector<8x1024xf32>
    %cst_92 = arith.constant 0.000000e+00 : f32
    %174 = vector.broadcast %cst_92 : f32 to vector<8x1024xf32>
    %175 = arith.cmpf oge, %173, %174 : vector<8x1024xf32>
    %c1_93 = arith.constant 1 : index
    %c0_94 = arith.constant 0 : index
    %c0_95 = arith.constant 0 : index
    %176 = vector.load %arg8[%c1_93, %c0_94, %c0_95] : memref<6x8x1xf32, #tpu.memory_space<vmem>>, vector<1x8x1xf32>
    %177 = vector.shape_cast %176 : vector<1x8x1xf32> to vector<8x1xf32>
    %178 = vector.broadcast %177 : vector<8x1xf32> to vector<8x1024xf32>
    %179 = arith.mulf %178, %173 : vector<8x1024xf32>
    %180 = arith.select %175, %173, %179 : vector<8x1024xi1>, vector<8x1024xf32>
    %c1_96 = arith.constant 1 : index
    %c0_97 = arith.constant 0 : index
    %c0_98 = arith.constant 0 : index
    %181 = vector.load %arg9[%c1_96, %c0_97, %c0_98] : memref<6x8x8xbf16, #tpu.memory_space<vmem>>, vector<1x8x8xbf16>
    %182 = vector.shape_cast %181 : vector<1x8x8xbf16> to vector<8x8xbf16>
    %183 = arith.truncf %180 : vector<8x1024xf32> to vector<8x1024xbf16>
    %cst_99 = arith.constant dense<0.000000e+00> : vector<8x1024xf32>
    %184 = tpu.matmul %182, %183, %cst_99 {dimension_numbers = #tpu.dot_dimension_numbers<[1], [0], [0], [1], [0, 0, 1, 1], [], []>} : vector<8x8xbf16>, vector<8x1024xbf16>, vector<8x1024xf32> -> vector<8x1024xf32>
    %c1_100 = arith.constant 1 : index
    %c0_101 = arith.constant 0 : index
    %c0_102 = arith.constant 0 : index
    %185 = vector.load %arg10[%c1_100, %c0_101, %c0_102] : memref<6x8x1xf32, #tpu.memory_space<vmem>>, vector<1x8x1xf32>
    %186 = vector.shape_cast %185 : vector<1x8x1xf32> to vector<8x1xf32>
    %187 = vector.broadcast %186 : vector<8x1xf32> to vector<8x1024xf32>
    %188 = arith.addf %184, %187 : vector<8x1024xf32>
    %189 = arith.addf %188, %96 : vector<8x1024xf32>
    %c2_103 = arith.constant 2 : index
    %c0_104 = arith.constant 0 : index
    %c0_105 = arith.constant 0 : index
    %190 = vector.load %arg3[%c2_103, %c0_104, %c0_105] : memref<6x8x8xbf16, #tpu.memory_space<vmem>>, vector<1x8x8xbf16>
    %191 = vector.shape_cast %190 : vector<1x8x8xbf16> to vector<8x8xbf16>
    %192 = arith.truncf %189 : vector<8x1024xf32> to vector<8x1024xbf16>
    %cst_106 = arith.constant dense<0.000000e+00> : vector<8x1024xf32>
    %193 = tpu.matmul %191, %192, %cst_106 {dimension_numbers = #tpu.dot_dimension_numbers<[1], [0], [0], [1], [0, 0, 1, 1], [], []>} : vector<8x8xbf16>, vector<8x1024xbf16>, vector<8x1024xf32> -> vector<8x1024xf32>
    %c2_107 = arith.constant 2 : index
    %c0_108 = arith.constant 0 : index
    %c0_109 = arith.constant 0 : index
    %194 = vector.load %arg4[%c2_107, %c0_108, %c0_109] : memref<6x8x1xf32, #tpu.memory_space<vmem>>, vector<1x8x1xf32>
    %195 = vector.shape_cast %194 : vector<1x8x1xf32> to vector<8x1xf32>
    %196 = vector.broadcast %195 : vector<8x1xf32> to vector<8x1024xf32>
    %197 = arith.addf %193, %196 : vector<8x1024xf32>
    %cst_110 = arith.constant 0.000000e+00 : f32
    %198 = vector.broadcast %cst_110 : f32 to vector<8x1024xf32>
    %199 = arith.cmpf oge, %197, %198 : vector<8x1024xf32>
    %c2_111 = arith.constant 2 : index
    %c0_112 = arith.constant 0 : index
    %c0_113 = arith.constant 0 : index
    %200 = vector.load %arg5[%c2_111, %c0_112, %c0_113] : memref<6x8x1xf32, #tpu.memory_space<vmem>>, vector<1x8x1xf32>
    %201 = vector.shape_cast %200 : vector<1x8x1xf32> to vector<8x1xf32>
    %202 = vector.broadcast %201 : vector<8x1xf32> to vector<8x1024xf32>
    %203 = arith.mulf %202, %197 : vector<8x1024xf32>
    %204 = arith.select %199, %197, %203 : vector<8x1024xi1>, vector<8x1024xf32>
    %c64_i32_114 = arith.constant 64 : i32
    %205 = tpu.dynamic_rotate %204 by %c64_i32_114 dim 1 : vector<8x1024xf32>, i32 -> vector<8x1024xf32>
    %206 = vector.broadcast %2 : vector<1x1024xf32> to vector<8x1024xf32>
    %207 = arith.mulf %206, %205 : vector<8x1024xf32>
    %c960_i32_115 = arith.constant 960 : i32
    %208 = tpu.dynamic_rotate %204 by %c960_i32_115 dim 1 : vector<8x1024xf32>, i32 -> vector<8x1024xf32>
    %209 = vector.broadcast %3 : vector<1x1024xf32> to vector<8x1024xf32>
    %210 = arith.mulf %209, %208 : vector<8x1024xf32>
    %c18 = arith.constant 18 : index
    %c0_116 = arith.constant 0 : index
    %c0_117 = arith.constant 0 : index
    %211 = vector.load %arg6[%c18, %c0_116, %c0_117] : memref<54x8x1xf32, #tpu.memory_space<vmem>>, vector<1x8x1xf32>
    %212 = vector.shape_cast %211 : vector<1x8x1xf32> to vector<8x1xf32>
    %213 = vector.broadcast %212 : vector<8x1xf32> to vector<8x1024xf32>
    %214 = arith.mulf %213, %207 : vector<8x1024xf32>
    %c21 = arith.constant 21 : index
    %c0_118 = arith.constant 0 : index
    %c0_119 = arith.constant 0 : index
    %215 = vector.load %arg6[%c21, %c0_118, %c0_119] : memref<54x8x1xf32, #tpu.memory_space<vmem>>, vector<1x8x1xf32>
    %216 = vector.shape_cast %215 : vector<1x8x1xf32> to vector<8x1xf32>
    %217 = vector.broadcast %216 : vector<8x1xf32> to vector<8x1024xf32>
    %218 = arith.mulf %217, %204 : vector<8x1024xf32>
    %219 = arith.addf %214, %218 : vector<8x1024xf32>
    %c24 = arith.constant 24 : index
    %c0_120 = arith.constant 0 : index
    %c0_121 = arith.constant 0 : index
    %220 = vector.load %arg6[%c24, %c0_120, %c0_121] : memref<54x8x1xf32, #tpu.memory_space<vmem>>, vector<1x8x1xf32>
    %221 = vector.shape_cast %220 : vector<1x8x1xf32> to vector<8x1xf32>
    %222 = vector.broadcast %221 : vector<8x1xf32> to vector<8x1024xf32>
    %223 = arith.mulf %222, %210 : vector<8x1024xf32>
    %224 = arith.addf %219, %223 : vector<8x1024xf32>
    %c8_i32 = arith.constant 8 : i32
    %225 = tpu.dynamic_rotate %224 by %c8_i32 dim 1 : vector<8x1024xf32>, i32 -> vector<8x1024xf32>
    %c5_122 = arith.constant 5 : index
    %c0_123 = arith.constant 0 : index
    %226 = vector.load %arg2[%c5_122, %c0_123] : memref<8x1024xf32, #tpu.memory_space<vmem>>, vector<1x1024xf32>
    %227 = vector.broadcast %226 : vector<1x1024xf32> to vector<8x1024xf32>
    %228 = arith.mulf %225, %227 : vector<8x1024xf32>
    %c19 = arith.constant 19 : index
    %c0_124 = arith.constant 0 : index
    %c0_125 = arith.constant 0 : index
    %229 = vector.load %arg6[%c19, %c0_124, %c0_125] : memref<54x8x1xf32, #tpu.memory_space<vmem>>, vector<1x8x1xf32>
    %230 = vector.shape_cast %229 : vector<1x8x1xf32> to vector<8x1xf32>
    %231 = vector.broadcast %230 : vector<8x1xf32> to vector<8x1024xf32>
    %232 = arith.mulf %231, %207 : vector<8x1024xf32>
    %c22 = arith.constant 22 : index
    %c0_126 = arith.constant 0 : index
    %c0_127 = arith.constant 0 : index
    %233 = vector.load %arg6[%c22, %c0_126, %c0_127] : memref<54x8x1xf32, #tpu.memory_space<vmem>>, vector<1x8x1xf32>
    %234 = vector.shape_cast %233 : vector<1x8x1xf32> to vector<8x1xf32>
    %235 = vector.broadcast %234 : vector<8x1xf32> to vector<8x1024xf32>
    %236 = arith.mulf %235, %204 : vector<8x1024xf32>
    %237 = arith.addf %232, %236 : vector<8x1024xf32>
    %c25 = arith.constant 25 : index
    %c0_128 = arith.constant 0 : index
    %c0_129 = arith.constant 0 : index
    %238 = vector.load %arg6[%c25, %c0_128, %c0_129] : memref<54x8x1xf32, #tpu.memory_space<vmem>>, vector<1x8x1xf32>
    %239 = vector.shape_cast %238 : vector<1x8x1xf32> to vector<8x1xf32>
    %240 = vector.broadcast %239 : vector<8x1xf32> to vector<8x1024xf32>
    %241 = arith.mulf %240, %210 : vector<8x1024xf32>
    %242 = arith.addf %237, %241 : vector<8x1024xf32>
    %c4_i32_130 = arith.constant 4 : i32
    %243 = tpu.dynamic_rotate %242 by %c4_i32_130 dim 1 : vector<8x1024xf32>, i32 -> vector<8x1024xf32>
    %c4_131 = arith.constant 4 : index
    %c0_132 = arith.constant 0 : index
    %244 = vector.load %arg2[%c4_131, %c0_132] : memref<8x1024xf32, #tpu.memory_space<vmem>>, vector<1x1024xf32>
    %245 = vector.broadcast %244 : vector<1x1024xf32> to vector<8x1024xf32>
    %246 = arith.mulf %243, %245 : vector<8x1024xf32>
    %247 = arith.addf %228, %246 : vector<8x1024xf32>
    %c20 = arith.constant 20 : index
    %c0_133 = arith.constant 0 : index
    %c0_134 = arith.constant 0 : index
    %248 = vector.load %arg6[%c20, %c0_133, %c0_134] : memref<54x8x1xf32, #tpu.memory_space<vmem>>, vector<1x8x1xf32>
    %249 = vector.shape_cast %248 : vector<1x8x1xf32> to vector<8x1xf32>
    %250 = vector.broadcast %249 : vector<8x1xf32> to vector<8x1024xf32>
    %251 = arith.mulf %250, %207 : vector<8x1024xf32>
    %c23 = arith.constant 23 : index
    %c0_135 = arith.constant 0 : index
    %c0_136 = arith.constant 0 : index
    %252 = vector.load %arg6[%c23, %c0_135, %c0_136] : memref<54x8x1xf32, #tpu.memory_space<vmem>>, vector<1x8x1xf32>
    %253 = vector.shape_cast %252 : vector<1x8x1xf32> to vector<8x1xf32>
    %254 = vector.broadcast %253 : vector<8x1xf32> to vector<8x1024xf32>
    %255 = arith.mulf %254, %204 : vector<8x1024xf32>
    %256 = arith.addf %251, %255 : vector<8x1024xf32>
    %c26 = arith.constant 26 : index
    %c0_137 = arith.constant 0 : index
    %c0_138 = arith.constant 0 : index
    %257 = vector.load %arg6[%c26, %c0_137, %c0_138] : memref<54x8x1xf32, #tpu.memory_space<vmem>>, vector<1x8x1xf32>
    %258 = vector.shape_cast %257 : vector<1x8x1xf32> to vector<8x1xf32>
    %259 = vector.broadcast %258 : vector<8x1xf32> to vector<8x1024xf32>
    %260 = arith.mulf %259, %210 : vector<8x1024xf32>
    %261 = arith.addf %256, %260 : vector<8x1024xf32>
    %262 = arith.addf %247, %261 : vector<8x1024xf32>
    %c2_139 = arith.constant 2 : index
    %c0_140 = arith.constant 0 : index
    %c0_141 = arith.constant 0 : index
    %263 = vector.load %arg7[%c2_139, %c0_140, %c0_141] : memref<6x8x1xf32, #tpu.memory_space<vmem>>, vector<1x8x1xf32>
    %264 = vector.shape_cast %263 : vector<1x8x1xf32> to vector<8x1xf32>
    %265 = vector.broadcast %264 : vector<8x1xf32> to vector<8x1024xf32>
    %266 = arith.addf %262, %265 : vector<8x1024xf32>
    %cst_142 = arith.constant 0.000000e+00 : f32
    %267 = vector.broadcast %cst_142 : f32 to vector<8x1024xf32>
    %268 = arith.cmpf oge, %266, %267 : vector<8x1024xf32>
    %c2_143 = arith.constant 2 : index
    %c0_144 = arith.constant 0 : index
    %c0_145 = arith.constant 0 : index
    %269 = vector.load %arg8[%c2_143, %c0_144, %c0_145] : memref<6x8x1xf32, #tpu.memory_space<vmem>>, vector<1x8x1xf32>
    %270 = vector.shape_cast %269 : vector<1x8x1xf32> to vector<8x1xf32>
    %271 = vector.broadcast %270 : vector<8x1xf32> to vector<8x1024xf32>
    %272 = arith.mulf %271, %266 : vector<8x1024xf32>
    %273 = arith.select %268, %266, %272 : vector<8x1024xi1>, vector<8x1024xf32>
    %c2_146 = arith.constant 2 : index
    %c0_147 = arith.constant 0 : index
    %c0_148 = arith.constant 0 : index
    %274 = vector.load %arg9[%c2_146, %c0_147, %c0_148] : memref<6x8x8xbf16, #tpu.memory_space<vmem>>, vector<1x8x8xbf16>
    %275 = vector.shape_cast %274 : vector<1x8x8xbf16> to vector<8x8xbf16>
    %276 = arith.truncf %273 : vector<8x1024xf32> to vector<8x1024xbf16>
    %cst_149 = arith.constant dense<0.000000e+00> : vector<8x1024xf32>
    %277 = tpu.matmul %275, %276, %cst_149 {dimension_numbers = #tpu.dot_dimension_numbers<[1], [0], [0], [1], [0, 0, 1, 1], [], []>} : vector<8x8xbf16>, vector<8x1024xbf16>, vector<8x1024xf32> -> vector<8x1024xf32>
    %c2_150 = arith.constant 2 : index
    %c0_151 = arith.constant 0 : index
    %c0_152 = arith.constant 0 : index
    %278 = vector.load %arg10[%c2_150, %c0_151, %c0_152] : memref<6x8x1xf32, #tpu.memory_space<vmem>>, vector<1x8x1xf32>
    %279 = vector.shape_cast %278 : vector<1x8x1xf32> to vector<8x1xf32>
    %280 = vector.broadcast %279 : vector<8x1xf32> to vector<8x1024xf32>
    %281 = arith.addf %277, %280 : vector<8x1024xf32>
    %282 = arith.addf %281, %189 : vector<8x1024xf32>
    %c3_153 = arith.constant 3 : index
    %c0_154 = arith.constant 0 : index
    %c0_155 = arith.constant 0 : index
    %283 = vector.load %arg3[%c3_153, %c0_154, %c0_155] : memref<6x8x8xbf16, #tpu.memory_space<vmem>>, vector<1x8x8xbf16>
    %284 = vector.shape_cast %283 : vector<1x8x8xbf16> to vector<8x8xbf16>
    %285 = arith.truncf %282 : vector<8x1024xf32> to vector<8x1024xbf16>
    %cst_156 = arith.constant dense<0.000000e+00> : vector<8x1024xf32>
    %286 = tpu.matmul %284, %285, %cst_156 {dimension_numbers = #tpu.dot_dimension_numbers<[1], [0], [0], [1], [0, 0, 1, 1], [], []>} : vector<8x8xbf16>, vector<8x1024xbf16>, vector<8x1024xf32> -> vector<8x1024xf32>
    %c3_157 = arith.constant 3 : index
    %c0_158 = arith.constant 0 : index
    %c0_159 = arith.constant 0 : index
    %287 = vector.load %arg4[%c3_157, %c0_158, %c0_159] : memref<6x8x1xf32, #tpu.memory_space<vmem>>, vector<1x8x1xf32>
    %288 = vector.shape_cast %287 : vector<1x8x1xf32> to vector<8x1xf32>
    %289 = vector.broadcast %288 : vector<8x1xf32> to vector<8x1024xf32>
    %290 = arith.addf %286, %289 : vector<8x1024xf32>
    %cst_160 = arith.constant 0.000000e+00 : f32
    %291 = vector.broadcast %cst_160 : f32 to vector<8x1024xf32>
    %292 = arith.cmpf oge, %290, %291 : vector<8x1024xf32>
    %c3_161 = arith.constant 3 : index
    %c0_162 = arith.constant 0 : index
    %c0_163 = arith.constant 0 : index
    %293 = vector.load %arg5[%c3_161, %c0_162, %c0_163] : memref<6x8x1xf32, #tpu.memory_space<vmem>>, vector<1x8x1xf32>
    %294 = vector.shape_cast %293 : vector<1x8x1xf32> to vector<8x1xf32>
    %295 = vector.broadcast %294 : vector<8x1xf32> to vector<8x1024xf32>
    %296 = arith.mulf %295, %290 : vector<8x1024xf32>
    %297 = arith.select %292, %290, %296 : vector<8x1024xi1>, vector<8x1024xf32>
    %c64_i32_164 = arith.constant 64 : i32
    %298 = tpu.dynamic_rotate %297 by %c64_i32_164 dim 1 : vector<8x1024xf32>, i32 -> vector<8x1024xf32>
    %299 = vector.broadcast %2 : vector<1x1024xf32> to vector<8x1024xf32>
    %300 = arith.mulf %299, %298 : vector<8x1024xf32>
    %c960_i32_165 = arith.constant 960 : i32
    %301 = tpu.dynamic_rotate %297 by %c960_i32_165 dim 1 : vector<8x1024xf32>, i32 -> vector<8x1024xf32>
    %302 = vector.broadcast %3 : vector<1x1024xf32> to vector<8x1024xf32>
    %303 = arith.mulf %302, %301 : vector<8x1024xf32>
    %c27 = arith.constant 27 : index
    %c0_166 = arith.constant 0 : index
    %c0_167 = arith.constant 0 : index
    %304 = vector.load %arg6[%c27, %c0_166, %c0_167] : memref<54x8x1xf32, #tpu.memory_space<vmem>>, vector<1x8x1xf32>
    %305 = vector.shape_cast %304 : vector<1x8x1xf32> to vector<8x1xf32>
    %306 = vector.broadcast %305 : vector<8x1xf32> to vector<8x1024xf32>
    %307 = arith.mulf %306, %300 : vector<8x1024xf32>
    %c30 = arith.constant 30 : index
    %c0_168 = arith.constant 0 : index
    %c0_169 = arith.constant 0 : index
    %308 = vector.load %arg6[%c30, %c0_168, %c0_169] : memref<54x8x1xf32, #tpu.memory_space<vmem>>, vector<1x8x1xf32>
    %309 = vector.shape_cast %308 : vector<1x8x1xf32> to vector<8x1xf32>
    %310 = vector.broadcast %309 : vector<8x1xf32> to vector<8x1024xf32>
    %311 = arith.mulf %310, %297 : vector<8x1024xf32>
    %312 = arith.addf %307, %311 : vector<8x1024xf32>
    %c33 = arith.constant 33 : index
    %c0_170 = arith.constant 0 : index
    %c0_171 = arith.constant 0 : index
    %313 = vector.load %arg6[%c33, %c0_170, %c0_171] : memref<54x8x1xf32, #tpu.memory_space<vmem>>, vector<1x8x1xf32>
    %314 = vector.shape_cast %313 : vector<1x8x1xf32> to vector<8x1xf32>
    %315 = vector.broadcast %314 : vector<8x1xf32> to vector<8x1024xf32>
    %316 = arith.mulf %315, %303 : vector<8x1024xf32>
    %317 = arith.addf %312, %316 : vector<8x1024xf32>
    %c16_i32 = arith.constant 16 : i32
    %318 = tpu.dynamic_rotate %317 by %c16_i32 dim 1 : vector<8x1024xf32>, i32 -> vector<8x1024xf32>
    %c6_172 = arith.constant 6 : index
    %c0_173 = arith.constant 0 : index
    %319 = vector.load %arg2[%c6_172, %c0_173] : memref<8x1024xf32, #tpu.memory_space<vmem>>, vector<1x1024xf32>
    %320 = vector.broadcast %319 : vector<1x1024xf32> to vector<8x1024xf32>
    %321 = arith.mulf %318, %320 : vector<8x1024xf32>
    %c28 = arith.constant 28 : index
    %c0_174 = arith.constant 0 : index
    %c0_175 = arith.constant 0 : index
    %322 = vector.load %arg6[%c28, %c0_174, %c0_175] : memref<54x8x1xf32, #tpu.memory_space<vmem>>, vector<1x8x1xf32>
    %323 = vector.shape_cast %322 : vector<1x8x1xf32> to vector<8x1xf32>
    %324 = vector.broadcast %323 : vector<8x1xf32> to vector<8x1024xf32>
    %325 = arith.mulf %324, %300 : vector<8x1024xf32>
    %c31 = arith.constant 31 : index
    %c0_176 = arith.constant 0 : index
    %c0_177 = arith.constant 0 : index
    %326 = vector.load %arg6[%c31, %c0_176, %c0_177] : memref<54x8x1xf32, #tpu.memory_space<vmem>>, vector<1x8x1xf32>
    %327 = vector.shape_cast %326 : vector<1x8x1xf32> to vector<8x1xf32>
    %328 = vector.broadcast %327 : vector<8x1xf32> to vector<8x1024xf32>
    %329 = arith.mulf %328, %297 : vector<8x1024xf32>
    %330 = arith.addf %325, %329 : vector<8x1024xf32>
    %c34 = arith.constant 34 : index
    %c0_178 = arith.constant 0 : index
    %c0_179 = arith.constant 0 : index
    %331 = vector.load %arg6[%c34, %c0_178, %c0_179] : memref<54x8x1xf32, #tpu.memory_space<vmem>>, vector<1x8x1xf32>
    %332 = vector.shape_cast %331 : vector<1x8x1xf32> to vector<8x1xf32>
    %333 = vector.broadcast %332 : vector<8x1xf32> to vector<8x1024xf32>
    %334 = arith.mulf %333, %303 : vector<8x1024xf32>
    %335 = arith.addf %330, %334 : vector<8x1024xf32>
    %c8_i32_180 = arith.constant 8 : i32
    %336 = tpu.dynamic_rotate %335 by %c8_i32_180 dim 1 : vector<8x1024xf32>, i32 -> vector<8x1024xf32>
    %c5_181 = arith.constant 5 : index
    %c0_182 = arith.constant 0 : index
    %337 = vector.load %arg2[%c5_181, %c0_182] : memref<8x1024xf32, #tpu.memory_space<vmem>>, vector<1x1024xf32>
    %338 = vector.broadcast %337 : vector<1x1024xf32> to vector<8x1024xf32>
    %339 = arith.mulf %336, %338 : vector<8x1024xf32>
    %340 = arith.addf %321, %339 : vector<8x1024xf32>
    %c29 = arith.constant 29 : index
    %c0_183 = arith.constant 0 : index
    %c0_184 = arith.constant 0 : index
    %341 = vector.load %arg6[%c29, %c0_183, %c0_184] : memref<54x8x1xf32, #tpu.memory_space<vmem>>, vector<1x8x1xf32>
    %342 = vector.shape_cast %341 : vector<1x8x1xf32> to vector<8x1xf32>
    %343 = vector.broadcast %342 : vector<8x1xf32> to vector<8x1024xf32>
    %344 = arith.mulf %343, %300 : vector<8x1024xf32>
    %c32 = arith.constant 32 : index
    %c0_185 = arith.constant 0 : index
    %c0_186 = arith.constant 0 : index
    %345 = vector.load %arg6[%c32, %c0_185, %c0_186] : memref<54x8x1xf32, #tpu.memory_space<vmem>>, vector<1x8x1xf32>
    %346 = vector.shape_cast %345 : vector<1x8x1xf32> to vector<8x1xf32>
    %347 = vector.broadcast %346 : vector<8x1xf32> to vector<8x1024xf32>
    %348 = arith.mulf %347, %297 : vector<8x1024xf32>
    %349 = arith.addf %344, %348 : vector<8x1024xf32>
    %c35 = arith.constant 35 : index
    %c0_187 = arith.constant 0 : index
    %c0_188 = arith.constant 0 : index
    %350 = vector.load %arg6[%c35, %c0_187, %c0_188] : memref<54x8x1xf32, #tpu.memory_space<vmem>>, vector<1x8x1xf32>
    %351 = vector.shape_cast %350 : vector<1x8x1xf32> to vector<8x1xf32>
    %352 = vector.broadcast %351 : vector<8x1xf32> to vector<8x1024xf32>
    %353 = arith.mulf %352, %303 : vector<8x1024xf32>
    %354 = arith.addf %349, %353 : vector<8x1024xf32>
    %355 = arith.addf %340, %354 : vector<8x1024xf32>
    %c3_189 = arith.constant 3 : index
    %c0_190 = arith.constant 0 : index
    %c0_191 = arith.constant 0 : index
    %356 = vector.load %arg7[%c3_189, %c0_190, %c0_191] : memref<6x8x1xf32, #tpu.memory_space<vmem>>, vector<1x8x1xf32>
    %357 = vector.shape_cast %356 : vector<1x8x1xf32> to vector<8x1xf32>
    %358 = vector.broadcast %357 : vector<8x1xf32> to vector<8x1024xf32>
    %359 = arith.addf %355, %358 : vector<8x1024xf32>
    %cst_192 = arith.constant 0.000000e+00 : f32
    %360 = vector.broadcast %cst_192 : f32 to vector<8x1024xf32>
    %361 = arith.cmpf oge, %359, %360 : vector<8x1024xf32>
    %c3_193 = arith.constant 3 : index
    %c0_194 = arith.constant 0 : index
    %c0_195 = arith.constant 0 : index
    %362 = vector.load %arg8[%c3_193, %c0_194, %c0_195] : memref<6x8x1xf32, #tpu.memory_space<vmem>>, vector<1x8x1xf32>
    %363 = vector.shape_cast %362 : vector<1x8x1xf32> to vector<8x1xf32>
    %364 = vector.broadcast %363 : vector<8x1xf32> to vector<8x1024xf32>
    %365 = arith.mulf %364, %359 : vector<8x1024xf32>
    %366 = arith.select %361, %359, %365 : vector<8x1024xi1>, vector<8x1024xf32>
    %c3_196 = arith.constant 3 : index
    %c0_197 = arith.constant 0 : index
    %c0_198 = arith.constant 0 : index
    %367 = vector.load %arg9[%c3_196, %c0_197, %c0_198] : memref<6x8x8xbf16, #tpu.memory_space<vmem>>, vector<1x8x8xbf16>
    %368 = vector.shape_cast %367 : vector<1x8x8xbf16> to vector<8x8xbf16>
    %369 = arith.truncf %366 : vector<8x1024xf32> to vector<8x1024xbf16>
    %cst_199 = arith.constant dense<0.000000e+00> : vector<8x1024xf32>
    %370 = tpu.matmul %368, %369, %cst_199 {dimension_numbers = #tpu.dot_dimension_numbers<[1], [0], [0], [1], [0, 0, 1, 1], [], []>} : vector<8x8xbf16>, vector<8x1024xbf16>, vector<8x1024xf32> -> vector<8x1024xf32>
    %c3_200 = arith.constant 3 : index
    %c0_201 = arith.constant 0 : index
    %c0_202 = arith.constant 0 : index
    %371 = vector.load %arg10[%c3_200, %c0_201, %c0_202] : memref<6x8x1xf32, #tpu.memory_space<vmem>>, vector<1x8x1xf32>
    %372 = vector.shape_cast %371 : vector<1x8x1xf32> to vector<8x1xf32>
    %373 = vector.broadcast %372 : vector<8x1xf32> to vector<8x1024xf32>
    %374 = arith.addf %370, %373 : vector<8x1024xf32>
    %375 = arith.addf %374, %282 : vector<8x1024xf32>
    %c4_203 = arith.constant 4 : index
    %c0_204 = arith.constant 0 : index
    %c0_205 = arith.constant 0 : index
    %376 = vector.load %arg3[%c4_203, %c0_204, %c0_205] : memref<6x8x8xbf16, #tpu.memory_space<vmem>>, vector<1x8x8xbf16>
    %377 = vector.shape_cast %376 : vector<1x8x8xbf16> to vector<8x8xbf16>
    %378 = arith.truncf %375 : vector<8x1024xf32> to vector<8x1024xbf16>
    %cst_206 = arith.constant dense<0.000000e+00> : vector<8x1024xf32>
    %379 = tpu.matmul %377, %378, %cst_206 {dimension_numbers = #tpu.dot_dimension_numbers<[1], [0], [0], [1], [0, 0, 1, 1], [], []>} : vector<8x8xbf16>, vector<8x1024xbf16>, vector<8x1024xf32> -> vector<8x1024xf32>
    %c4_207 = arith.constant 4 : index
    %c0_208 = arith.constant 0 : index
    %c0_209 = arith.constant 0 : index
    %380 = vector.load %arg4[%c4_207, %c0_208, %c0_209] : memref<6x8x1xf32, #tpu.memory_space<vmem>>, vector<1x8x1xf32>
    %381 = vector.shape_cast %380 : vector<1x8x1xf32> to vector<8x1xf32>
    %382 = vector.broadcast %381 : vector<8x1xf32> to vector<8x1024xf32>
    %383 = arith.addf %379, %382 : vector<8x1024xf32>
    %cst_210 = arith.constant 0.000000e+00 : f32
    %384 = vector.broadcast %cst_210 : f32 to vector<8x1024xf32>
    %385 = arith.cmpf oge, %383, %384 : vector<8x1024xf32>
    %c4_211 = arith.constant 4 : index
    %c0_212 = arith.constant 0 : index
    %c0_213 = arith.constant 0 : index
    %386 = vector.load %arg5[%c4_211, %c0_212, %c0_213] : memref<6x8x1xf32, #tpu.memory_space<vmem>>, vector<1x8x1xf32>
    %387 = vector.shape_cast %386 : vector<1x8x1xf32> to vector<8x1xf32>
    %388 = vector.broadcast %387 : vector<8x1xf32> to vector<8x1024xf32>
    %389 = arith.mulf %388, %383 : vector<8x1024xf32>
    %390 = arith.select %385, %383, %389 : vector<8x1024xi1>, vector<8x1024xf32>
    %c64_i32_214 = arith.constant 64 : i32
    %391 = tpu.dynamic_rotate %390 by %c64_i32_214 dim 1 : vector<8x1024xf32>, i32 -> vector<8x1024xf32>
    %392 = vector.broadcast %2 : vector<1x1024xf32> to vector<8x1024xf32>
    %393 = arith.mulf %392, %391 : vector<8x1024xf32>
    %c960_i32_215 = arith.constant 960 : i32
    %394 = tpu.dynamic_rotate %390 by %c960_i32_215 dim 1 : vector<8x1024xf32>, i32 -> vector<8x1024xf32>
    %395 = vector.broadcast %3 : vector<1x1024xf32> to vector<8x1024xf32>
    %396 = arith.mulf %395, %394 : vector<8x1024xf32>
    %c36 = arith.constant 36 : index
    %c0_216 = arith.constant 0 : index
    %c0_217 = arith.constant 0 : index
    %397 = vector.load %arg6[%c36, %c0_216, %c0_217] : memref<54x8x1xf32, #tpu.memory_space<vmem>>, vector<1x8x1xf32>
    %398 = vector.shape_cast %397 : vector<1x8x1xf32> to vector<8x1xf32>
    %399 = vector.broadcast %398 : vector<8x1xf32> to vector<8x1024xf32>
    %400 = arith.mulf %399, %393 : vector<8x1024xf32>
    %c39 = arith.constant 39 : index
    %c0_218 = arith.constant 0 : index
    %c0_219 = arith.constant 0 : index
    %401 = vector.load %arg6[%c39, %c0_218, %c0_219] : memref<54x8x1xf32, #tpu.memory_space<vmem>>, vector<1x8x1xf32>
    %402 = vector.shape_cast %401 : vector<1x8x1xf32> to vector<8x1xf32>
    %403 = vector.broadcast %402 : vector<8x1xf32> to vector<8x1024xf32>
    %404 = arith.mulf %403, %390 : vector<8x1024xf32>
    %405 = arith.addf %400, %404 : vector<8x1024xf32>
    %c42 = arith.constant 42 : index
    %c0_220 = arith.constant 0 : index
    %c0_221 = arith.constant 0 : index
    %406 = vector.load %arg6[%c42, %c0_220, %c0_221] : memref<54x8x1xf32, #tpu.memory_space<vmem>>, vector<1x8x1xf32>
    %407 = vector.shape_cast %406 : vector<1x8x1xf32> to vector<8x1xf32>
    %408 = vector.broadcast %407 : vector<8x1xf32> to vector<8x1024xf32>
    %409 = arith.mulf %408, %396 : vector<8x1024xf32>
    %410 = arith.addf %405, %409 : vector<8x1024xf32>
    %c32_i32 = arith.constant 32 : i32
    %411 = tpu.dynamic_rotate %410 by %c32_i32 dim 1 : vector<8x1024xf32>, i32 -> vector<8x1024xf32>
    %c7_222 = arith.constant 7 : index
    %c0_223 = arith.constant 0 : index
    %412 = vector.load %arg2[%c7_222, %c0_223] : memref<8x1024xf32, #tpu.memory_space<vmem>>, vector<1x1024xf32>
    %413 = vector.broadcast %412 : vector<1x1024xf32> to vector<8x1024xf32>
    %414 = arith.mulf %411, %413 : vector<8x1024xf32>
    %c37 = arith.constant 37 : index
    %c0_224 = arith.constant 0 : index
    %c0_225 = arith.constant 0 : index
    %415 = vector.load %arg6[%c37, %c0_224, %c0_225] : memref<54x8x1xf32, #tpu.memory_space<vmem>>, vector<1x8x1xf32>
    %416 = vector.shape_cast %415 : vector<1x8x1xf32> to vector<8x1xf32>
    %417 = vector.broadcast %416 : vector<8x1xf32> to vector<8x1024xf32>
    %418 = arith.mulf %417, %393 : vector<8x1024xf32>
    %c40 = arith.constant 40 : index
    %c0_226 = arith.constant 0 : index
    %c0_227 = arith.constant 0 : index
    %419 = vector.load %arg6[%c40, %c0_226, %c0_227] : memref<54x8x1xf32, #tpu.memory_space<vmem>>, vector<1x8x1xf32>
    %420 = vector.shape_cast %419 : vector<1x8x1xf32> to vector<8x1xf32>
    %421 = vector.broadcast %420 : vector<8x1xf32> to vector<8x1024xf32>
    %422 = arith.mulf %421, %390 : vector<8x1024xf32>
    %423 = arith.addf %418, %422 : vector<8x1024xf32>
    %c43 = arith.constant 43 : index
    %c0_228 = arith.constant 0 : index
    %c0_229 = arith.constant 0 : index
    %424 = vector.load %arg6[%c43, %c0_228, %c0_229] : memref<54x8x1xf32, #tpu.memory_space<vmem>>, vector<1x8x1xf32>
    %425 = vector.shape_cast %424 : vector<1x8x1xf32> to vector<8x1xf32>
    %426 = vector.broadcast %425 : vector<8x1xf32> to vector<8x1024xf32>
    %427 = arith.mulf %426, %396 : vector<8x1024xf32>
    %428 = arith.addf %423, %427 : vector<8x1024xf32>
    %c16_i32_230 = arith.constant 16 : i32
    %429 = tpu.dynamic_rotate %428 by %c16_i32_230 dim 1 : vector<8x1024xf32>, i32 -> vector<8x1024xf32>
    %c6_231 = arith.constant 6 : index
    %c0_232 = arith.constant 0 : index
    %430 = vector.load %arg2[%c6_231, %c0_232] : memref<8x1024xf32, #tpu.memory_space<vmem>>, vector<1x1024xf32>
    %431 = vector.broadcast %430 : vector<1x1024xf32> to vector<8x1024xf32>
    %432 = arith.mulf %429, %431 : vector<8x1024xf32>
    %433 = arith.addf %414, %432 : vector<8x1024xf32>
    %c38 = arith.constant 38 : index
    %c0_233 = arith.constant 0 : index
    %c0_234 = arith.constant 0 : index
    %434 = vector.load %arg6[%c38, %c0_233, %c0_234] : memref<54x8x1xf32, #tpu.memory_space<vmem>>, vector<1x8x1xf32>
    %435 = vector.shape_cast %434 : vector<1x8x1xf32> to vector<8x1xf32>
    %436 = vector.broadcast %435 : vector<8x1xf32> to vector<8x1024xf32>
    %437 = arith.mulf %436, %393 : vector<8x1024xf32>
    %c41 = arith.constant 41 : index
    %c0_235 = arith.constant 0 : index
    %c0_236 = arith.constant 0 : index
    %438 = vector.load %arg6[%c41, %c0_235, %c0_236] : memref<54x8x1xf32, #tpu.memory_space<vmem>>, vector<1x8x1xf32>
    %439 = vector.shape_cast %438 : vector<1x8x1xf32> to vector<8x1xf32>
    %440 = vector.broadcast %439 : vector<8x1xf32> to vector<8x1024xf32>
    %441 = arith.mulf %440, %390 : vector<8x1024xf32>
    %442 = arith.addf %437, %441 : vector<8x1024xf32>
    %c44 = arith.constant 44 : index
    %c0_237 = arith.constant 0 : index
    %c0_238 = arith.constant 0 : index
    %443 = vector.load %arg6[%c44, %c0_237, %c0_238] : memref<54x8x1xf32, #tpu.memory_space<vmem>>, vector<1x8x1xf32>
    %444 = vector.shape_cast %443 : vector<1x8x1xf32> to vector<8x1xf32>
    %445 = vector.broadcast %444 : vector<8x1xf32> to vector<8x1024xf32>
    %446 = arith.mulf %445, %396 : vector<8x1024xf32>
    %447 = arith.addf %442, %446 : vector<8x1024xf32>
    %448 = arith.addf %433, %447 : vector<8x1024xf32>
    %c4_239 = arith.constant 4 : index
    %c0_240 = arith.constant 0 : index
    %c0_241 = arith.constant 0 : index
    %449 = vector.load %arg7[%c4_239, %c0_240, %c0_241] : memref<6x8x1xf32, #tpu.memory_space<vmem>>, vector<1x8x1xf32>
    %450 = vector.shape_cast %449 : vector<1x8x1xf32> to vector<8x1xf32>
    %451 = vector.broadcast %450 : vector<8x1xf32> to vector<8x1024xf32>
    %452 = arith.addf %448, %451 : vector<8x1024xf32>
    %cst_242 = arith.constant 0.000000e+00 : f32
    %453 = vector.broadcast %cst_242 : f32 to vector<8x1024xf32>
    %454 = arith.cmpf oge, %452, %453 : vector<8x1024xf32>
    %c4_243 = arith.constant 4 : index
    %c0_244 = arith.constant 0 : index
    %c0_245 = arith.constant 0 : index
    %455 = vector.load %arg8[%c4_243, %c0_244, %c0_245] : memref<6x8x1xf32, #tpu.memory_space<vmem>>, vector<1x8x1xf32>
    %456 = vector.shape_cast %455 : vector<1x8x1xf32> to vector<8x1xf32>
    %457 = vector.broadcast %456 : vector<8x1xf32> to vector<8x1024xf32>
    %458 = arith.mulf %457, %452 : vector<8x1024xf32>
    %459 = arith.select %454, %452, %458 : vector<8x1024xi1>, vector<8x1024xf32>
    %c4_246 = arith.constant 4 : index
    %c0_247 = arith.constant 0 : index
    %c0_248 = arith.constant 0 : index
    %460 = vector.load %arg9[%c4_246, %c0_247, %c0_248] : memref<6x8x8xbf16, #tpu.memory_space<vmem>>, vector<1x8x8xbf16>
    %461 = vector.shape_cast %460 : vector<1x8x8xbf16> to vector<8x8xbf16>
    %462 = arith.truncf %459 : vector<8x1024xf32> to vector<8x1024xbf16>
    %cst_249 = arith.constant dense<0.000000e+00> : vector<8x1024xf32>
    %463 = tpu.matmul %461, %462, %cst_249 {dimension_numbers = #tpu.dot_dimension_numbers<[1], [0], [0], [1], [0, 0, 1, 1], [], []>} : vector<8x8xbf16>, vector<8x1024xbf16>, vector<8x1024xf32> -> vector<8x1024xf32>
    %c4_250 = arith.constant 4 : index
    %c0_251 = arith.constant 0 : index
    %c0_252 = arith.constant 0 : index
    %464 = vector.load %arg10[%c4_250, %c0_251, %c0_252] : memref<6x8x1xf32, #tpu.memory_space<vmem>>, vector<1x8x1xf32>
    %465 = vector.shape_cast %464 : vector<1x8x1xf32> to vector<8x1xf32>
    %466 = vector.broadcast %465 : vector<8x1xf32> to vector<8x1024xf32>
    %467 = arith.addf %463, %466 : vector<8x1024xf32>
    %468 = arith.addf %467, %375 : vector<8x1024xf32>
    %c5_253 = arith.constant 5 : index
    %c0_254 = arith.constant 0 : index
    %c0_255 = arith.constant 0 : index
    %469 = vector.load %arg3[%c5_253, %c0_254, %c0_255] : memref<6x8x8xbf16, #tpu.memory_space<vmem>>, vector<1x8x8xbf16>
    %470 = vector.shape_cast %469 : vector<1x8x8xbf16> to vector<8x8xbf16>
    %471 = arith.truncf %468 : vector<8x1024xf32> to vector<8x1024xbf16>
    %cst_256 = arith.constant dense<0.000000e+00> : vector<8x1024xf32>
    %472 = tpu.matmul %470, %471, %cst_256 {dimension_numbers = #tpu.dot_dimension_numbers<[1], [0], [0], [1], [0, 0, 1, 1], [], []>} : vector<8x8xbf16>, vector<8x1024xbf16>, vector<8x1024xf32> -> vector<8x1024xf32>
    %c5_257 = arith.constant 5 : index
    %c0_258 = arith.constant 0 : index
    %c0_259 = arith.constant 0 : index
    %473 = vector.load %arg4[%c5_257, %c0_258, %c0_259] : memref<6x8x1xf32, #tpu.memory_space<vmem>>, vector<1x8x1xf32>
    %474 = vector.shape_cast %473 : vector<1x8x1xf32> to vector<8x1xf32>
    %475 = vector.broadcast %474 : vector<8x1xf32> to vector<8x1024xf32>
    %476 = arith.addf %472, %475 : vector<8x1024xf32>
    %cst_260 = arith.constant 0.000000e+00 : f32
    %477 = vector.broadcast %cst_260 : f32 to vector<8x1024xf32>
    %478 = arith.cmpf oge, %476, %477 : vector<8x1024xf32>
    %c5_261 = arith.constant 5 : index
    %c0_262 = arith.constant 0 : index
    %c0_263 = arith.constant 0 : index
    %479 = vector.load %arg5[%c5_261, %c0_262, %c0_263] : memref<6x8x1xf32, #tpu.memory_space<vmem>>, vector<1x8x1xf32>
    %480 = vector.shape_cast %479 : vector<1x8x1xf32> to vector<8x1xf32>
    %481 = vector.broadcast %480 : vector<8x1xf32> to vector<8x1024xf32>
    %482 = arith.mulf %481, %476 : vector<8x1024xf32>
    %483 = arith.select %478, %476, %482 : vector<8x1024xi1>, vector<8x1024xf32>
    %c64_i32_264 = arith.constant 64 : i32
    %484 = tpu.dynamic_rotate %483 by %c64_i32_264 dim 1 : vector<8x1024xf32>, i32 -> vector<8x1024xf32>
    %485 = vector.broadcast %2 : vector<1x1024xf32> to vector<8x1024xf32>
    %486 = arith.mulf %485, %484 : vector<8x1024xf32>
    %c960_i32_265 = arith.constant 960 : i32
    %487 = tpu.dynamic_rotate %483 by %c960_i32_265 dim 1 : vector<8x1024xf32>, i32 -> vector<8x1024xf32>
    %488 = vector.broadcast %3 : vector<1x1024xf32> to vector<8x1024xf32>
    %489 = arith.mulf %488, %487 : vector<8x1024xf32>
    %c46 = arith.constant 46 : index
    %c0_266 = arith.constant 0 : index
    %c0_267 = arith.constant 0 : index
    %490 = vector.load %arg6[%c46, %c0_266, %c0_267] : memref<54x8x1xf32, #tpu.memory_space<vmem>>, vector<1x8x1xf32>
    %491 = vector.shape_cast %490 : vector<1x8x1xf32> to vector<8x1xf32>
    %492 = vector.broadcast %491 : vector<8x1xf32> to vector<8x1024xf32>
    %493 = arith.mulf %492, %486 : vector<8x1024xf32>
    %c49 = arith.constant 49 : index
    %c0_268 = arith.constant 0 : index
    %c0_269 = arith.constant 0 : index
    %494 = vector.load %arg6[%c49, %c0_268, %c0_269] : memref<54x8x1xf32, #tpu.memory_space<vmem>>, vector<1x8x1xf32>
    %495 = vector.shape_cast %494 : vector<1x8x1xf32> to vector<8x1xf32>
    %496 = vector.broadcast %495 : vector<8x1xf32> to vector<8x1024xf32>
    %497 = arith.mulf %496, %483 : vector<8x1024xf32>
    %498 = arith.addf %493, %497 : vector<8x1024xf32>
    %c52 = arith.constant 52 : index
    %c0_270 = arith.constant 0 : index
    %c0_271 = arith.constant 0 : index
    %499 = vector.load %arg6[%c52, %c0_270, %c0_271] : memref<54x8x1xf32, #tpu.memory_space<vmem>>, vector<1x8x1xf32>
    %500 = vector.shape_cast %499 : vector<1x8x1xf32> to vector<8x1xf32>
    %501 = vector.broadcast %500 : vector<8x1xf32> to vector<8x1024xf32>
    %502 = arith.mulf %501, %489 : vector<8x1024xf32>
    %503 = arith.addf %498, %502 : vector<8x1024xf32>
    %c32_i32_272 = arith.constant 32 : i32
    %504 = tpu.dynamic_rotate %503 by %c32_i32_272 dim 1 : vector<8x1024xf32>, i32 -> vector<8x1024xf32>
    %c7_273 = arith.constant 7 : index
    %c0_274 = arith.constant 0 : index
    %505 = vector.load %arg2[%c7_273, %c0_274] : memref<8x1024xf32, #tpu.memory_space<vmem>>, vector<1x1024xf32>
    %506 = vector.broadcast %505 : vector<1x1024xf32> to vector<8x1024xf32>
    %507 = arith.mulf %504, %506 : vector<8x1024xf32>
    %c47 = arith.constant 47 : index
    %c0_275 = arith.constant 0 : index
    %c0_276 = arith.constant 0 : index
    %508 = vector.load %arg6[%c47, %c0_275, %c0_276] : memref<54x8x1xf32, #tpu.memory_space<vmem>>, vector<1x8x1xf32>
    %509 = vector.shape_cast %508 : vector<1x8x1xf32> to vector<8x1xf32>
    %510 = vector.broadcast %509 : vector<8x1xf32> to vector<8x1024xf32>
    %511 = arith.mulf %510, %486 : vector<8x1024xf32>
    %c50 = arith.constant 50 : index
    %c0_277 = arith.constant 0 : index
    %c0_278 = arith.constant 0 : index
    %512 = vector.load %arg6[%c50, %c0_277, %c0_278] : memref<54x8x1xf32, #tpu.memory_space<vmem>>, vector<1x8x1xf32>
    %513 = vector.shape_cast %512 : vector<1x8x1xf32> to vector<8x1xf32>
    %514 = vector.broadcast %513 : vector<8x1xf32> to vector<8x1024xf32>
    %515 = arith.mulf %514, %483 : vector<8x1024xf32>
    %516 = arith.addf %511, %515 : vector<8x1024xf32>
    %c53 = arith.constant 53 : index
    %c0_279 = arith.constant 0 : index
    %c0_280 = arith.constant 0 : index
    %517 = vector.load %arg6[%c53, %c0_279, %c0_280] : memref<54x8x1xf32, #tpu.memory_space<vmem>>, vector<1x8x1xf32>
    %518 = vector.shape_cast %517 : vector<1x8x1xf32> to vector<8x1xf32>
    %519 = vector.broadcast %518 : vector<8x1xf32> to vector<8x1024xf32>
    %520 = arith.mulf %519, %489 : vector<8x1024xf32>
    %521 = arith.addf %516, %520 : vector<8x1024xf32>
    %522 = arith.addf %507, %521 : vector<8x1024xf32>
    %c5_281 = arith.constant 5 : index
    %c0_282 = arith.constant 0 : index
    %c0_283 = arith.constant 0 : index
    %523 = vector.load %arg7[%c5_281, %c0_282, %c0_283] : memref<6x8x1xf32, #tpu.memory_space<vmem>>, vector<1x8x1xf32>
    %524 = vector.shape_cast %523 : vector<1x8x1xf32> to vector<8x1xf32>
    %525 = vector.broadcast %524 : vector<8x1xf32> to vector<8x1024xf32>
    %526 = arith.addf %522, %525 : vector<8x1024xf32>
    %cst_284 = arith.constant 0.000000e+00 : f32
    %527 = vector.broadcast %cst_284 : f32 to vector<8x1024xf32>
    %528 = arith.cmpf oge, %526, %527 : vector<8x1024xf32>
    %c5_285 = arith.constant 5 : index
    %c0_286 = arith.constant 0 : index
    %c0_287 = arith.constant 0 : index
    %529 = vector.load %arg8[%c5_285, %c0_286, %c0_287] : memref<6x8x1xf32, #tpu.memory_space<vmem>>, vector<1x8x1xf32>
    %530 = vector.shape_cast %529 : vector<1x8x1xf32> to vector<8x1xf32>
    %531 = vector.broadcast %530 : vector<8x1xf32> to vector<8x1024xf32>
    %532 = arith.mulf %531, %526 : vector<8x1024xf32>
    %533 = arith.select %528, %526, %532 : vector<8x1024xi1>, vector<8x1024xf32>
    %c5_288 = arith.constant 5 : index
    %c0_289 = arith.constant 0 : index
    %c0_290 = arith.constant 0 : index
    %534 = vector.load %arg9[%c5_288, %c0_289, %c0_290] : memref<6x8x8xbf16, #tpu.memory_space<vmem>>, vector<1x8x8xbf16>
    %535 = vector.shape_cast %534 : vector<1x8x8xbf16> to vector<8x8xbf16>
    %536 = arith.truncf %533 : vector<8x1024xf32> to vector<8x1024xbf16>
    %cst_291 = arith.constant dense<0.000000e+00> : vector<8x1024xf32>
    %537 = tpu.matmul %535, %536, %cst_291 {dimension_numbers = #tpu.dot_dimension_numbers<[1], [0], [0], [1], [0, 0, 1, 1], [], []>} : vector<8x8xbf16>, vector<8x1024xbf16>, vector<8x1024xf32> -> vector<8x1024xf32>
    %c5_292 = arith.constant 5 : index
    %c0_293 = arith.constant 0 : index
    %c0_294 = arith.constant 0 : index
    %538 = vector.load %arg10[%c5_292, %c0_293, %c0_294] : memref<6x8x1xf32, #tpu.memory_space<vmem>>, vector<1x8x1xf32>
    %539 = vector.shape_cast %538 : vector<1x8x1xf32> to vector<8x1xf32>
    %540 = vector.broadcast %539 : vector<8x1xf32> to vector<8x1024xf32>
    %541 = arith.addf %537, %540 : vector<8x1024xf32>
    %542 = arith.addf %541, %468 : vector<8x1024xf32>
    %c0_295 = arith.constant 0 : index
    %c0_296 = arith.constant 0 : index
    %c0_297 = arith.constant 0 : index
    %543 = vector.load %arg11[%c0_295, %c0_296, %c0_297] : memref<1x8x1024xf32, #tpu.memory_space<vmem>>, vector<1x8x1024xf32>
    %544 = vector.shape_cast %543 : vector<1x8x1024xf32> to vector<8x1024xf32>
    %545 = vector.shape_cast %542 : vector<8x1024xf32> to vector<1x8x1024xf32>
    tpu.vector_store %arg11[%c0_295, %c0_296, %c0_297], %545 {strides = array<i32>} : memref<1x8x1024xf32, #tpu.memory_space<vmem>>, vector<1x8x1024xf32>,
    return
  }
  func.func @transform_0(%arg0: i32) -> (i32, i32, i32) {
    %c0_i32 = arith.constant 0 : i32
    %c0_i32_0 = arith.constant 0 : i32
    %c0_i32_1 = arith.constant 0 : i32
    return %arg0, %c0_i32, %c0_i32_0 : i32, i32, i32
  }
  func.func @transform_1(%arg0: i32) -> (i32, i32) {
    %c0_i32 = arith.constant 0 : i32
    %c0_i32_0 = arith.constant 0 : i32
    %c0_i32_1 = arith.constant 0 : i32
    return %c0_i32, %c0_i32_0 : i32, i32
  }
  func.func @transform_2(%arg0: i32) -> (i32, i32, i32) {
    %c0_i32 = arith.constant 0 : i32
    %c0_i32_0 = arith.constant 0 : i32
    %c0_i32_1 = arith.constant 0 : i32
    %c0_i32_2 = arith.constant 0 : i32
    return %c0_i32, %c0_i32_0, %c0_i32_1 : i32, i32, i32
  }
  func.func @transform_3(%arg0: i32) -> (i32, i32, i32) {
    %c0_i32 = arith.constant 0 : i32
    %c0_i32_0 = arith.constant 0 : i32
    %c0_i32_1 = arith.constant 0 : i32
    %c0_i32_2 = arith.constant 0 : i32
    return %c0_i32, %c0_i32_0, %c0_i32_1 : i32, i32, i32
  }
  func.func @transform_4(%arg0: i32) -> (i32, i32, i32) {
    %c0_i32 = arith.constant 0 : i32
    %c0_i32_0 = arith.constant 0 : i32
    %c0_i32_1 = arith.constant 0 : i32
    %c0_i32_2 = arith.constant 0 : i32
    return %c0_i32, %c0_i32_0, %c0_i32_1 : i32, i32, i32
  }
  func.func @transform_5(%arg0: i32) -> (i32, i32, i32) {
    %c0_i32 = arith.constant 0 : i32
    %c0_i32_0 = arith.constant 0 : i32
    %c0_i32_1 = arith.constant 0 : i32
    %c0_i32_2 = arith.constant 0 : i32
    return %c0_i32, %c0_i32_0, %c0_i32_1 : i32, i32, i32
  }
  func.func @transform_6(%arg0: i32) -> (i32, i32, i32) {
    %c0_i32 = arith.constant 0 : i32
    %c0_i32_0 = arith.constant 0 : i32
    %c0_i32_1 = arith.constant 0 : i32
    %c0_i32_2 = arith.constant 0 : i32
    return %c0_i32, %c0_i32_0, %c0_i32_1 : i32, i32, i32
  }
  func.func @transform_7(%arg0: i32) -> (i32, i32, i32) {
    %c0_i32 = arith.constant 0 : i32
    %c0_i32_0 = arith.constant 0 : i32
    %c0_i32_1 = arith.constant 0 : i32
    %c0_i32_2 = arith.constant 0 : i32
    return %c0_i32, %c0_i32_0, %c0_i32_1 : i32, i32, i32
  }
  func.func @transform_8(%arg0: i32) -> (i32, i32, i32) {
    %c0_i32 = arith.constant 0 : i32
    %c0_i32_0 = arith.constant 0 : i32
    %c0_i32_1 = arith.constant 0 : i32
    %c0_i32_2 = arith.constant 0 : i32
    return %c0_i32, %c0_i32_0, %c0_i32_1 : i32, i32, i32
  }
  func.func @transform_9(%arg0: i32) -> (i32, i32, i32) {
    %c0_i32 = arith.constant 0 : i32
    %c0_i32_0 = arith.constant 0 : i32
    %c0_i32_1 = arith.constant 0 : i32
    %c0_i32_2 = arith.constant 0 : i32
    return %c0_i32, %c0_i32_0, %c0_i32_1 : i32, i32, i32
  }
  func.func @transform_10(%arg0: i32) -> (i32, i32, i32) {
    %c0_i32 = arith.constant 0 : i32
    %c0_i32_0 = arith.constant 0 : i32
    %c0_i32_1 = arith.constant 0 : i32
    return %arg0, %c0_i32, %c0_i32_0 : i32, i32, i32
  }
}

</mosaic_0001>

<llo_original>
// kernel: tpu_custom_call.1
$region0: #{tpu_custom_call.1}
  #allocation0 [shape = 'u32[]', space=smem, size = 0x4, offset = 0x4, fixed_abs, tag = 'smem constant byte address 0x4 - core index']
  #allocation1 [shape = 'u32[144,128]{1,0:T(1,128)}', space=vmem, size = 0x12000, scoped, tag = 'internal scratch']
  %s0 = inlined_call_operand.hbm [shape: f32[2,8,1024], index: 0, kind: input, shape index: {}, may-alias: {0,10}]
  %s1 = inlined_call_operand.vmem [shape: f32[8,1024], index: 1, kind: input, shape index: {}]
  %s2 = inlined_call_operand.vmem [shape: bf16[6,8,8], index: 2, kind: input, shape index: {}]
  %s3 = inlined_call_operand.vmem [shape: f32[6,8,1], index: 3, kind: input, shape index: {}]
  %s4 = inlined_call_operand.vmem [shape: f32[6,8,1], index: 4, kind: input, shape index: {}]
  %s5 = inlined_call_operand.vmem [shape: f32[54,8,1], index: 5, kind: input, shape index: {}]
  %s6 = inlined_call_operand.vmem [shape: f32[6,8,1], index: 6, kind: input, shape index: {}]
  %s7 = inlined_call_operand.vmem [shape: f32[6,8,1], index: 7, kind: input, shape index: {}]
  %s8 = inlined_call_operand.vmem [shape: bf16[6,8,8], index: 8, kind: input, shape index: {}]
  %s9 = inlined_call_operand.vmem [shape: f32[6,8,1], index: 9, kind: input, shape index: {}]
  %s10 = inlined_call_operand.hbm [shape: f32[2,8,1024], index: 10, kind: output, shape index: {}, may-alias: {0,10}]
  %s11 = sld [smem:[#allocation0]]
  $region77: #{tpu_custom_call.1} parent=0
    _
  %s13 = ssub.s32 1, %s11
  %s14 = scalar_select 0, %s13, %s11
  $region1: #{tpu_custom_call.1} parent=0
    #allocation2 [shape = 'u8[65536]{0}', space=vmem, size = 0x10000, scoped, tag = 'input window, operand 0']
    #allocation3 [shape = 's32[2]{0}', space=sflag, size = 0x8, scoped, tag = 'scoped memory for tpu_custom_call.1']
    #allocation4 [shape = 's32[2]{0}', space=sflag, size = 0x8, scoped, tag = 'scoped memory for tpu_custom_call.1']
    #allocation5 [shape = 'u8[65536]{0}', space=vmem, size = 0x10000, scoped, tag = 'output window, operand 0']
    %15 = vsyncpa [#allocation3], 0
    %s16 = scalar_lea.sflag [#allocation3], 1
    %17 = vsyncpa %s16, 0
    %18 = vsyncpa [#allocation4], 0
    %s19 = scalar_lea.sflag [#allocation4], 1
    %20 = vsyncpa %s19, 0
    loop: start=0, step=1, limit=4
    $region2: #{tpu_custom_call.1} parent=1 // loop_pre_header
      _
    $region3: #{tpu_custom_call.1} parent=1 // loop_header
      %s22 = sphi 0, %s26
      %p23 = scmp.ge.s32.totalorder %s22, 4
      %s32 = sphi 0, %s34
      %s35 = sphi 0, %s32
      %s36 = sphi 0, %s35
      %s52 = sphi 0, %s36
      %s56 = sphi 0, %s56
      %s58 = sphi 0, %s56
      %s59 = sphi 0, %s58
      %s73 = sphi 0, %s59
      %s77 = sphi 0, %s77
      %s79 = sphi 0, %s77
      %s80 = sphi 0, %s79
      %s94 = sphi 0, %s80
      %s98 = sphi 0, %s98
      %s100 = sphi 0, %s98
      %s101 = sphi 0, %s100
      %s115 = sphi 0, %s101
      %s119 = sphi 0, %s119
      %s121 = sphi 0, %s119
      %s122 = sphi 0, %s121
      %s136 = sphi 0, %s122
      %s140 = sphi 0, %s140
      %s142 = sphi 0, %s140
      %s143 = sphi 0, %s142
      %s157 = sphi 0, %s143
      %s161 = sphi 0, %s161
      %s163 = sphi 0, %s161
      %s164 = sphi 0, %s163
      %s178 = sphi 0, %s164
      %s182 = sphi 0, %s182
      %s184 = sphi 0, %s182
      %s185 = sphi 0, %s184
      %s199 = sphi 0, %s185
      %s203 = sphi 0, %s203
      %s205 = sphi 0, %s203
      %s206 = sphi 0, %s205
      %s220 = sphi 0, %s206
      %s224 = sphi 0, %s224
      %s226 = sphi 0, %s224
      %s227 = sphi 0, %s226
      %s241 = sphi 0, %s227
      %s247 = sphi 0, %s249
      %s250 = sphi 0, %s247
      %s251 = sphi 0, %s250
      %s267 = sphi 0, %s251
    $region4: #{tpu_custom_call.1} parent=1 // loop_header_branch
      %25 = sbr.rel (%p23) target = $region8
    $region5: #{tpu_custom_call.1} parent=1 // loop_body
      %s27 = ssub.s32 %s22, 1
      %s28 = ssub.s32 %s22, 2
      %s29 = sadd.s32 %s22, 1
      %s30 = ssub.s32 %s22, %s29
      %p31 = scmp.eq.s32.totalorder %s30, 0
      %s33 = sadd.s32 %s32, 1
      %s34 = scalar_select %p31, %s32, %s33
      %p37 = pneg %p31
      %p38 = scmp.eq.s32.totalorder %s22, 1
      %p39 = por %p37, %p38
      %p40 = scmp.ne.s32.totalorder %s32, %s35
      %p41 = scmp.eq.s32.totalorder %s22, 0
      %p42 = por %p40, %p41
      %p43 = scmp.ne.s32.totalorder %s32, %s35
      %p44 = scmp.eq.s32.totalorder %s27, 1
      %p45 = por %p43, %p44
      %p46 = scmp.ne.s32.totalorder %s35, %s36
      %p47 = scmp.eq.s32.totalorder %s27, 0
      %p48 = por %p46, %p47
      %p49 = scmp.ne.s32.totalorder %s35, %s36
      %p50 = scmp.eq.s32.totalorder %s28, 1
      %p51 = por %p49, %p50
      %p53 = scmp.ne.s32.totalorder %s36, %s52
      %p54 = scmp.eq.s32.totalorder %s28, 0
      %p55 = por %p53, %p54
      %s57 = sadd.s32 %s56, 1
      %p60 = scmp.eq.s32.totalorder %s22, 1
      %p61 = scmp.ne.s32.totalorder %s56, %s58
      %p62 = scmp.eq.s32.totalorder %s22, 0
      %p63 = por %p61, %p62
      %p64 = scmp.ne.s32.totalorder %s56, %s58
      %p65 = scmp.eq.s32.totalorder %s27, 1
      %p66 = por %p64, %p65
      %p67 = scmp.ne.s32.totalorder %s58, %s59
      %p68 = scmp.eq.s32.totalorder %s27, 0
      %p69 = por %p67, %p68
      %p70 = scmp.ne.s32.totalorder %s58, %s59
      %p71 = scmp.eq.s32.totalorder %s28, 1
      %p72 = por %p70, %p71
      %p74 = scmp.ne.s32.totalorder %s59, %s73
      %p75 = scmp.eq.s32.totalorder %s28, 0
      %p76 = por %p74, %p75
      %s78 = sadd.s32 %s77, 1
      %p81 = scmp.eq.s32.totalorder %s22, 1
      %p82 = scmp.ne.s32.totalorder %s77, %s79
      %p83 = scmp.eq.s32.totalorder %s22, 0
      %p84 = por %p82, %p83
      %p85 = scmp.ne.s32.totalorder %s77, %s79
      %p86 = scmp.eq.s32.totalorder %s27, 1
      %p87 = por %p85, %p86
      %p88 = scmp.ne.s32.totalorder %s79, %s80
      %p89 = scmp.eq.s32.totalorder %s27, 0
      %p90 = por %p88, %p89
      %p91 = scmp.ne.s32.totalorder %s79, %s80
      %p92 = scmp.eq.s32.totalorder %s28, 1
      %p93 = por %p91, %p92
      %p95 = scmp.ne.s32.totalorder %s80, %s94
      %p96 = scmp.eq.s32.totalorder %s28, 0
      %p97 = por %p95, %p96
      %s99 = sadd.s32 %s98, 1
      %p102 = scmp.eq.s32.totalorder %s22, 1
      %p103 = scmp.ne.s32.totalorder %s98, %s100
      %p104 = scmp.eq.s32.totalorder %s22, 0
      %p105 = por %p103, %p104
      %p106 = scmp.ne.s32.totalorder %s98, %s100
      %p107 = scmp.eq.s32.totalorder %s27, 1
      %p108 = por %p106, %p107
      %p109 = scmp.ne.s32.totalorder %s100, %s101
      %p110 = scmp.eq.s32.totalorder %s27, 0
      %p111 = por %p109, %p110
      %p112 = scmp.ne.s32.totalorder %s100, %s101
      %p113 = scmp.eq.s32.totalorder %s28, 1
      %p114 = por %p112, %p113
      %p116 = scmp.ne.s32.totalorder %s101, %s115
      %p117 = scmp.eq.s32.totalorder %s28, 0
      %p118 = por %p116, %p117
      %s120 = sadd.s32 %s119, 1
      %p123 = scmp.eq.s32.totalorder %s22, 1
      %p124 = scmp.ne.s32.totalorder %s119, %s121
      %p125 = scmp.eq.s32.totalorder %s22, 0
      %p126 = por %p124, %p125
      %p127 = scmp.ne.s32.totalorder %s119, %s121
      %p128 = scmp.eq.s32.totalorder %s27, 1
      %p129 = por %p127, %p128
      %p130 = scmp.ne.s32.totalorder %s121, %s122
      %p131 = scmp.eq.s32.totalorder %s27, 0
      %p132 = por %p130, %p131
      %p133 = scmp.ne.s32.totalorder %s121, %s122
      %p134 = scmp.eq.s32.totalorder %s28, 1
      %p135 = por %p133, %p134
      %p137 = scmp.ne.s32.totalorder %s122, %s136
      %p138 = scmp.eq.s32.totalorder %s28, 0
      %p139 = por %p137, %p138
      %s141 = sadd.s32 %s140, 1
      %p144 = scmp.eq.s32.totalorder %s22, 1
      %p145 = scmp.ne.s32.totalorder %s140, %s142
      %p146 = scmp.eq.s32.totalorder %s22, 0
      %p147 = por %p145, %p146
      %p148 = scmp.ne.s32.totalorder %s140, %s142
      %p149 = scmp.eq.s32.totalorder %s27, 1
      %p150 = por %p148, %p149
      %p151 = scmp.ne.s32.totalorder %s142, %s143
      %p152 = scmp.eq.s32.totalorder %s27, 0
      %p153 = por %p151, %p152
      %p154 = scmp.ne.s32.totalorder %s142, %s143
      %p155 = scmp.eq.s32.totalorder %s28, 1
      %p156 = por %p154, %p155
      %p158 = scmp.ne.s32.totalorder %s143, %s157
      %p159 = scmp.eq.s32.totalorder %s28, 0
      %p160 = por %p158, %p159
      %s162 = sadd.s32 %s161, 1
      %p165 = scmp.eq.s32.totalorder %s22, 1
      %p166 = scmp.ne.s32.totalorder %s161, %s163
      %p167 = scmp.eq.s32.totalorder %s22, 0
      %p168 = por %p166, %p167
      %p169 = scmp.ne.s32.totalorder %s161, %s163
      %p170 = scmp.eq.s32.totalorder %s27, 1
      %p171 = por %p169, %p170
      %p172 = scmp.ne.s32.totalorder %s163, %s164
      %p173 = scmp.eq.s32.totalorder %s27, 0
      %p174 = por %p172, %p173
      %p175 = scmp.ne.s32.totalorder %s163, %s164
      %p176 = scmp.eq.s32.totalorder %s28, 1
      %p177 = por %p175, %p176
      %p179 = scmp.ne.s32.totalorder %s164, %s178
      %p180 = scmp.eq.s32.totalorder %s28, 0
      %p181 = por %p179, %p180
      %s183 = sadd.s32 %s182, 1
      %p186 = scmp.eq.s32.totalorder %s22, 1
      %p187 = scmp.ne.s32.totalorder %s182, %s184
      %p188 = scmp.eq.s32.totalorder %s22, 0
      %p189 = por %p187, %p188
      %p190 = scmp.ne.s32.totalorder %s182, %s184
      %p191 = scmp.eq.s32.totalorder %s27, 1
      %p192 = por %p190, %p191
      %p193 = scmp.ne.s32.totalorder %s184, %s185
      %p194 = scmp.eq.s32.totalorder %s27, 0
      %p195 = por %p193, %p194
      %p196 = scmp.ne.s32.totalorder %s184, %s185
      %p197 = scmp.eq.s32.totalorder %s28, 1
      %p198 = por %p196, %p197
      %p200 = scmp.ne.s32.totalorder %s185, %s199
      %p201 = scmp.eq.s32.totalorder %s28, 0
      %p202 = por %p200, %p201
      %s204 = sadd.s32 %s203, 1
      %p207 = scmp.eq.s32.totalorder %s22, 1
      %p208 = scmp.ne.s32.totalorder %s203, %s205
      %p209 = scmp.eq.s32.totalorder %s22, 0
      %p210 = por %p208, %p209
      %p211 = scmp.ne.s32.totalorder %s203, %s205
      %p212 = scmp.eq.s32.totalorder %s27, 1
      %p213 = por %p211, %p212
      %p214 = scmp.ne.s32.totalorder %s205, %s206
      %p215 = scmp.eq.s32.totalorder %s27, 0
      %p216 = por %p214, %p215
      %p217 = scmp.ne.s32.totalorder %s205, %s206
      %p218 = scmp.eq.s32.totalorder %s28, 1
      %p219 = por %p217, %p218
      %p221 = scmp.ne.s32.totalorder %s206, %s220
      %p222 = scmp.eq.s32.totalorder %s28, 0
      %p223 = por %p221, %p222
      %s225 = sadd.s32 %s224, 1
      %p228 = scmp.eq.s32.totalorder %s22, 1
      %p229 = scmp.ne.s32.totalorder %s224, %s226
      %p230 = scmp.eq.s32.totalorder %s22, 0
      %p231 = por %p229, %p230
      %p232 = scmp.ne.s32.totalorder %s224, %s226
      %p233 = scmp.eq.s32.totalorder %s27, 1
      %p234 = por %p232, %p233
      %p235 = scmp.ne.s32.totalorder %s226, %s227
      %p236 = scmp.eq.s32.totalorder %s27, 0
      %p237 = por %p235, %p236
      %p238 = scmp.ne.s32.totalorder %s226, %s227
      %p239 = scmp.eq.s32.totalorder %s28, 1
      %p240 = por %p238, %p239
      %p242 = scmp.ne.s32.totalorder %s227, %s241
      %p243 = scmp.eq.s32.totalorder %s28, 0
      %p244 = por %p242, %p243
      %s245 = ssub.s32 %s22, %s29
      %p246 = scmp.eq.s32.totalorder %s245, 0
      %s248 = sadd.s32 %s247, 1
      %s249 = scalar_select %p246, %s247, %s248
      %p252 = pneg %p246
      %p253 = scmp.eq.s32.totalorder %s22, 1
      %p254 = por %p252, %p253
      %p255 = scmp.ne.s32.totalorder %s247, %s250
      %p256 = scmp.eq.s32.totalorder %s22, 0
      %p257 = por %p255, %p256
      %p258 = scmp.ne.s32.totalorder %s247, %s250
      %p259 = scmp.eq.s32.totalorder %s27, 1
      %p260 = por %p258, %p259
      %p261 = scmp.ne.s32.totalorder %s250, %s251
      %p262 = scmp.eq.s32.totalorder %s27, 0
      %p263 = por %p261, %p262
      %p264 = scmp.ne.s32.totalorder %s250, %s251
      %p265 = scmp.eq.s32.totalorder %s28, 1
      %p266 = por %p264, %p265
      %p268 = scmp.ne.s32.totalorder %s251, %s267
      %p269 = scmp.eq.s32.totalorder %s28, 0
      %p270 = por %p268, %p269
      %p271 = scmp.le.s32.totalorder 1, %s22
      %p272 = scmp.lt.s32.totalorder %s22, 3
      %p273 = pnand %p271, %p272
      %p274 = pneg %p273
      // Predicated region
      $region9: #{tpu_custom_call.1} parent=5 // pred_check
        _
      $region10: #{tpu_custom_call.1} parent=5 // pred_check_branch
        %276 = sbr.rel (%p273) target = $region12
      $region11: #{tpu_custom_call.1} parent=5 // pred_region
        %s277 = ssub.s32 %s22, 1
        // Predicated region
        $region13: #{tpu_custom_call.1} parent=11 // pred_check
          %p278 = pneg %p69
        $region14: #{tpu_custom_call.1} parent=11 // pred_check_branch
          %280 = sbr.rel (%p278) target = $region16
        $region15: #{tpu_custom_call.1} parent=11 // pred_region
          _
        $region16: #{tpu_custom_call.1} parent=11 // pred_fallthru
          _
        // Predicated region
        $region17: #{tpu_custom_call.1} parent=11 // pred_check
          %p281 = pneg %p90
        $region18: #{tpu_custom_call.1} parent=11 // pred_check_branch
          %283 = sbr.rel (%p281) target = $region20
        $region19: #{tpu_custom_call.1} parent=11 // pred_region
          _
        $region20: #{tpu_custom_call.1} parent=11 // pred_fallthru
          _
        // Predicated region
        $region21: #{tpu_custom_call.1} parent=11 // pred_check
          %p284 = pneg %p111
        $region22: #{tpu_custom_call.1} parent=11 // pred_check_branch
          %286 = sbr.rel (%p284) target = $region24
        $region23: #{tpu_custom_call.1} parent=11 // pred_region
          _
        $region24: #{tpu_custom_call.1} parent=11 // pred_fallthru
          _
        // Predicated region
        $region25: #{tpu_custom_call.1} parent=11 // pred_check
          %p287 = pneg %p132
        $region26: #{tpu_custom_call.1} parent=11 // pred_check_branch
          %289 = sbr.rel (%p287) target = $region28
        $region27: #{tpu_custom_call.1} parent=11 // pred_region
          _
        $region28: #{tpu_custom_call.1} parent=11 // pred_fallthru
          _
        // Predicated region
        $region29: #{tpu_custom_call.1} parent=11 // pred_check
          %p290 = pneg %p153
        $region30: #{tpu_custom_call.1} parent=11 // pred_check_branch
          %292 = sbr.rel (%p290) target = $region32
        $region31: #{tpu_custom_call.1} parent=11 // pred_region
          _
        $region32: #{tpu_custom_call.1} parent=11 // pred_fallthru
          _
        // Predicated region
        $region33: #{tpu_custom_call.1} parent=11 // pred_check
          %p293 = pneg %p174
        $region34: #{tpu_custom_call.1} parent=11 // pred_check_branch
          %295 = sbr.rel (%p293) target = $region36
        $region35: #{tpu_custom_call.1} parent=11 // pred_region
          _
        $region36: #{tpu_custom_call.1} parent=11 // pred_fallthru
          _
        // Predicated region
        $region37: #{tpu_custom_call.1} parent=11 // pred_check
          %p296 = pneg %p195
        $region38: #{tpu_custom_call.1} parent=11 // pred_check_branch
          %298 = sbr.rel (%p296) target = $region40
        $region39: #{tpu_custom_call.1} parent=11 // pred_region
          _
        $region40: #{tpu_custom_call.1} parent=11 // pred_fallthru
          _
        // Predicated region
        $region41: #{tpu_custom_call.1} parent=11 // pred_check
          %p299 = pneg %p216
        $region42: #{tpu_custom_call.1} parent=11 // pred_check_branch
          %301 = sbr.rel (%p299) target = $region44
        $region43: #{tpu_custom_call.1} parent=11 // pred_region
          _
        $region44: #{tpu_custom_call.1} parent=11 // pred_fallthru
          _
        // Predicated region
        $region45: #{tpu_custom_call.1} parent=11 // pred_check
          %p302 = pneg %p237
        $region46: #{tpu_custom_call.1} parent=11 // pred_check_branch
          %304 = sbr.rel (%p302) target = $region48
        $region47: #{tpu_custom_call.1} parent=11 // pred_region
          _
        $region48: #{tpu_custom_call.1} parent=11 // pred_fallthru
          _
      $region12: #{tpu_custom_call.1} parent=5 // pred_fallthru
        _
      %p305 = scmp.lt.s32.totalorder %s22, 2
      // Predicated region
      $region49: #{tpu_custom_call.1} parent=5 // pred_check
        %p306 = pneg %p305
      $region50: #{tpu_custom_call.1} parent=5 // pred_check_branch
        %308 = sbr.rel (%p306) target = $region52
      $region51: #{tpu_custom_call.1} parent=5 // pred_region
        // Predicated region
        $region53: #{tpu_custom_call.1} parent=51 // pred_check
          %p309 = pneg %p42
        $region54: #{tpu_custom_call.1} parent=51 // pred_check_branch
          %311 = sbr.rel (%p309) target = $region56
        $region55: #{tpu_custom_call.1} parent=51 // pred_region
          %s312 = sand.u32 %s32, 1
          %s313 = scalar_lea.sflag [#allocation3], %s312
          %s314 = sand.u32 %s32, 1
          %s315 = smul.addr %s314, 64
          %s316 = scalar_lea.vmem [#allocation2], %s315
          %s318 = ssub.s32 1024, 1024
          %319 = vsyncadd %s313, %s318
          %s320 = smul.addr %s22, 8
          %s321 = smul.addr %s320, 128
          %s322 = scalar_lea.hbm %s0, %s321
          %s324 = sshll.u32 %s316, 4
          %s325 = int_to_ptr.vmem [resolvable:$true] %s324
          %327 = dma.hbm_to_vmem [thread:$0]  %s322, 1024, %s325, %s313
        $region56: #{tpu_custom_call.1} parent=51 // pred_fallthru
          _
      $region52: #{tpu_custom_call.1} parent=5 // pred_fallthru
        _
      %p328 = scmp.le.s32.totalorder 1, %s22
      %p329 = scmp.lt.s32.totalorder %s22, 3
      %p330 = pnand %p328, %p329
      %p331 = pneg %p330
      // Predicated region
      $region57: #{tpu_custom_call.1} parent=5 // pred_check
        _
      $region58: #{tpu_custom_call.1} parent=5 // pred_check_branch
        %333 = sbr.rel (%p330) target = $region60
      $region59: #{tpu_custom_call.1} parent=5 // pred_region
        %s334 = ssub.s32 %s22, 1
        %s335 = sand.u32 %s35, 1
        %s336 = scalar_lea.sflag [#allocation3], %s335
        %s337 = sand.u32 %s35, 1
        %s338 = smul.addr %s337, 64
        %s339 = scalar_lea.vmem [#allocation2], %s338
        // Predicated region
        $region61: #{tpu_custom_call.1} parent=59 // pred_check
          %p340 = pneg %p48
        $region62: #{tpu_custom_call.1} parent=59 // pred_check_branch
          %342 = sbr.rel (%p340) target = $region64
        $region63: #{tpu_custom_call.1} parent=59 // pred_region
          %343 = dma.done %s336, 1024
        $region64: #{tpu_custom_call.1} parent=59 // pred_fallthru
          _
        %s344 = sand.u32 %s35, 1
        %s345 = scalar_lea.sflag [#allocation3], %s344
        %s346 = sand.u32 %s35, 1
        %s347 = smul.addr %s346, 64
        %s348 = scalar_lea.vmem [#allocation2], %s347
        %p349 = pneg %p48
        %p350 = pneg %p45
        %p351 = pneg %p69
        %p352 = pneg %p66
        %p353 = pneg %p90
        %p354 = pneg %p87
        %p355 = pneg %p111
        %p356 = pneg %p108
        %p357 = pneg %p132
        %p358 = pneg %p129
        %p359 = pneg %p153
        %p360 = pneg %p150
        %p361 = pneg %p174
        %p362 = pneg %p171
        %p363 = pneg %p195
        %p364 = pneg %p192
        %p365 = pneg %p216
        %p366 = pneg %p213
        %p367 = pneg %p237
        %p368 = pneg %p234
        %p369 = pneg %p263
        %p370 = pneg %p260
        %s371 = sand.u32 %s250, 1
        %s372 = scalar_lea.sflag [#allocation4], %s371
        %s373 = sand.u32 %s250, 1
        %s374 = smul.addr %s373, 64
        %s375 = scalar_lea.vmem [#allocation5], %s374
        %v377 = vld [vmem:[%s339] sm:$0xff]
        %v378 = vld [vmem:[%s339 + $0x8] sm:$0xff]
        %v379 = vld [vmem:[%s339 + $0x10] sm:$0xff]
        %v380 = vld [vmem:[%s339 + $0x18] sm:$0xff]
        %v381 = vld [vmem:[%s339 + $0x20] sm:$0xff]
        %v382 = vld [vmem:[%s339 + $0x28] sm:$0xff]
        %v383 = vld [vmem:[%s339 + $0x30] sm:$0xff]
        %v384 = vld [vmem:[%s339 + $0x38] sm:$0xff]
        %v385 = vld [vmem:[%s1] ss:$8 sm:$0xf]
        %v386 = vld [vmem:[%s1] ss:$8 sm:$0xf0]
        %v387 = vor.u32 %v385, %v386
        %s388 = scalar_lea.vmem %s1, 1
        %v389 = vld [vmem:[%s388] ss:$8 sm:$0xf]
        %v390 = vld [vmem:[%s388] ss:$8 sm:$0xf0]
        %v391 = vor.u32 %v389, %v390
        %v392 = vld [vmem:[%s2] sm:$0xf]
        %v393 = vpack.c.bf16 %v377, %v377
        %v394 = vpack.c.bf16 %v378, %v378
        %v395 = vpack.c.bf16 %v379, %v379
        %v396 = vpack.c.bf16 %v380, %v380
        %v397 = vpack.c.bf16 %v381, %v381
        %v398 = vpack.c.bf16 %v382, %v382
        %v399 = vpack.c.bf16 %v383, %v383
        %v400 = vpack.c.bf16 %v384, %v384
        %v401 = vld [vmem:[%s3] sm:$0xff]
        %403 = vset.pattern.permute.xlu0 0
        %404 = vperm.xlu0 %403, %v401
        %v405 = vpop.permute.xlu0 %404
        %vm407 = vcmask 64512
        %v409 = vsel %vm407, %v392, 0
        %vm411 = vcmask 1043456
        %v413 = vsel %vm411, %v393, 0
        %v416 = vsel %vm411, %v394, 0
        %v419 = vsel %vm411, %v395, 0
        %v422 = vsel %vm411, %v396, 0
        %v425 = vsel %vm411, %v397, 0
        %v428 = vsel %vm411, %v398, 0
        %v431 = vsel %vm411, %v399, 0
        %v434 = vsel %vm411, %v400, 0
        %436 = vmatprep.subr.bf16.mxu0 %v416
        %437 = vmatpush1.bf16.msra.mxu0 %v413
        %438 = vmatprep.subr.bf16.mxu0 0
        %439 = vmatpush1.bf16.msra.mxu0 0
        %440 = vmatprep.subr.bf16.mxu0 0
        %441 = vmatpush1.bf16.msra.mxu0 0
        %442 = vmatprep.subr.bf16.mxu0 0
        %443 = vmatpush1.bf16.msra.mxu0 0
        %444 = vmatprep.subr.bf16.mxu0 0
        %445 = vmatpush1.bf16.msra.mxu0 0
        %446 = vmatprep.subr.bf16.mxu0 0
        %447 = vmatpush1.bf16.msra.mxu0 0
        %448 = vmatprep.subr.bf16.mxu0 0
        %449 = vmatpush1.bf16.msra.mxu0 0
        %450 = vmatprep.subr.bf16.mxu0 0
        %451 = vmatpush1.bf16.msra.mxu0 0
        %452 = vmatprep.subr.bf16.mxu0 0
        %453 = vmatpush1.bf16.msra.mxu0 0
        %454 = vmatprep.subr.bf16.mxu0 0
        %455 = vmatpush1.bf16.msra.mxu0 0
        %456 = vmatprep.subr.bf16.mxu0 0
        %457 = vmatpush1.bf16.msra.mxu0 0
        %458 = vmatprep.subr.bf16.mxu0 0
        %459 = vmatpush1.bf16.msra.mxu0 0
        %460 = vmatprep.subr.bf16.mxu0 0
        %461 = vmatpush1.bf16.msra.mxu0 0
        %462 = vmatprep.subr.bf16.mxu0 0
        %463 = vmatpush1.bf16.msra.mxu0 0
        %464 = vmatprep.subr.bf16.mxu0 0
        %465 = vmatpush1.bf16.msra.mxu0 0
        %466 = vmatprep.subr.bf16.mxu0 0
        %467 = vmatpush1.bf16.msra.mxu0 0
        %468 = vmatprep.mubr.bf16.mxu0 0
        %469 = vmatmul.mubr.bf16.gmra.mrb[0].mxu0 %v409
        %v470 = vpop.f32.mrb[0].mxu0
        %v471 = vadd.f32 %v405, %v470
        %v472 = vpop.f32.mrb[0].mxu0
        %v473 = vadd.f32 %v405, %v472
        %v474 = vpop.f32.mrb[0].mxu0
        %v475 = vpop.f32.mrb[0].mxu0
        %476 = vdwg.mxu0
        %477 = vmatprep.subr.bf16.mxu0 %v422
        %478 = vmatpush1.bf16.msra.mxu0 %v419
        %479 = vmatprep.subr.bf16.mxu0 0
        %480 = vmatpush1.bf16.msra.mxu0 0
        %481 = vmatprep.subr.bf16.mxu0 0
        %482 = vmatpush1.bf16.msra.mxu0 0
        %483 = vmatprep.subr.bf16.mxu0 0
        %484 = vmatpush1.bf16.msra.mxu0 0
        %485 = vmatprep.subr.bf16.mxu0 0
        %486 = vmatpush1.bf16.msra.mxu0 0
        %487 = vmatprep.subr.bf16.mxu0 0
        %488 = vmatpush1.bf16.msra.mxu0 0
        %489 = vmatprep.subr.bf16.mxu0 0
        %490 = vmatpush1.bf16.msra.mxu0 0
        %491 = vmatprep.subr.bf16.mxu0 0
        %492 = vmatpush1.bf16.msra.mxu0 0
        %493 = vmatprep.subr.bf16.mxu0 0
        %494 = vmatpush1.bf16.msra.mxu0 0
        %495 = vmatprep.subr.bf16.mxu0 0
        %496 = vmatpush1.bf16.msra.mxu0 0
        %497 = vmatprep.subr.bf16.mxu0 0
        %498 = vmatpush1.bf16.msra.mxu0 0
        %499 = vmatprep.subr.bf16.mxu0 0
        %500 = vmatpush1.bf16.msra.mxu0 0
        %501 = vmatprep.subr.bf16.mxu0 0
        %502 = vmatpush1.bf16.msra.mxu0 0
        %503 = vmatprep.subr.bf16.mxu0 0
        %504 = vmatpush1.bf16.msra.mxu0 0
        %505 = vmatprep.subr.bf16.mxu0 0
        %506 = vmatpush1.bf16.msra.mxu0 0
        %507 = vmatprep.subr.bf16.mxu0 0
        %508 = vmatpush1.bf16.msra.mxu0 0
        %509 = vmatprep.mubr.bf16.mxu0 0
        %510 = vmatmul.mubr.bf16.gmra.mrb[0].mxu0 %v409
        %v511 = vpop.f32.mrb[0].mxu0
        %v512 = vadd.f32 %v405, %v511
        %v513 = vpop.f32.mrb[0].mxu0
        %v514 = vadd.f32 %v405, %v513
        %v515 = vpop.f32.mrb[0].mxu0
        %v516 = vpop.f32.mrb[0].mxu0
        %517 = vdwg.mxu0
        %518 = vmatprep.subr.bf16.mxu0 %v428
        %519 = vmatpush1.bf16.msra.mxu0 %v425
        %520 = vmatprep.subr.bf16.mxu0 0
        %521 = vmatpush1.bf16.msra.mxu0 0
        %522 = vmatprep.subr.bf16.mxu0 0
        %523 = vmatpush1.bf16.msra.mxu0 0
        %524 = vmatprep.subr.bf16.mxu0 0
        %525 = vmatpush1.bf16.msra.mxu0 0
        %526 = vmatprep.subr.bf16.mxu0 0
        %527 = vmatpush1.bf16.msra.mxu0 0
        %528 = vmatprep.subr.bf16.mxu0 0
        %529 = vmatpush1.bf16.msra.mxu0 0
        %530 = vmatprep.subr.bf16.mxu0 0
        %531 = vmatpush1.bf16.msra.mxu0 0
        %532 = vmatprep.subr.bf16.mxu0 0
        %533 = vmatpush1.bf16.msra.mxu0 0
        %534 = vmatprep.subr.bf16.mxu0 0
        %535 = vmatpush1.bf16.msra.mxu0 0
        %536 = vmatprep.subr.bf16.mxu0 0
        %537 = vmatpush1.bf16.msra.mxu0 0
        %538 = vmatprep.subr.bf16.mxu0 0
        %539 = vmatpush1.bf16.msra.mxu0 0
        %540 = vmatprep.subr.bf16.mxu0 0
        %541 = vmatpush1.bf16.msra.mxu0 0
        %542 = vmatprep.subr.bf16.mxu0 0
        %543 = vmatpush1.bf16.msra.mxu0 0
        %544 = vmatprep.subr.bf16.mxu0 0
        %545 = vmatpush1.bf16.msra.mxu0 0
        %546 = vmatprep.subr.bf16.mxu0 0
        %547 = vmatpush1.bf16.msra.mxu0 0
        %548 = vmatprep.subr.bf16.mxu0 0
        %549 = vmatpush1.bf16.msra.mxu0 0
        %550 = vmatprep.mubr.bf16.mxu0 0
        %551 = vmatmul.mubr.bf16.gmra.mrb[0].mxu0 %v409
        %v552 = vpop.f32.mrb[0].mxu0
        %v553 = vadd.f32 %v405, %v552
        %v554 = vpop.f32.mrb[0].mxu0
        %v555 = vadd.f32 %v405, %v554
        %v556 = vpop.f32.mrb[0].mxu0
        %v557 = vpop.f32.mrb[0].mxu0
        %558 = vdwg.mxu0
        %559 = vmatprep.subr.bf16.mxu0 %v434
        %560 = vmatpush1.bf16.msra.mxu0 %v431
        %561 = vmatprep.subr.bf16.mxu0 0
        %562 = vmatpush1.bf16.msra.mxu0 0
        %563 = vmatprep.subr.bf16.mxu0 0
        %564 = vmatpush1.bf16.msra.mxu0 0
        %565 = vmatprep.subr.bf16.mxu0 0
        %566 = vmatpush1.bf16.msra.mxu0 0
        %567 = vmatprep.subr.bf16.mxu0 0
        %568 = vmatpush1.bf16.msra.mxu0 0
        %569 = vmatprep.subr.bf16.mxu0 0
        %570 = vmatpush1.bf16.msra.mxu0 0
        %571 = vmatprep.subr.bf16.mxu0 0
        %572 = vmatpush1.bf16.msra.mxu0 0
        %573 = vmatprep.subr.bf16.mxu0 0
        %574 = vmatpush1.bf16.msra.mxu0 0
        %575 = vmatprep.subr.bf16.mxu0 0
        %576 = vmatpush1.bf16.msra.mxu0 0
        %577 = vmatprep.subr.bf16.mxu0 0
        %578 = vmatpush1.bf16.msra.mxu0 0
        %579 = vmatprep.subr.bf16.mxu0 0
        %580 = vmatpush1.bf16.msra.mxu0 0
        %581 = vmatprep.subr.bf16.mxu0 0
        %582 = vmatpush1.bf16.msra.mxu0 0
        %583 = vmatprep.subr.bf16.mxu0 0
        %584 = vmatpush1.bf16.msra.mxu0 0
        %585 = vmatprep.subr.bf16.mxu0 0
        %586 = vmatpush1.bf16.msra.mxu0 0
        %587 = vmatprep.subr.bf16.mxu0 0
        %588 = vmatpush1.bf16.msra.mxu0 0
        %589 = vmatprep.subr.bf16.mxu0 0
        %590 = vmatpush1.bf16.msra.mxu0 0
        %591 = vmatprep.mubr.bf16.mxu0 0
        %592 = vmatmul.mubr.bf16.gmra.mrb[0].mxu0 %v409
        %v593 = vpop.f32.mrb[0].mxu0
        %v594 = vadd.f32 %v405, %v593
        %v595 = vpop.f32.mrb[0].mxu0
        %v596 = vadd.f32 %v405, %v595
        %v597 = vpop.f32.mrb[0].mxu0
        %v598 = vpop.f32.mrb[0].mxu0
        %599 = vdwg.mxu0
        %vm600 = vcmp.ge.f32.partialorder %v471, 0.0
        %vm601 = vcmp.ge.f32.partialorder %v473, 0.0
        %vm602 = vcmp.ge.f32.partialorder %v512, 0.0
        %vm603 = vcmp.ge.f32.partialorder %v514, 0.0
        %vm604 = vcmp.ge.f32.partialorder %v553, 0.0
        %vm605 = vcmp.ge.f32.partialorder %v555, 0.0
        %vm606 = vcmp.ge.f32.partialorder %v594, 0.0
        %vm607 = vcmp.ge.f32.partialorder %v596, 0.0
        %v608 = vld [vmem:[%s4] sm:$0xff]
        %610 = vset.pattern.permute.xlu0 0
        %611 = vperm.xlu0 %610, %v608
        %v612 = vpop.permute.xlu0 %611
        %v614 = vmul.f32 %v612, %v471
        %v615 = vmul.f32 %v612, %v473
        %v616 = vmul.f32 %v612, %v512
        %v617 = vmul.f32 %v612, %v514
        %v618 = vmul.f32 %v612, %v553
        %v619 = vmul.f32 %v612, %v555
        %v620 = vmul.f32 %v612, %v594
        %v621 = vmul.f32 %v612, %v596
        %v622 = vsel %vm600, %v471, %v614
        %v623 = vsel %vm601, %v473, %v615
        %v624 = vsel %vm602, %v512, %v616
        %v625 = vsel %vm603, %v514, %v617
        %v626 = vsel %vm604, %v553, %v618
        %v627 = vsel %vm605, %v555, %v619
        %v628 = vsel %vm606, %v594, %v620
        %v629 = vsel %vm607, %v596, %v621
        %630 = vrot.lane.b32.xlu0 %v622, 64
        %v631 = vpop.permute.xlu0 %630
        %632 = vrot.lane.b32.xlu0 %v623, 64
        %v633 = vpop.permute.xlu0 %632
        %634 = vrot.lane.b32.xlu0 %v624, 64
        %v635 = vpop.permute.xlu0 %634
        %636 = vrot.lane.b32.xlu0 %v625, 64
        %v637 = vpop.permute.xlu0 %636
        %638 = vrot.lane.b32.xlu0 %v626, 64
        %v639 = vpop.permute.xlu0 %638
        %640 = vrot.lane.b32.xlu0 %v627, 64
        %v641 = vpop.permute.xlu0 %640
        %642 = vrot.lane.b32.xlu0 %v628, 64
        %v643 = vpop.permute.xlu0 %642
        %644 = vrot.lane.b32.xlu0 %v629, 64
        %v645 = vpop.permute.xlu0 %644
        %v646 = vlaneseq
        %v647 = vand.u32 %v646, 127
        %vm648 = vcmp.lt.s32.totalorder %v647, 64
        %v649 = vsel %vm648, %v643, %v645
        %v650 = vsel %vm648, %v641, %v643
        %v651 = vsel %vm648, %v639, %v641
        %v652 = vsel %vm648, %v637, %v639
        %v653 = vsel %vm648, %v635, %v637
        %v654 = vsel %vm648, %v633, %v635
        %v655 = vsel %vm648, %v631, %v633
        %v656 = vsel %vm648, %v645, %v631
        %v658 = vlaneseq
        %v659 = vshrl.u32 %v658, 7
        %v660 = vsub.s32 0, %v659
        %v661 = vrot.slane %v387, %v660
        %v662 = vlaneseq
        %v663 = vshrl.u32 %v662, 7
        %v664 = vsub.s32 1, %v663
        %v665 = vrot.slane %v387, %v664
        %v666 = vlaneseq
        %v667 = vshrl.u32 %v666, 7
        %v668 = vsub.s32 2, %v667
        %v669 = vrot.slane %v387, %v668
        %v670 = vlaneseq
        %v671 = vshrl.u32 %v670, 7
        %v672 = vsub.s32 3, %v671
        %v673 = vrot.slane %v387, %v672
        %v674 = vlaneseq
        %v675 = vshrl.u32 %v674, 7
        %v676 = vsub.s32 4, %v675
        %v677 = vrot.slane %v387, %v676
        %v678 = vlaneseq
        %v679 = vshrl.u32 %v678, 7
        %v680 = vsub.s32 5, %v679
        %v681 = vrot.slane %v387, %v680
        %v682 = vlaneseq
        %v683 = vshrl.u32 %v682, 7
        %v684 = vsub.s32 6, %v683
        %v685 = vrot.slane %v387, %v684
        %v686 = vlaneseq
        %v687 = vshrl.u32 %v686, 7
        %v688 = vsub.s32 7, %v687
        %v689 = vrot.slane %v387, %v688
        %v698 = vmul.f32 %v661, %v656
        %v699 = vmul.f32 %v665, %v655
        %v700 = vmul.f32 %v669, %v654
        %v701 = vmul.f32 %v673, %v653
        %v702 = vmul.f32 %v677, %v652
        %v703 = vmul.f32 %v681, %v651
        %v704 = vmul.f32 %v685, %v650
        %v705 = vmul.f32 %v689, %v649
        %v707 = vlaneseq
        %v708 = vshrl.u32 %v707, 7
        %v709 = vsub.s32 0, %v708
        %v710 = vrot.slane %v391, %v709
        %v711 = vlaneseq
        %v712 = vshrl.u32 %v711, 7
        %v713 = vsub.s32 1, %v712
        %v714 = vrot.slane %v391, %v713
        %v715 = vlaneseq
        %v716 = vshrl.u32 %v715, 7
        %v717 = vsub.s32 2, %v716
        %v718 = vrot.slane %v391, %v717
        %v719 = vlaneseq
        %v720 = vshrl.u32 %v719, 7
        %v721 = vsub.s32 3, %v720
        %v722 = vrot.slane %v391, %v721
        %v723 = vlaneseq
        %v724 = vshrl.u32 %v723, 7
        %v725 = vsub.s32 4, %v724
        %v726 = vrot.slane %v391, %v725
        %v727 = vlaneseq
        %v728 = vshrl.u32 %v727, 7
        %v729 = vsub.s32 5, %v728
        %v730 = vrot.slane %v391, %v729
        %v731 = vlaneseq
        %v732 = vshrl.u32 %v731, 7
        %v733 = vsub.s32 6, %v732
        %v734 = vrot.slane %v391, %v733
        %v735 = vlaneseq
        %v736 = vshrl.u32 %v735, 7
        %v737 = vsub.s32 7, %v736
        %v738 = vrot.slane %v391, %v737
        %v747 = vmul.f32 %v710, %v655
        %v748 = vmul.f32 %v714, %v654
        %v749 = vmul.f32 %v718, %v653
        %v750 = vmul.f32 %v722, %v652
        %v751 = vmul.f32 %v726, %v651
        %v752 = vmul.f32 %v730, %v650
        %v753 = vmul.f32 %v734, %v649
        %v754 = vmul.f32 %v738, %v656
        %v755 = vld [vmem:[%s5] sm:$0xff]
        %757 = vset.pattern.permute.xlu0 0
        %758 = vperm.xlu0 %757, %v755
        %v759 = vpop.permute.xlu0 %758
        %v761 = vmul.f32 %v759, %v698
        %v762 = vmul.f32 %v759, %v699
        %v763 = vmul.f32 %v759, %v700
        %v764 = vmul.f32 %v759, %v701
        %v765 = vmul.f32 %v759, %v702
        %v766 = vmul.f32 %v759, %v703
        %v767 = vmul.f32 %v759, %v704
        %v768 = vmul.f32 %v759, %v705
        %s769 = scalar_lea.vmem %s5, 24
        %v770 = vld [vmem:[%s769] sm:$0xff]
        %772 = vset.pattern.permute.xlu0 0
        %773 = vperm.xlu0 %772, %v770
        %v774 = vpop.permute.xlu0 %773
        %v776 = vmul.f32 %v774, %v622
        %v777 = vmul.f32 %v774, %v623
        %v778 = vmul.f32 %v774, %v624
        %v779 = vmul.f32 %v774, %v625
        %v780 = vmul.f32 %v774, %v626
        %v781 = vmul.f32 %v774, %v627
        %v782 = vmul.f32 %v774, %v628
        %v783 = vmul.f32 %v774, %v629
        %v784 = vadd.f32 %v761, %v776
        %v785 = vadd.f32 %v762, %v777
        %v786 = vadd.f32 %v763, %v778
        %v787 = vadd.f32 %v764, %v779
        %v788 = vadd.f32 %v765, %v780
        %v789 = vadd.f32 %v766, %v781
        %v790 = vadd.f32 %v767, %v782
        %v791 = vadd.f32 %v768, %v783
        %s792 = scalar_lea.vmem %s5, 48
        %v793 = vld [vmem:[%s792] sm:$0xff]
        %795 = vset.pattern.permute.xlu0 0
        %796 = vperm.xlu0 %795, %v793
        %v797 = vpop.permute.xlu0 %796
        %v799 = vmul.f32 %v797, %v747
        %v800 = vmul.f32 %v797, %v748
        %v801 = vmul.f32 %v797, %v749
        %v802 = vmul.f32 %v797, %v750
        %v803 = vmul.f32 %v797, %v751
        %v804 = vmul.f32 %v797, %v752
        %v805 = vmul.f32 %v797, %v753
        %v806 = vmul.f32 %v797, %v754
        %v807 = vadd.f32 %v784, %v799
        %v808 = vadd.f32 %v785, %v800
        %v809 = vadd.f32 %v786, %v801
        %v810 = vadd.f32 %v787, %v802
        %v811 = vadd.f32 %v788, %v803
        %v812 = vadd.f32 %v789, %v804
        %v813 = vadd.f32 %v790, %v805
        %v814 = vadd.f32 %v791, %v806
        %815 = vrot.lane.b32.xlu0 %v807, 2
        %v816 = vpop.permute.xlu0 %815
        %817 = vrot.lane.b32.xlu0 %v808, 2
        %v818 = vpop.permute.xlu0 %817
        %819 = vrot.lane.b32.xlu0 %v809, 2
        %v820 = vpop.permute.xlu0 %819
        %821 = vrot.lane.b32.xlu0 %v810, 2
        %v822 = vpop.permute.xlu0 %821
        %823 = vrot.lane.b32.xlu0 %v811, 2
        %v824 = vpop.permute.xlu0 %823
        %825 = vrot.lane.b32.xlu0 %v812, 2
        %v826 = vpop.permute.xlu0 %825
        %827 = vrot.lane.b32.xlu0 %v813, 2
        %v828 = vpop.permute.xlu0 %827
        %829 = vrot.lane.b32.xlu0 %v814, 2
        %v830 = vpop.permute.xlu0 %829
        %vm831 = vcmp.lt.s32.totalorder %v647, 2
        %v832 = vsel %vm831, %v828, %v830
        %v833 = vsel %vm831, %v826, %v828
        %v834 = vsel %vm831, %v824, %v826
        %v835 = vsel %vm831, %v822, %v824
        %v836 = vsel %vm831, %v820, %v822
        %v837 = vsel %vm831, %v818, %v820
        %v838 = vsel %vm831, %v816, %v818
        %v839 = vsel %vm831, %v830, %v816
        %s840 = scalar_lea.vmem %s1, 3
        %v841 = vld [vmem:[%s840] ss:$8 sm:$0xf]
        %v842 = vld [vmem:[%s840] ss:$8 sm:$0xf0]
        %v843 = vor.u32 %v841, %v842
        %v845 = vlaneseq
        %v846 = vshrl.u32 %v845, 7
        %v847 = vsub.s32 0, %v846
        %v848 = vrot.slane %v843, %v847
        %v849 = vlaneseq
        %v850 = vshrl.u32 %v849, 7
        %v851 = vsub.s32 1, %v850
        %v852 = vrot.slane %v843, %v851
        %v853 = vlaneseq
        %v854 = vshrl.u32 %v853, 7
        %v855 = vsub.s32 2, %v854
        %v856 = vrot.slane %v843, %v855
        %v857 = vlaneseq
        %v858 = vshrl.u32 %v857, 7
        %v859 = vsub.s32 3, %v858
        %v860 = vrot.slane %v843, %v859
        %v861 = vlaneseq
        %v862 = vshrl.u32 %v861, 7
        %v863 = vsub.s32 4, %v862
        %v864 = vrot.slane %v843, %v863
        %v865 = vlaneseq
        %v866 = vshrl.u32 %v865, 7
        %v867 = vsub.s32 5, %v866
        %v868 = vrot.slane %v843, %v867
        %v869 = vlaneseq
        %v870 = vshrl.u32 %v869, 7
        %v871 = vsub.s32 6, %v870
        %v872 = vrot.slane %v843, %v871
        %v873 = vlaneseq
        %v874 = vshrl.u32 %v873, 7
        %v875 = vsub.s32 7, %v874
        %v876 = vrot.slane %v843, %v875
        %v885 = vmul.f32 %v839, %v848
        %v886 = vmul.f32 %v838, %v852
        %v887 = vmul.f32 %v837, %v856
        %v888 = vmul.f32 %v836, %v860
        %v889 = vmul.f32 %v835, %v864
        %v890 = vmul.f32 %v834, %v868
        %v891 = vmul.f32 %v833, %v872
        %v892 = vmul.f32 %v832, %v876
        %s893 = scalar_lea.vmem %s5, 8
        %v894 = vld [vmem:[%s893] sm:$0xff]
        %896 = vset.pattern.permute.xlu0 0
        %897 = vperm.xlu0 %896, %v894
        %v898 = vpop.permute.xlu0 %897
        %v900 = vmul.f32 %v898, %v698
        %v901 = vmul.f32 %v898, %v699
        %v902 = vmul.f32 %v898, %v700
        %v903 = vmul.f32 %v898, %v701
        %v904 = vmul.f32 %v898, %v702
        %v905 = vmul.f32 %v898, %v703
        %v906 = vmul.f32 %v898, %v704
        %v907 = vmul.f32 %v898, %v705
        %s908 = scalar_lea.vmem %s5, 32
        %v909 = vld [vmem:[%s908] sm:$0xff]
        %911 = vset.pattern.permute.xlu0 0
        %912 = vperm.xlu0 %911, %v909
        %v913 = vpop.permute.xlu0 %912
        %v915 = vmul.f32 %v913, %v622
        %v916 = vmul.f32 %v913, %v623
        %v917 = vmul.f32 %v913, %v624
        %v918 = vmul.f32 %v913, %v625
        %v919 = vmul.f32 %v913, %v626
        %v920 = vmul.f32 %v913, %v627
        %v921 = vmul.f32 %v913, %v628
        %v922 = vmul.f32 %v913, %v629
        %v923 = vadd.f32 %v900, %v915
        %v924 = vadd.f32 %v901, %v916
        %v925 = vadd.f32 %v902, %v917
        %v926 = vadd.f32 %v903, %v918
        %v927 = vadd.f32 %v904, %v919
        %v928 = vadd.f32 %v905, %v920
        %v929 = vadd.f32 %v906, %v921
        %v930 = vadd.f32 %v907, %v922
        %s931 = scalar_lea.vmem %s5, 56
        %v932 = vld [vmem:[%s931] sm:$0xff]
        %934 = vset.pattern.permute.xlu0 0
        %935 = vperm.xlu0 %934, %v932
        %v936 = vpop.permute.xlu0 %935
        %v938 = vmul.f32 %v936, %v747
        %v939 = vmul.f32 %v936, %v748
        %v940 = vmul.f32 %v936, %v749
        %v941 = vmul.f32 %v936, %v750
        %v942 = vmul.f32 %v936, %v751
        %v943 = vmul.f32 %v936, %v752
        %v944 = vmul.f32 %v936, %v753
        %v945 = vmul.f32 %v936, %v754
        %v946 = vadd.f32 %v923, %v938
        %v947 = vadd.f32 %v924, %v939
        %v948 = vadd.f32 %v925, %v940
        %v949 = vadd.f32 %v926, %v941
        %v950 = vadd.f32 %v927, %v942
        %v951 = vadd.f32 %v928, %v943
        %v952 = vadd.f32 %v929, %v944
        %v953 = vadd.f32 %v930, %v945
        %954 = vrot.lane.b32.xlu0 %v946, 1
        %v955 = vpop.permute.xlu0 %954
        %956 = vrot.lane.b32.xlu0 %v947, 1
        %v957 = vpop.permute.xlu0 %956
        %958 = vrot.lane.b32.xlu0 %v948, 1
        %v959 = vpop.permute.xlu0 %958
        %960 = vrot.lane.b32.xlu0 %v949, 1
        %v961 = vpop.permute.xlu0 %960
        %962 = vrot.lane.b32.xlu0 %v950, 1
        %v963 = vpop.permute.xlu0 %962
        %964 = vrot.lane.b32.xlu0 %v951, 1
        %v965 = vpop.permute.xlu0 %964
        %966 = vrot.lane.b32.xlu0 %v952, 1
        %v967 = vpop.permute.xlu0 %966
        %968 = vrot.lane.b32.xlu0 %v953, 1
        %v969 = vpop.permute.xlu0 %968
        %vm970 = vcmp.lt.s32.totalorder %v647, 1
        %v971 = vsel %vm970, %v967, %v969
        %v972 = vsel %vm970, %v965, %v967
        %v973 = vsel %vm970, %v963, %v965
        %v974 = vsel %vm970, %v961, %v963
        %v975 = vsel %vm970, %v959, %v961
        %v976 = vsel %vm970, %v957, %v959
        %v977 = vsel %vm970, %v955, %v957
        %v978 = vsel %vm970, %v969, %v955
        %s979 = scalar_lea.vmem %s1, 2
        %v980 = vld [vmem:[%s979] ss:$8 sm:$0xf]
        %v981 = vld [vmem:[%s979] ss:$8 sm:$0xf0]
        %v982 = vor.u32 %v980, %v981
        %v984 = vlaneseq
        %v985 = vshrl.u32 %v984, 7
        %v986 = vsub.s32 0, %v985
        %v987 = vrot.slane %v982, %v986
        %v988 = vlaneseq
        %v989 = vshrl.u32 %v988, 7
        %v990 = vsub.s32 1, %v989
        %v991 = vrot.slane %v982, %v990
        %v992 = vlaneseq
        %v993 = vshrl.u32 %v992, 7
        %v994 = vsub.s32 2, %v993
        %v995 = vrot.slane %v982, %v994
        %v996 = vlaneseq
        %v997 = vshrl.u32 %v996, 7
        %v998 = vsub.s32 3, %v997
        %v999 = vrot.slane %v982, %v998
        %v1000 = vlaneseq
        %v1001 = vshrl.u32 %v1000, 7
        %v1002 = vsub.s32 4, %v1001
        %v1003 = vrot.slane %v982, %v1002
        %v1004 = vlaneseq
        %v1005 = vshrl.u32 %v1004, 7
        %v1006 = vsub.s32 5, %v1005
        %v1007 = vrot.slane %v982, %v1006
        %v1008 = vlaneseq
        %v1009 = vshrl.u32 %v1008, 7
        %v1010 = vsub.s32 6, %v1009
        %v1011 = vrot.slane %v982, %v1010
        %v1012 = vlaneseq
        %v1013 = vshrl.u32 %v1012, 7
        %v1014 = vsub.s32 7, %v1013
        %v1015 = vrot.slane %v982, %v1014
        %v1024 = vmul.f32 %v978, %v987
        %v1025 = vmul.f32 %v977, %v991
        %v1026 = vmul.f32 %v976, %v995
        %v1027 = vmul.f32 %v975, %v999
        %v1028 = vmul.f32 %v974, %v1003
        %v1029 = vmul.f32 %v973, %v1007
        %v1030 = vmul.f32 %v972, %v1011
        %v1031 = vmul.f32 %v971, %v1015
        %v1032 = vadd.f32 %v885, %v1024
        %v1033 = vadd.f32 %v886, %v1025
        %v1034 = vadd.f32 %v887, %v1026
        %v1035 = vadd.f32 %v888, %v1027
        %v1036 = vadd.f32 %v889, %v1028
        %v1037 = vadd.f32 %v890, %v1029
        %v1038 = vadd.f32 %v891, %v1030
        %v1039 = vadd.f32 %v892, %v1031
        %s1040 = scalar_lea.vmem %s5, 16
        %v1041 = vld [vmem:[%s1040] sm:$0xff]
        %1043 = vset.pattern.permute.xlu0 0
        %1044 = vperm.xlu0 %1043, %v1041
        %v1045 = vpop.permute.xlu0 %1044
        %v1047 = vmul.f32 %v1045, %v698
        %v1048 = vmul.f32 %v1045, %v699
        %v1049 = vmul.f32 %v1045, %v700
        %v1050 = vmul.f32 %v1045, %v701
        %v1051 = vmul.f32 %v1045, %v702
        %v1052 = vmul.f32 %v1045, %v703
        %v1053 = vmul.f32 %v1045, %v704
        %v1054 = vmul.f32 %v1045, %v705
        %s1055 = scalar_lea.vmem %s5, 40
        %v1056 = vld [vmem:[%s1055] sm:$0xff]
        %1058 = vset.pattern.permute.xlu0 0
        %1059 = vperm.xlu0 %1058, %v1056
        %v1060 = vpop.permute.xlu0 %1059
        %v1062 = vmul.f32 %v1060, %v622
        %v1063 = vmul.f32 %v1060, %v623
        %v1064 = vmul.f32 %v1060, %v624
        %v1065 = vmul.f32 %v1060, %v625
        %v1066 = vmul.f32 %v1060, %v626
        %v1067 = vmul.f32 %v1060, %v627
        %v1068 = vmul.f32 %v1060, %v628
        %v1069 = vmul.f32 %v1060, %v629
        %v1070 = vadd.f32 %v1047, %v1062
        %v1071 = vadd.f32 %v1048, %v1063
        %v1072 = vadd.f32 %v1049, %v1064
        %v1073 = vadd.f32 %v1050, %v1065
        %v1074 = vadd.f32 %v1051, %v1066
        %v1075 = vadd.f32 %v1052, %v1067
        %v1076 = vadd.f32 %v1053, %v1068
        %v1077 = vadd.f32 %v1054, %v1069
        %s1078 = scalar_lea.vmem %s5, 64
        %v1079 = vld [vmem:[%s1078] sm:$0xff]
        %1081 = vset.pattern.permute.xlu0 0
        %1082 = vperm.xlu0 %1081, %v1079
        %v1083 = vpop.permute.xlu0 %1082
        %v1085 = vmul.f32 %v1083, %v747
        %v1086 = vmul.f32 %v1083, %v748
        %v1087 = vmul.f32 %v1083, %v749
        %v1088 = vmul.f32 %v1083, %v750
        %v1089 = vmul.f32 %v1083, %v751
        %v1090 = vmul.f32 %v1083, %v752
        %v1091 = vmul.f32 %v1083, %v753
        %v1092 = vmul.f32 %v1083, %v754
        %v1093 = vadd.f32 %v1070, %v1085
        %v1094 = vadd.f32 %v1071, %v1086
        %v1095 = vadd.f32 %v1072, %v1087
        %v1096 = vadd.f32 %v1073, %v1088
        %v1097 = vadd.f32 %v1074, %v1089
        %v1098 = vadd.f32 %v1075, %v1090
        %v1099 = vadd.f32 %v1076, %v1091
        %v1100 = vadd.f32 %v1077, %v1092
        %v1101 = vadd.f32 %v1032, %v1093
        %v1102 = vadd.f32 %v1033, %v1094
        %v1103 = vadd.f32 %v1034, %v1095
        %v1104 = vadd.f32 %v1035, %v1096
        %v1105 = vadd.f32 %v1036, %v1097
        %v1106 = vadd.f32 %v1037, %v1098
        %v1107 = vadd.f32 %v1038, %v1099
        %v1108 = vadd.f32 %v1039, %v1100
        %v1109 = vld [vmem:[%s6] sm:$0xff]
        %1111 = vset.pattern.permute.xlu0 0
        %1112 = vperm.xlu0 %1111, %v1109
        %v1113 = vpop.permute.xlu0 %1112
        %v1115 = vadd.f32 %v1101, %v1113
        %v1116 = vadd.f32 %v1102, %v1113
        %v1117 = vadd.f32 %v1103, %v1113
        %v1118 = vadd.f32 %v1104, %v1113
        %v1119 = vadd.f32 %v1105, %v1113
        %v1120 = vadd.f32 %v1106, %v1113
        %v1121 = vadd.f32 %v1107, %v1113
        %v1122 = vadd.f32 %v1108, %v1113
        %vm1123 = vcmp.ge.f32.partialorder %v1115, 0.0
        %vm1124 = vcmp.ge.f32.partialorder %v1116, 0.0
        %vm1125 = vcmp.ge.f32.partialorder %v1117, 0.0
        %vm1126 = vcmp.ge.f32.partialorder %v1118, 0.0
        %vm1127 = vcmp.ge.f32.partialorder %v1119, 0.0
        %vm1128 = vcmp.ge.f32.partialorder %v1120, 0.0
        %vm1129 = vcmp.ge.f32.partialorder %v1121, 0.0
        %vm1130 = vcmp.ge.f32.partialorder %v1122, 0.0
        %v1131 = vld [vmem:[%s7] sm:$0xff]
        %1133 = vset.pattern.permute.xlu0 0
        %1134 = vperm.xlu0 %1133, %v1131
        %v1135 = vpop.permute.xlu0 %1134
        %v1137 = vmul.f32 %v1135, %v1115
        %v1138 = vmul.f32 %v1135, %v1116
        %v1139 = vmul.f32 %v1135, %v1117
        %v1140 = vmul.f32 %v1135, %v1118
        %v1141 = vmul.f32 %v1135, %v1119
        %v1142 = vmul.f32 %v1135, %v1120
        %v1143 = vmul.f32 %v1135, %v1121
        %v1144 = vmul.f32 %v1135, %v1122
        %v1145 = vsel %vm1123, %v1115, %v1137
        %v1146 = vsel %vm1124, %v1116, %v1138
        %v1147 = vsel %vm1125, %v1117, %v1139
        %v1148 = vsel %vm1126, %v1118, %v1140
        %v1149 = vsel %vm1127, %v1119, %v1141
        %v1150 = vsel %vm1128, %v1120, %v1142
        %v1151 = vsel %vm1129, %v1121, %v1143
        %v1152 = vsel %vm1130, %v1122, %v1144
        %v1153 = vld [vmem:[%s8] sm:$0xf]
        %v1154 = vpack.c.bf16 %v1145, %v1145
        %v1155 = vpack.c.bf16 %v1146, %v1146
        %v1156 = vpack.c.bf16 %v1147, %v1147
        %v1157 = vpack.c.bf16 %v1148, %v1148
        %v1158 = vpack.c.bf16 %v1149, %v1149
        %v1159 = vpack.c.bf16 %v1150, %v1150
        %v1160 = vpack.c.bf16 %v1151, %v1151
        %v1161 = vpack.c.bf16 %v1152, %v1152
        %v1162 = vld [vmem:[%s9] sm:$0xff]
        %1164 = vset.pattern.permute.xlu0 0
        %1165 = vperm.xlu0 %1164, %v1162
        %v1166 = vpop.permute.xlu0 %1165
        %v1169 = vsel %vm407, %v1153, 0
        %v1172 = vsel %vm411, %v1154, 0
        %v1175 = vsel %vm411, %v1155, 0
        %v1178 = vsel %vm411, %v1156, 0
        %v1181 = vsel %vm411, %v1157, 0
        %v1184 = vsel %vm411, %v1158, 0
        %v1187 = vsel %vm411, %v1159, 0
        %v1190 = vsel %vm411, %v1160, 0
        %v1193 = vsel %vm411, %v1161, 0
        %1195 = vmatprep.subr.bf16.mxu0 %v1175
        %1196 = vmatpush1.bf16.msra.mxu0 %v1172
        %1197 = vmatprep.subr.bf16.mxu0 0
        %1198 = vmatpush1.bf16.msra.mxu0 0
        %1199 = vmatprep.subr.bf16.mxu0 0
        %1200 = vmatpush1.bf16.msra.mxu0 0
        %1201 = vmatprep.subr.bf16.mxu0 0
        %1202 = vmatpush1.bf16.msra.mxu0 0
        %1203 = vmatprep.subr.bf16.mxu0 0
        %1204 = vmatpush1.bf16.msra.mxu0 0
        %1205 = vmatprep.subr.bf16.mxu0 0
        %1206 = vmatpush1.bf16.msra.mxu0 0
        %1207 = vmatprep.subr.bf16.mxu0 0
        %1208 = vmatpush1.bf16.msra.mxu0 0
        %1209 = vmatprep.subr.bf16.mxu0 0
        %1210 = vmatpush1.bf16.msra.mxu0 0
        %1211 = vmatprep.subr.bf16.mxu0 0
        %1212 = vmatpush1.bf16.msra.mxu0 0
        %1213 = vmatprep.subr.bf16.mxu0 0
        %1214 = vmatpush1.bf16.msra.mxu0 0
        %1215 = vmatprep.subr.bf16.mxu0 0
        %1216 = vmatpush1.bf16.msra.mxu0 0
        %1217 = vmatprep.subr.bf16.mxu0 0
        %1218 = vmatpush1.bf16.msra.mxu0 0
        %1219 = vmatprep.subr.bf16.mxu0 0
        %1220 = vmatpush1.bf16.msra.mxu0 0
        %1221 = vmatprep.subr.bf16.mxu0 0
        %1222 = vmatpush1.bf16.msra.mxu0 0
        %1223 = vmatprep.subr.bf16.mxu0 0
        %1224 = vmatpush1.bf16.msra.mxu0 0
        %1225 = vmatprep.subr.bf16.mxu0 0
        %1226 = vmatpush1.bf16.msra.mxu0 0
        %1227 = vmatprep.mubr.bf16.mxu0 0
        %1228 = vmatmul.mubr.bf16.gmra.mrb[0].mxu0 %v1169
        %v1229 = vpop.f32.mrb[0].mxu0
        %v1230 = vadd.f32 %v1166, %v1229
        %v1231 = vpop.f32.mrb[0].mxu0
        %v1232 = vadd.f32 %v1166, %v1231
        %v1233 = vpop.f32.mrb[0].mxu0
        %v1234 = vpop.f32.mrb[0].mxu0
        %1235 = vdwg.mxu0
        %1236 = vmatprep.subr.bf16.mxu0 %v1181
        %1237 = vmatpush1.bf16.msra.mxu0 %v1178
        %1238 = vmatprep.subr.bf16.mxu0 0
        %1239 = vmatpush1.bf16.msra.mxu0 0
        %1240 = vmatprep.subr.bf16.mxu0 0
        %1241 = vmatpush1.bf16.msra.mxu0 0
        %1242 = vmatprep.subr.bf16.mxu0 0
        %1243 = vmatpush1.bf16.msra.mxu0 0
        %1244 = vmatprep.subr.bf16.mxu0 0
        %1245 = vmatpush1.bf16.msra.mxu0 0
        %1246 = vmatprep.subr.bf16.mxu0 0
        %1247 = vmatpush1.bf16.msra.mxu0 0
        %1248 = vmatprep.subr.bf16.mxu0 0
        %1249 = vmatpush1.bf16.msra.mxu0 0
        %1250 = vmatprep.subr.bf16.mxu0 0
        %1251 = vmatpush1.bf16.msra.mxu0 0
        %1252 = vmatprep.subr.bf16.mxu0 0
        %1253 = vmatpush1.bf16.msra.mxu0 0
        %1254 = vmatprep.subr.bf16.mxu0 0
        %1255 = vmatpush1.bf16.msra.mxu0 0
        %1256 = vmatprep.subr.bf16.mxu0 0
        %1257 = vmatpush1.bf16.msra.mxu0 0
        %1258 = vmatprep.subr.bf16.mxu0 0
        %1259 = vmatpush1.bf16.msra.mxu0 0
        %1260 = vmatprep.subr.bf16.mxu0 0
        %1261 = vmatpush1.bf16.msra.mxu0 0
        %1262 = vmatprep.subr.bf16.mxu0 0
        %1263 = vmatpush1.bf16.msra.mxu0 0
        %1264 = vmatprep.subr.bf16.mxu0 0
        %1265 = vmatpush1.bf16.msra.mxu0 0
        %1266 = vmatprep.subr.bf16.mxu0 0
        %1267 = vmatpush1.bf16.msra.mxu0 0
        %1268 = vmatprep.mubr.bf16.mxu0 0
        %1269 = vmatmul.mubr.bf16.gmra.mrb[0].mxu0 %v1169
        %v1270 = vpop.f32.mrb[0].mxu0
        %v1271 = vadd.f32 %v1166, %v1270
        %v1272 = vpop.f32.mrb[0].mxu0
        %v1273 = vadd.f32 %v1166, %v1272
        %v1274 = vpop.f32.mrb[0].mxu0
        %v1275 = vpop.f32.mrb[0].mxu0
        %1276 = vdwg.mxu0
        %1277 = vmatprep.subr.bf16.mxu0 %v1187
        %1278 = vmatpush1.bf16.msra.mxu0 %v1184
        %1279 = vmatprep.subr.bf16.mxu0 0
        %1280 = vmatpush1.bf16.msra.mxu0 0
        %1281 = vmatprep.subr.bf16.mxu0 0
        %1282 = vmatpush1.bf16.msra.mxu0 0
        %1283 = vmatprep.subr.bf16.mxu0 0
        %1284 = vmatpush1.bf16.msra.mxu0 0
        %1285 = vmatprep.subr.bf16.mxu0 0
        %1286 = vmatpush1.bf16.msra.mxu0 0
        %1287 = vmatprep.subr.bf16.mxu0 0
        %1288 = vmatpush1.bf16.msra.mxu0 0
        %1289 = vmatprep.subr.bf16.mxu0 0
        %1290 = vmatpush1.bf16.msra.mxu0 0
        %1291 = vmatprep.subr.bf16.mxu0 0
        %1292 = vmatpush1.bf16.msra.mxu0 0
        %1293 = vmatprep.subr.bf16.mxu0 0
        %1294 = vmatpush1.bf16.msra.mxu0 0
        %1295 = vmatprep.subr.bf16.mxu0 0
        %1296 = vmatpush1.bf16.msra.mxu0 0
        %1297 = vmatprep.subr.bf16.mxu0 0
        %1298 = vmatpush1.bf16.msra.mxu0 0
        %1299 = vmatprep.subr.bf16.mxu0 0
        %1300 = vmatpush1.bf16.msra.mxu0 0
        %1301 = vmatprep.subr.bf16.mxu0 0
        %1302 = vmatpush1.bf16.msra.mxu0 0
        %1303 = vmatprep.subr.bf16.mxu0 0
        %1304 = vmatpush1.bf16.msra.mxu0 0
        %1305 = vmatprep.subr.bf16.mxu0 0
        %1306 = vmatpush1.bf16.msra.mxu0 0
        %1307 = vmatprep.subr.bf16.mxu0 0
        %1308 = vmatpush1.bf16.msra.mxu0 0
        %1309 = vmatprep.mubr.bf16.mxu0 0
        %1310 = vmatmul.mubr.bf16.gmra.mrb[0].mxu0 %v1169
        %v1311 = vpop.f32.mrb[0].mxu0
        %v1312 = vadd.f32 %v1166, %v1311
        %v1313 = vpop.f32.mrb[0].mxu0
        %v1314 = vadd.f32 %v1166, %v1313
        %v1315 = vpop.f32.mrb[0].mxu0
        %v1316 = vpop.f32.mrb[0].mxu0
        %1317 = vdwg.mxu0
        %1318 = vmatprep.subr.bf16.mxu0 %v1193
        %1319 = vmatpush1.bf16.msra.mxu0 %v1190
        %1320 = vmatprep.subr.bf16.mxu0 0
        %1321 = vmatpush1.bf16.msra.mxu0 0
        %1322 = vmatprep.subr.bf16.mxu0 0
        %1323 = vmatpush1.bf16.msra.mxu0 0
        %1324 = vmatprep.subr.bf16.mxu0 0
        %1325 = vmatpush1.bf16.msra.mxu0 0
        %1326 = vmatprep.subr.bf16.mxu0 0
        %1327 = vmatpush1.bf16.msra.mxu0 0
        %1328 = vmatprep.subr.bf16.mxu0 0
        %1329 = vmatpush1.bf16.msra.mxu0 0
        %1330 = vmatprep.subr.bf16.mxu0 0
        %1331 = vmatpush1.bf16.msra.mxu0 0
        %1332 = vmatprep.subr.bf16.mxu0 0
        %1333 = vmatpush1.bf16.msra.mxu0 0
        %1334 = vmatprep.subr.bf16.mxu0 0
        %1335 = vmatpush1.bf16.msra.mxu0 0
        %1336 = vmatprep.subr.bf16.mxu0 0
        %1337 = vmatpush1.bf16.msra.mxu0 0
        %1338 = vmatprep.subr.bf16.mxu0 0
        %1339 = vmatpush1.bf16.msra.mxu0 0
        %1340 = vmatprep.subr.bf16.mxu0 0
        %1341 = vmatpush1.bf16.msra.mxu0 0
        %1342 = vmatprep.subr.bf16.mxu0 0
        %1343 = vmatpush1.bf16.msra.mxu0 0
        %1344 = vmatprep.subr.bf16.mxu0 0
        %1345 = vmatpush1.bf16.msra.mxu0 0
        %1346 = vmatprep.subr.bf16.mxu0 0
        %1347 = vmatpush1.bf16.msra.mxu0 0
        %1348 = vmatprep.subr.bf16.mxu0 0
        %1349 = vmatpush1.bf16.msra.mxu0 0
        %1350 = vmatprep.mubr.bf16.mxu0 0
        %1351 = vmatmul.mubr.bf16.gmra.mrb[0].mxu0 %v1169
        %v1352 = vpop.f32.mrb[0].mxu0
        %v1353 = vadd.f32 %v1166, %v1352
        %v1354 = vpop.f32.mrb[0].mxu0
        %v1355 = vadd.f32 %v1166, %v1354
        %v1356 = vpop.f32.mrb[0].mxu0
        %v1357 = vpop.f32.mrb[0].mxu0
        %1358 = vdwg.mxu0
        %v1359 = vadd.f32 %v1230, %v377
        %v1360 = vadd.f32 %v1232, %v378
        %v1361 = vadd.f32 %v1271, %v379
        %v1362 = vadd.f32 %v1273, %v380
        %v1363 = vadd.f32 %v1312, %v381
        %v1364 = vadd.f32 %v1314, %v382
        %v1365 = vadd.f32 %v1353, %v383
        %v1366 = vadd.f32 %v1355, %v384
        %s1367 = scalar_lea.vmem %s2, 4
        %v1368 = vld [vmem:[%s1367] sm:$0xf]
        %v1369 = vpack.c.bf16 %v1359, %v1359
        %v1370 = vpack.c.bf16 %v1360, %v1360
        %v1371 = vpack.c.bf16 %v1361, %v1361
        %v1372 = vpack.c.bf16 %v1362, %v1362
        %v1373 = vpack.c.bf16 %v1363, %v1363
        %v1374 = vpack.c.bf16 %v1364, %v1364
        %v1375 = vpack.c.bf16 %v1365, %v1365
        %v1376 = vpack.c.bf16 %v1366, %v1366
        %s1377 = scalar_lea.vmem %s3, 8
        %v1378 = vld [vmem:[%s1377] sm:$0xff]
        %1380 = vset.pattern.permute.xlu0 0
        %1381 = vperm.xlu0 %1380, %v1378
        %v1382 = vpop.permute.xlu0 %1381
        %v1385 = vsel %vm407, %v1368, 0
        %v1388 = vsel %vm411, %v1369, 0
        %v1391 = vsel %vm411, %v1370, 0
        %v1394 = vsel %vm411, %v1371, 0
        %v1397 = vsel %vm411, %v1372, 0
        %v1400 = vsel %vm411, %v1373, 0
        %v1403 = vsel %vm411, %v1374, 0
        %v1406 = vsel %vm411, %v1375, 0
        %v1409 = vsel %vm411, %v1376, 0
        %1411 = vmatprep.subr.bf16.mxu0 %v1391
        %1412 = vmatpush1.bf16.msra.mxu0 %v1388
        %1413 = vmatprep.subr.bf16.mxu0 0
        %1414 = vmatpush1.bf16.msra.mxu0 0
        %1415 = vmatprep.subr.bf16.mxu0 0
        %1416 = vmatpush1.bf16.msra.mxu0 0
        %1417 = vmatprep.subr.bf16.mxu0 0
        %1418 = vmatpush1.bf16.msra.mxu0 0
        %1419 = vmatprep.subr.bf16.mxu0 0
        %1420 = vmatpush1.bf16.msra.mxu0 0
        %1421 = vmatprep.subr.bf16.mxu0 0
        %1422 = vmatpush1.bf16.msra.mxu0 0
        %1423 = vmatprep.subr.bf16.mxu0 0
        %1424 = vmatpush1.bf16.msra.mxu0 0
        %1425 = vmatprep.subr.bf16.mxu0 0
        %1426 = vmatpush1.bf16.msra.mxu0 0
        %1427 = vmatprep.subr.bf16.mxu0 0
        %1428 = vmatpush1.bf16.msra.mxu0 0
        %1429 = vmatprep.subr.bf16.mxu0 0
        %1430 = vmatpush1.bf16.msra.mxu0 0
        %1431 = vmatprep.subr.bf16.mxu0 0
        %1432 = vmatpush1.bf16.msra.mxu0 0
        %1433 = vmatprep.subr.bf16.mxu0 0
        %1434 = vmatpush1.bf16.msra.mxu0 0
        %1435 = vmatprep.subr.bf16.mxu0 0
        %1436 = vmatpush1.bf16.msra.mxu0 0
        %1437 = vmatprep.subr.bf16.mxu0 0
        %1438 = vmatpush1.bf16.msra.mxu0 0
        %1439 = vmatprep.subr.bf16.mxu0 0
        %1440 = vmatpush1.bf16.msra.mxu0 0
        %1441 = vmatprep.subr.bf16.mxu0 0
        %1442 = vmatpush1.bf16.msra.mxu0 0
        %1443 = vmatprep.mubr.bf16.mxu0 0
        %1444 = vmatmul.mubr.bf16.gmra.mrb[0].mxu0 %v1385
        %v1445 = vpop.f32.mrb[0].mxu0
        %v1446 = vadd.f32 %v1382, %v1445
        %v1447 = vpop.f32.mrb[0].mxu0
        %v1448 = vadd.f32 %v1382, %v1447
        %v1449 = vpop.f32.mrb[0].mxu0
        %v1450 = vpop.f32.mrb[0].mxu0
        %1451 = vdwg.mxu0
        %1452 = vmatprep.subr.bf16.mxu0 %v1397
        %1453 = vmatpush1.bf16.msra.mxu0 %v1394
        %1454 = vmatprep.subr.bf16.mxu0 0
        %1455 = vmatpush1.bf16.msra.mxu0 0
        %1456 = vmatprep.subr.bf16.mxu0 0
        %1457 = vmatpush1.bf16.msra.mxu0 0
        %1458 = vmatprep.subr.bf16.mxu0 0
        %1459 = vmatpush1.bf16.msra.mxu0 0
        %1460 = vmatprep.subr.bf16.mxu0 0
        %1461 = vmatpush1.bf16.msra.mxu0 0
        %1462 = vmatprep.subr.bf16.mxu0 0
        %1463 = vmatpush1.bf16.msra.mxu0 0
        %1464 = vmatprep.subr.bf16.mxu0 0
        %1465 = vmatpush1.bf16.msra.mxu0 0
        %1466 = vmatprep.subr.bf16.mxu0 0
        %1467 = vmatpush1.bf16.msra.mxu0 0
        %1468 = vmatprep.subr.bf16.mxu0 0
        %1469 = vmatpush1.bf16.msra.mxu0 0
        %1470 = vmatprep.subr.bf16.mxu0 0
        %1471 = vmatpush1.bf16.msra.mxu0 0
        %1472 = vmatprep.subr.bf16.mxu0 0
        %1473 = vmatpush1.bf16.msra.mxu0 0
        %1474 = vmatprep.subr.bf16.mxu0 0
        %1475 = vmatpush1.bf16.msra.mxu0 0
        %1476 = vmatprep.subr.bf16.mxu0 0
        %1477 = vmatpush1.bf16.msra.mxu0 0
        %1478 = vmatprep.subr.bf16.mxu0 0
        %1479 = vmatpush1.bf16.msra.mxu0 0
        %1480 = vmatprep.subr.bf16.mxu0 0
        %1481 = vmatpush1.bf16.msra.mxu0 0
        %1482 = vmatprep.subr.bf16.mxu0 0
        %1483 = vmatpush1.bf16.msra.mxu0 0
        %1484 = vmatprep.mubr.bf16.mxu0 0
        %1485 = vmatmul.mubr.bf16.gmra.mrb[0].mxu0 %v1385
        %v1486 = vpop.f32.mrb[0].mxu0
        %v1487 = vadd.f32 %v1382, %v1486
        %v1488 = vpop.f32.mrb[0].mxu0
        %v1489 = vadd.f32 %v1382, %v1488
        %v1490 = vpop.f32.mrb[0].mxu0
        %v1491 = vpop.f32.mrb[0].mxu0
        %1492 = vdwg.mxu0
        %1493 = vmatprep.subr.bf16.mxu0 %v1403
        %1494 = vmatpush1.bf16.msra.mxu0 %v1400
        %1495 = vmatprep.subr.bf16.mxu0 0
        %1496 = vmatpush1.bf16.msra.mxu0 0
        %1497 = vmatprep.subr.bf16.mxu0 0
        %1498 = vmatpush1.bf16.msra.mxu0 0
        %1499 = vmatprep.subr.bf16.mxu0 0
        %1500 = vmatpush1.bf16.msra.mxu0 0
        %1501 = vmatprep.subr.bf16.mxu0 0
        %1502 = vmatpush1.bf16.msra.mxu0 0
        %1503 = vmatprep.subr.bf16.mxu0 0
        %1504 = vmatpush1.bf16.msra.mxu0 0
        %1505 = vmatprep.subr.bf16.mxu0 0
        %1506 = vmatpush1.bf16.msra.mxu0 0
        %1507 = vmatprep.subr.bf16.mxu0 0
        %1508 = vmatpush1.bf16.msra.mxu0 0
        %1509 = vmatprep.subr.bf16.mxu0 0
        %1510 = vmatpush1.bf16.msra.mxu0 0
        %1511 = vmatprep.subr.bf16.mxu0 0
        %1512 = vmatpush1.bf16.msra.mxu0 0
        %1513 = vmatprep.subr.bf16.mxu0 0
        %1514 = vmatpush1.bf16.msra.mxu0 0
        %1515 = vmatprep.subr.bf16.mxu0 0
        %1516 = vmatpush1.bf16.msra.mxu0 0
        %1517 = vmatprep.subr.bf16.mxu0 0
        %1518 = vmatpush1.bf16.msra.mxu0 0
        %1519 = vmatprep.subr.bf16.mxu0 0
        %1520 = vmatpush1.bf16.msra.mxu0 0
        %1521 = vmatprep.subr.bf16.mxu0 0
        %1522 = vmatpush1.bf16.msra.mxu0 0
        %1523 = vmatprep.subr.bf16.mxu0 0
        %1524 = vmatpush1.bf16.msra.mxu0 0
        %1525 = vmatprep.mubr.bf16.mxu0 0
        %1526 = vmatmul.mubr.bf16.gmra.mrb[0].mxu0 %v1385
        %v1527 = vpop.f32.mrb[0].mxu0
        %v1528 = vadd.f32 %v1382, %v1527
        %v1529 = vpop.f32.mrb[0].mxu0
        %v1530 = vadd.f32 %v1382, %v1529
        %v1531 = vpop.f32.mrb[0].mxu0
        %v1532 = vpop.f32.mrb[0].mxu0
        %1533 = vdwg.mxu0
        %1534 = vmatprep.subr.bf16.mxu0 %v1409
        %1535 = vmatpush1.bf16.msra.mxu0 %v1406
        %1536 = vmatprep.subr.bf16.mxu0 0
        %1537 = vmatpush1.bf16.msra.mxu0 0
        %1538 = vmatprep.subr.bf16.mxu0 0
        %1539 = vmatpush1.bf16.msra.mxu0 0
        %1540 = vmatprep.subr.bf16.mxu0 0
        %1541 = vmatpush1.bf16.msra.mxu0 0
        %1542 = vmatprep.subr.bf16.mxu0 0
        %1543 = vmatpush1.bf16.msra.mxu0 0
        %1544 = vmatprep.subr.bf16.mxu0 0
        %1545 = vmatpush1.bf16.msra.mxu0 0
        %1546 = vmatprep.subr.bf16.mxu0 0
        %1547 = vmatpush1.bf16.msra.mxu0 0
        %1548 = vmatprep.subr.bf16.mxu0 0
        %1549 = vmatpush1.bf16.msra.mxu0 0
        %1550 = vmatprep.subr.bf16.mxu0 0
        %1551 = vmatpush1.bf16.msra.mxu0 0
        %1552 = vmatprep.subr.bf16.mxu0 0
        %1553 = vmatpush1.bf16.msra.mxu0 0
        %1554 = vmatprep.subr.bf16.mxu0 0
        %1555 = vmatpush1.bf16.msra.mxu0 0
        %1556 = vmatprep.subr.bf16.mxu0 0
        %1557 = vmatpush1.bf16.msra.mxu0 0
        %1558 = vmatprep.subr.bf16.mxu0 0
        %1559 = vmatpush1.bf16.msra.mxu0 0
        %1560 = vmatprep.subr.bf16.mxu0 0
        %1561 = vmatpush1.bf16.msra.mxu0 0
        %1562 = vmatprep.subr.bf16.mxu0 0
        %1563 = vmatpush1.bf16.msra.mxu0 0
        %1564 = vmatprep.subr.bf16.mxu0 0
        %1565 = vmatpush1.bf16.msra.mxu0 0
        %1566 = vmatprep.mubr.bf16.mxu0 0
        %1567 = vmatmul.mubr.bf16.gmra.mrb[0].mxu0 %v1385
        %v1568 = vpop.f32.mrb[0].mxu0
        %v1569 = vadd.f32 %v1382, %v1568
        %v1570 = vpop.f32.mrb[0].mxu0
        %v1571 = vadd.f32 %v1382, %v1570
        %v1572 = vpop.f32.mrb[0].mxu0
        %v1573 = vpop.f32.mrb[0].mxu0
        %1574 = vdwg.mxu0
        %vm1575 = vcmp.ge.f32.partialorder %v1446, 0.0
        %vm1576 = vcmp.ge.f32.partialorder %v1448, 0.0
        %vm1577 = vcmp.ge.f32.partialorder %v1487, 0.0
        %vm1578 = vcmp.ge.f32.partialorder %v1489, 0.0
        %vm1579 = vcmp.ge.f32.partialorder %v1528, 0.0
        %vm1580 = vcmp.ge.f32.partialorder %v1530, 0.0
        %vm1581 = vcmp.ge.f32.partialorder %v1569, 0.0
        %vm1582 = vcmp.ge.f32.partialorder %v1571, 0.0
        %s1583 = scalar_lea.vmem %s4, 8
        %v1584 = vld [vmem:[%s1583] sm:$0xff]
        %1586 = vset.pattern.permute.xlu0 0
        %1587 = vperm.xlu0 %1586, %v1584
        %v1588 = vpop.permute.xlu0 %1587
        %v1590 = vmul.f32 %v1588, %v1446
        %v1591 = vmul.f32 %v1588, %v1448
        %v1592 = vmul.f32 %v1588, %v1487
        %v1593 = vmul.f32 %v1588, %v1489
        %v1594 = vmul.f32 %v1588, %v1528
        %v1595 = vmul.f32 %v1588, %v1530
        %v1596 = vmul.f32 %v1588, %v1569
        %v1597 = vmul.f32 %v1588, %v1571
        %v1598 = vsel %vm1575, %v1446, %v1590
        %v1599 = vsel %vm1576, %v1448, %v1591
        %v1600 = vsel %vm1577, %v1487, %v1592
        %v1601 = vsel %vm1578, %v1489, %v1593
        %v1602 = vsel %vm1579, %v1528, %v1594
        %v1603 = vsel %vm1580, %v1530, %v1595
        %v1604 = vsel %vm1581, %v1569, %v1596
        %v1605 = vsel %vm1582, %v1571, %v1597
        %1606 = vrot.lane.b32.xlu0 %v1598, 64
        %v1607 = vpop.permute.xlu0 %1606
        %1608 = vrot.lane.b32.xlu0 %v1599, 64
        %v1609 = vpop.permute.xlu0 %1608
        %1610 = vrot.lane.b32.xlu0 %v1600, 64
        %v1611 = vpop.permute.xlu0 %1610
        %1612 = vrot.lane.b32.xlu0 %v1601, 64
        %v1613 = vpop.permute.xlu0 %1612
        %1614 = vrot.lane.b32.xlu0 %v1602, 64
        %v1615 = vpop.permute.xlu0 %1614
        %1616 = vrot.lane.b32.xlu0 %v1603, 64
        %v1617 = vpop.permute.xlu0 %1616
        %1618 = vrot.lane.b32.xlu0 %v1604, 64
        %v1619 = vpop.permute.xlu0 %1618
        %1620 = vrot.lane.b32.xlu0 %v1605, 64
        %v1621 = vpop.permute.xlu0 %1620
        %v1622 = vsel %vm648, %v1619, %v1621
        %v1623 = vsel %vm648, %v1617, %v1619
        %v1624 = vsel %vm648, %v1615, %v1617
        %v1625 = vsel %vm648, %v1613, %v1615
        %v1626 = vsel %vm648, %v1611, %v1613
        %v1627 = vsel %vm648, %v1609, %v1611
        %v1628 = vsel %vm648, %v1607, %v1609
        %v1629 = vsel %vm648, %v1621, %v1607
        %v1630 = vmul.f32 %v661, %v1629
        %v1631 = vmul.f32 %v665, %v1628
        %v1632 = vmul.f32 %v669, %v1627
        %v1633 = vmul.f32 %v673, %v1626
        %v1634 = vmul.f32 %v677, %v1625
        %v1635 = vmul.f32 %v681, %v1624
        %v1636 = vmul.f32 %v685, %v1623
        %v1637 = vmul.f32 %v689, %v1622
        %v1638 = vmul.f32 %v710, %v1628
        %v1639 = vmul.f32 %v714, %v1627
        %v1640 = vmul.f32 %v718, %v1626
        %v1641 = vmul.f32 %v722, %v1625
        %v1642 = vmul.f32 %v726, %v1624
        %v1643 = vmul.f32 %v730, %v1623
        %v1644 = vmul.f32 %v734, %v1622
        %v1645 = vmul.f32 %v738, %v1629
        %s1646 = scalar_lea.vmem %s5, 72
        %v1647 = vld [vmem:[%s1646] sm:$0xff]
        %1649 = vset.pattern.permute.xlu0 0
        %1650 = vperm.xlu0 %1649, %v1647
        %v1651 = vpop.permute.xlu0 %1650
        %v1653 = vmul.f32 %v1651, %v1630
        %v1654 = vmul.f32 %v1651, %v1631
        %v1655 = vmul.f32 %v1651, %v1632
        %v1656 = vmul.f32 %v1651, %v1633
        %v1657 = vmul.f32 %v1651, %v1634
        %v1658 = vmul.f32 %v1651, %v1635
        %v1659 = vmul.f32 %v1651, %v1636
        %v1660 = vmul.f32 %v1651, %v1637
        %s1661 = scalar_lea.vmem %s5, 96
        %v1662 = vld [vmem:[%s1661] sm:$0xff]
        %1664 = vset.pattern.permute.xlu0 0
        %1665 = vperm.xlu0 %1664, %v1662
        %v1666 = vpop.permute.xlu0 %1665
        %v1668 = vmul.f32 %v1666, %v1598
        %v1669 = vmul.f32 %v1666, %v1599
        %v1670 = vmul.f32 %v1666, %v1600
        %v1671 = vmul.f32 %v1666, %v1601
        %v1672 = vmul.f32 %v1666, %v1602
        %v1673 = vmul.f32 %v1666, %v1603
        %v1674 = vmul.f32 %v1666, %v1604
        %v1675 = vmul.f32 %v1666, %v1605
        %v1676 = vadd.f32 %v1653, %v1668
        %v1677 = vadd.f32 %v1654, %v1669
        %v1678 = vadd.f32 %v1655, %v1670
        %v1679 = vadd.f32 %v1656, %v1671
        %v1680 = vadd.f32 %v1657, %v1672
        %v1681 = vadd.f32 %v1658, %v1673
        %v1682 = vadd.f32 %v1659, %v1674
        %v1683 = vadd.f32 %v1660, %v1675
        %s1684 = scalar_lea.vmem %s5, 120
        %v1685 = vld [vmem:[%s1684] sm:$0xff]
        %1687 = vset.pattern.permute.xlu0 0
        %1688 = vperm.xlu0 %1687, %v1685
        %v1689 = vpop.permute.xlu0 %1688
        %v1691 = vmul.f32 %v1689, %v1638
        %v1692 = vmul.f32 %v1689, %v1639
        %v1693 = vmul.f32 %v1689, %v1640
        %v1694 = vmul.f32 %v1689, %v1641
        %v1695 = vmul.f32 %v1689, %v1642
        %v1696 = vmul.f32 %v1689, %v1643
        %v1697 = vmul.f32 %v1689, %v1644
        %v1698 = vmul.f32 %v1689, %v1645
        %v1699 = vadd.f32 %v1676, %v1691
        %v1700 = vadd.f32 %v1677, %v1692
        %v1701 = vadd.f32 %v1678, %v1693
        %v1702 = vadd.f32 %v1679, %v1694
        %v1703 = vadd.f32 %v1680, %v1695
        %v1704 = vadd.f32 %v1681, %v1696
        %v1705 = vadd.f32 %v1682, %v1697
        %v1706 = vadd.f32 %v1683, %v1698
        %1707 = vrot.lane.b32.xlu0 %v1699, 4
        %v1708 = vpop.permute.xlu0 %1707
        %1709 = vrot.lane.b32.xlu0 %v1700, 4
        %v1710 = vpop.permute.xlu0 %1709
        %1711 = vrot.lane.b32.xlu0 %v1701, 4
        %v1712 = vpop.permute.xlu0 %1711
        %1713 = vrot.lane.b32.xlu0 %v1702, 4
        %v1714 = vpop.permute.xlu0 %1713
        %1715 = vrot.lane.b32.xlu0 %v1703, 4
        %v1716 = vpop.permute.xlu0 %1715
        %1717 = vrot.lane.b32.xlu0 %v1704, 4
        %v1718 = vpop.permute.xlu0 %1717
        %1719 = vrot.lane.b32.xlu0 %v1705, 4
        %v1720 = vpop.permute.xlu0 %1719
        %1721 = vrot.lane.b32.xlu0 %v1706, 4
        %v1722 = vpop.permute.xlu0 %1721
        %vm1723 = vcmp.lt.s32.totalorder %v647, 4
        %v1724 = vsel %vm1723, %v1720, %v1722
        %v1725 = vsel %vm1723, %v1718, %v1720
        %v1726 = vsel %vm1723, %v1716, %v1718
        %v1727 = vsel %vm1723, %v1714, %v1716
        %v1728 = vsel %vm1723, %v1712, %v1714
        %v1729 = vsel %vm1723, %v1710, %v1712
        %v1730 = vsel %vm1723, %v1708, %v1710
        %v1731 = vsel %vm1723, %v1722, %v1708
        %s1732 = scalar_lea.vmem %s1, 4
        %v1733 = vld [vmem:[%s1732] ss:$8 sm:$0xf]
        %v1734 = vld [vmem:[%s1732] ss:$8 sm:$0xf0]
        %v1735 = vor.u32 %v1733, %v1734
        %v1737 = vlaneseq
        %v1738 = vshrl.u32 %v1737, 7
        %v1739 = vsub.s32 0, %v1738
        %v1740 = vrot.slane %v1735, %v1739
        %v1741 = vlaneseq
        %v1742 = vshrl.u32 %v1741, 7
        %v1743 = vsub.s32 1, %v1742
        %v1744 = vrot.slane %v1735, %v1743
        %v1745 = vlaneseq
        %v1746 = vshrl.u32 %v1745, 7
        %v1747 = vsub.s32 2, %v1746
        %v1748 = vrot.slane %v1735, %v1747
        %v1749 = vlaneseq
        %v1750 = vshrl.u32 %v1749, 7
        %v1751 = vsub.s32 3, %v1750
        %v1752 = vrot.slane %v1735, %v1751
        %v1753 = vlaneseq
        %v1754 = vshrl.u32 %v1753, 7
        %v1755 = vsub.s32 4, %v1754
        %v1756 = vrot.slane %v1735, %v1755
        %v1757 = vlaneseq
        %v1758 = vshrl.u32 %v1757, 7
        %v1759 = vsub.s32 5, %v1758
        %v1760 = vrot.slane %v1735, %v1759
        %v1761 = vlaneseq
        %v1762 = vshrl.u32 %v1761, 7
        %v1763 = vsub.s32 6, %v1762
        %v1764 = vrot.slane %v1735, %v1763
        %v1765 = vlaneseq
        %v1766 = vshrl.u32 %v1765, 7
        %v1767 = vsub.s32 7, %v1766
        %v1768 = vrot.slane %v1735, %v1767
        %v1777 = vmul.f32 %v1731, %v1740
        %v1778 = vmul.f32 %v1730, %v1744
        %v1779 = vmul.f32 %v1729, %v1748
        %v1780 = vmul.f32 %v1728, %v1752
        %v1781 = vmul.f32 %v1727, %v1756
        %v1782 = vmul.f32 %v1726, %v1760
        %v1783 = vmul.f32 %v1725, %v1764
        %v1784 = vmul.f32 %v1724, %v1768
        %s1785 = scalar_lea.vmem %s5, 80
        %v1786 = vld [vmem:[%s1785] sm:$0xff]
        %1788 = vset.pattern.permute.xlu0 0
        %1789 = vperm.xlu0 %1788, %v1786
        %v1790 = vpop.permute.xlu0 %1789
        %v1792 = vmul.f32 %v1790, %v1630
        %v1793 = vmul.f32 %v1790, %v1631
        %v1794 = vmul.f32 %v1790, %v1632
        %v1795 = vmul.f32 %v1790, %v1633
        %v1796 = vmul.f32 %v1790, %v1634
        %v1797 = vmul.f32 %v1790, %v1635
        %v1798 = vmul.f32 %v1790, %v1636
        %v1799 = vmul.f32 %v1790, %v1637
        %s1800 = scalar_lea.vmem %s5, 104
        %v1801 = vld [vmem:[%s1800] sm:$0xff]
        %1803 = vset.pattern.permute.xlu0 0
        %1804 = vperm.xlu0 %1803, %v1801
        %v1805 = vpop.permute.xlu0 %1804
        %v1807 = vmul.f32 %v1805, %v1598
        %v1808 = vmul.f32 %v1805, %v1599
        %v1809 = vmul.f32 %v1805, %v1600
        %v1810 = vmul.f32 %v1805, %v1601
        %v1811 = vmul.f32 %v1805, %v1602
        %v1812 = vmul.f32 %v1805, %v1603
        %v1813 = vmul.f32 %v1805, %v1604
        %v1814 = vmul.f32 %v1805, %v1605
        %v1815 = vadd.f32 %v1792, %v1807
        %v1816 = vadd.f32 %v1793, %v1808
        %v1817 = vadd.f32 %v1794, %v1809
        %v1818 = vadd.f32 %v1795, %v1810
        %v1819 = vadd.f32 %v1796, %v1811
        %v1820 = vadd.f32 %v1797, %v1812
        %v1821 = vadd.f32 %v1798, %v1813
        %v1822 = vadd.f32 %v1799, %v1814
        %s1823 = scalar_lea.vmem %s5, 128
        %v1824 = vld [vmem:[%s1823] sm:$0xff]
        %1826 = vset.pattern.permute.xlu0 0
        %1827 = vperm.xlu0 %1826, %v1824
        %v1828 = vpop.permute.xlu0 %1827
        %v1830 = vmul.f32 %v1828, %v1638
        %v1831 = vmul.f32 %v1828, %v1639
        %v1832 = vmul.f32 %v1828, %v1640
        %v1833 = vmul.f32 %v1828, %v1641
        %v1834 = vmul.f32 %v1828, %v1642
        %v1835 = vmul.f32 %v1828, %v1643
        %v1836 = vmul.f32 %v1828, %v1644
        %v1837 = vmul.f32 %v1828, %v1645
        %v1838 = vadd.f32 %v1815, %v1830
        %v1839 = vadd.f32 %v1816, %v1831
        %v1840 = vadd.f32 %v1817, %v1832
        %v1841 = vadd.f32 %v1818, %v1833
        %v1842 = vadd.f32 %v1819, %v1834
        %v1843 = vadd.f32 %v1820, %v1835
        %v1844 = vadd.f32 %v1821, %v1836
        %v1845 = vadd.f32 %v1822, %v1837
        %1846 = vrot.lane.b32.xlu0 %v1838, 2
        %v1847 = vpop.permute.xlu0 %1846
        %1848 = vrot.lane.b32.xlu0 %v1839, 2
        %v1849 = vpop.permute.xlu0 %1848
        %1850 = vrot.lane.b32.xlu0 %v1840, 2
        %v1851 = vpop.permute.xlu0 %1850
        %1852 = vrot.lane.b32.xlu0 %v1841, 2
        %v1853 = vpop.permute.xlu0 %1852
        %1854 = vrot.lane.b32.xlu0 %v1842, 2
        %v1855 = vpop.permute.xlu0 %1854
        %1856 = vrot.lane.b32.xlu0 %v1843, 2
        %v1857 = vpop.permute.xlu0 %1856
        %1858 = vrot.lane.b32.xlu0 %v1844, 2
        %v1859 = vpop.permute.xlu0 %1858
        %1860 = vrot.lane.b32.xlu0 %v1845, 2
        %v1861 = vpop.permute.xlu0 %1860
        %v1862 = vsel %vm831, %v1859, %v1861
        %v1863 = vsel %vm831, %v1857, %v1859
        %v1864 = vsel %vm831, %v1855, %v1857
        %v1865 = vsel %vm831, %v1853, %v1855
        %v1866 = vsel %vm831, %v1851, %v1853
        %v1867 = vsel %vm831, %v1849, %v1851
        %v1868 = vsel %vm831, %v1847, %v1849
        %v1869 = vsel %vm831, %v1861, %v1847
        %v1870 = vmul.f32 %v1869, %v848
        %v1871 = vmul.f32 %v1868, %v852
        %v1872 = vmul.f32 %v1867, %v856
        %v1873 = vmul.f32 %v1866, %v860
        %v1874 = vmul.f32 %v1865, %v864
        %v1875 = vmul.f32 %v1864, %v868
        %v1876 = vmul.f32 %v1863, %v872
        %v1877 = vmul.f32 %v1862, %v876
        %v1878 = vadd.f32 %v1777, %v1870
        %v1879 = vadd.f32 %v1778, %v1871
        %v1880 = vadd.f32 %v1779, %v1872
        %v1881 = vadd.f32 %v1780, %v1873
        %v1882 = vadd.f32 %v1781, %v1874
        %v1883 = vadd.f32 %v1782, %v1875
        %v1884 = vadd.f32 %v1783, %v1876
        %v1885 = vadd.f32 %v1784, %v1877
        %s1886 = scalar_lea.vmem %s5, 88
        %v1887 = vld [vmem:[%s1886] sm:$0xff]
        %1889 = vset.pattern.permute.xlu0 0
        %1890 = vperm.xlu0 %1889, %v1887
        %v1891 = vpop.permute.xlu0 %1890
        %v1893 = vmul.f32 %v1891, %v1630
        %v1894 = vmul.f32 %v1891, %v1631
        %v1895 = vmul.f32 %v1891, %v1632
        %v1896 = vmul.f32 %v1891, %v1633
        %v1897 = vmul.f32 %v1891, %v1634
        %v1898 = vmul.f32 %v1891, %v1635
        %v1899 = vmul.f32 %v1891, %v1636
        %v1900 = vmul.f32 %v1891, %v1637
        %s1901 = scalar_lea.vmem %s5, 112
        %v1902 = vld [vmem:[%s1901] sm:$0xff]
        %1904 = vset.pattern.permute.xlu0 0
        %1905 = vperm.xlu0 %1904, %v1902
        %v1906 = vpop.permute.xlu0 %1905
        %v1908 = vmul.f32 %v1906, %v1598
        %v1909 = vmul.f32 %v1906, %v1599
        %v1910 = vmul.f32 %v1906, %v1600
        %v1911 = vmul.f32 %v1906, %v1601
        %v1912 = vmul.f32 %v1906, %v1602
        %v1913 = vmul.f32 %v1906, %v1603
        %v1914 = vmul.f32 %v1906, %v1604
        %v1915 = vmul.f32 %v1906, %v1605
        %v1916 = vadd.f32 %v1893, %v1908
        %v1917 = vadd.f32 %v1894, %v1909
        %v1918 = vadd.f32 %v1895, %v1910
        %v1919 = vadd.f32 %v1896, %v1911
        %v1920 = vadd.f32 %v1897, %v1912
        %v1921 = vadd.f32 %v1898, %v1913
        %v1922 = vadd.f32 %v1899, %v1914
        %v1923 = vadd.f32 %v1900, %v1915
        %s1924 = scalar_lea.vmem %s5, 136
        %v1925 = vld [vmem:[%s1924] sm:$0xff]
        %1927 = vset.pattern.permute.xlu0 0
        %1928 = vperm.xlu0 %1927, %v1925
        %v1929 = vpop.permute.xlu0 %1928
        %v1931 = vmul.f32 %v1929, %v1638
        %v1932 = vmul.f32 %v1929, %v1639
        %v1933 = vmul.f32 %v1929, %v1640
        %v1934 = vmul.f32 %v1929, %v1641
        %v1935 = vmul.f32 %v1929, %v1642
        %v1936 = vmul.f32 %v1929, %v1643
        %v1937 = vmul.f32 %v1929, %v1644
        %v1938 = vmul.f32 %v1929, %v1645
        %v1939 = vadd.f32 %v1916, %v1931
        %v1940 = vadd.f32 %v1917, %v1932
        %v1941 = vadd.f32 %v1918, %v1933
        %v1942 = vadd.f32 %v1919, %v1934
        %v1943 = vadd.f32 %v1920, %v1935
        %v1944 = vadd.f32 %v1921, %v1936
        %v1945 = vadd.f32 %v1922, %v1937
        %v1946 = vadd.f32 %v1923, %v1938
        %v1947 = vadd.f32 %v1878, %v1939
        %v1948 = vadd.f32 %v1879, %v1940
        %v1949 = vadd.f32 %v1880, %v1941
        %v1950 = vadd.f32 %v1881, %v1942
        %v1951 = vadd.f32 %v1882, %v1943
        %v1952 = vadd.f32 %v1883, %v1944
        %v1953 = vadd.f32 %v1884, %v1945
        %v1954 = vadd.f32 %v1885, %v1946
        %s1955 = scalar_lea.vmem %s6, 8
        %v1956 = vld [vmem:[%s1955] sm:$0xff]
        %1958 = vset.pattern.permute.xlu0 0
        %1959 = vperm.xlu0 %1958, %v1956
        %v1960 = vpop.permute.xlu0 %1959
        %v1962 = vadd.f32 %v1947, %v1960
        %v1963 = vadd.f32 %v1948, %v1960
        %v1964 = vadd.f32 %v1949, %v1960
        %v1965 = vadd.f32 %v1950, %v1960
        %v1966 = vadd.f32 %v1951, %v1960
        %v1967 = vadd.f32 %v1952, %v1960
        %v1968 = vadd.f32 %v1953, %v1960
        %v1969 = vadd.f32 %v1954, %v1960
        %vm1970 = vcmp.ge.f32.partialorder %v1962, 0.0
        %vm1971 = vcmp.ge.f32.partialorder %v1963, 0.0
        %vm1972 = vcmp.ge.f32.partialorder %v1964, 0.0
        %vm1973 = vcmp.ge.f32.partialorder %v1965, 0.0
        %vm1974 = vcmp.ge.f32.partialorder %v1966, 0.0
        %vm1975 = vcmp.ge.f32.partialorder %v1967, 0.0
        %vm1976 = vcmp.ge.f32.partialorder %v1968, 0.0
        %vm1977 = vcmp.ge.f32.partialorder %v1969, 0.0
        %s1978 = scalar_lea.vmem %s7, 8
        %v1979 = vld [vmem:[%s1978] sm:$0xff]
        %1981 = vset.pattern.permute.xlu0 0
        %1982 = vperm.xlu0 %1981, %v1979
        %v1983 = vpop.permute.xlu0 %1982
        %v1985 = vmul.f32 %v1983, %v1962
        %v1986 = vmul.f32 %v1983, %v1963
        %v1987 = vmul.f32 %v1983, %v1964
        %v1988 = vmul.f32 %v1983, %v1965
        %v1989 = vmul.f32 %v1983, %v1966
        %v1990 = vmul.f32 %v1983, %v1967
        %v1991 = vmul.f32 %v1983, %v1968
        %v1992 = vmul.f32 %v1983, %v1969
        %v1993 = vsel %vm1970, %v1962, %v1985
        %v1994 = vsel %vm1971, %v1963, %v1986
        %v1995 = vsel %vm1972, %v1964, %v1987
        %v1996 = vsel %vm1973, %v1965, %v1988
        %v1997 = vsel %vm1974, %v1966, %v1989
        %v1998 = vsel %vm1975, %v1967, %v1990
        %v1999 = vsel %vm1976, %v1968, %v1991
        %v2000 = vsel %vm1977, %v1969, %v1992
        %s2001 = scalar_lea.vmem %s8, 4
        %v2002 = vld [vmem:[%s2001] sm:$0xf]
        %v2003 = vpack.c.bf16 %v1993, %v1993
        %v2004 = vpack.c.bf16 %v1994, %v1994
        %v2005 = vpack.c.bf16 %v1995, %v1995
        %v2006 = vpack.c.bf16 %v1996, %v1996
        %v2007 = vpack.c.bf16 %v1997, %v1997
        %v2008 = vpack.c.bf16 %v1998, %v1998
        %v2009 = vpack.c.bf16 %v1999, %v1999
        %v2010 = vpack.c.bf16 %v2000, %v2000
        %s2011 = scalar_lea.vmem %s9, 8
        %v2012 = vld [vmem:[%s2011] sm:$0xff]
        %2014 = vset.pattern.permute.xlu0 0
        %2015 = vperm.xlu0 %2014, %v2012
        %v2016 = vpop.permute.xlu0 %2015
        %v2019 = vsel %vm407, %v2002, 0
        %v2022 = vsel %vm411, %v2003, 0
        %v2025 = vsel %vm411, %v2004, 0
        %v2028 = vsel %vm411, %v2005, 0
        %v2031 = vsel %vm411, %v2006, 0
        %v2034 = vsel %vm411, %v2007, 0
        %v2037 = vsel %vm411, %v2008, 0
        %v2040 = vsel %vm411, %v2009, 0
        %v2043 = vsel %vm411, %v2010, 0
        %2045 = vmatprep.subr.bf16.mxu0 %v2025
        %2046 = vmatpush1.bf16.msra.mxu0 %v2022
        %2047 = vmatprep.subr.bf16.mxu0 0
        %2048 = vmatpush1.bf16.msra.mxu0 0
        %2049 = vmatprep.subr.bf16.mxu0 0
        %2050 = vmatpush1.bf16.msra.mxu0 0
        %2051 = vmatprep.subr.bf16.mxu0 0
        %2052 = vmatpush1.bf16.msra.mxu0 0
        %2053 = vmatprep.subr.bf16.mxu0 0
        %2054 = vmatpush1.bf16.msra.mxu0 0
        %2055 = vmatprep.subr.bf16.mxu0 0
        %2056 = vmatpush1.bf16.msra.mxu0 0
        %2057 = vmatprep.subr.bf16.mxu0 0
        %2058 = vmatpush1.bf16.msra.mxu0 0
        %2059 = vmatprep.subr.bf16.mxu0 0
        %2060 = vmatpush1.bf16.msra.mxu0 0
        %2061 = vmatprep.subr.bf16.mxu0 0
        %2062 = vmatpush1.bf16.msra.mxu0 0
        %2063 = vmatprep.subr.bf16.mxu0 0
        %2064 = vmatpush1.bf16.msra.mxu0 0
        %2065 = vmatprep.subr.bf16.mxu0 0
        %2066 = vmatpush1.bf16.msra.mxu0 0
        %2067 = vmatprep.subr.bf16.mxu0 0
        %2068 = vmatpush1.bf16.msra.mxu0 0
        %2069 = vmatprep.subr.bf16.mxu0 0
        %2070 = vmatpush1.bf16.msra.mxu0 0
        %2071 = vmatprep.subr.bf16.mxu0 0
        %2072 = vmatpush1.bf16.msra.mxu0 0
        %2073 = vmatprep.subr.bf16.mxu0 0
        %2074 = vmatpush1.bf16.msra.mxu0 0
        %2075 = vmatprep.subr.bf16.mxu0 0
        %2076 = vmatpush1.bf16.msra.mxu0 0
        %2077 = vmatprep.mubr.bf16.mxu0 0
        %2078 = vmatmul.mubr.bf16.gmra.mrb[0].mxu0 %v2019
        %v2079 = vpop.f32.mrb[0].mxu0
        %v2080 = vadd.f32 %v2016, %v2079
        %v2081 = vpop.f32.mrb[0].mxu0
        %v2082 = vadd.f32 %v2016, %v2081
        %v2083 = vpop.f32.mrb[0].mxu0
        %v2084 = vpop.f32.mrb[0].mxu0
        %2085 = vdwg.mxu0
        %2086 = vmatprep.subr.bf16.mxu0 %v2031
        %2087 = vmatpush1.bf16.msra.mxu0 %v2028
        %2088 = vmatprep.subr.bf16.mxu0 0
        %2089 = vmatpush1.bf16.msra.mxu0 0
        %2090 = vmatprep.subr.bf16.mxu0 0
        %2091 = vmatpush1.bf16.msra.mxu0 0
        %2092 = vmatprep.subr.bf16.mxu0 0
        %2093 = vmatpush1.bf16.msra.mxu0 0
        %2094 = vmatprep.subr.bf16.mxu0 0
        %2095 = vmatpush1.bf16.msra.mxu0 0
        %2096 = vmatprep.subr.bf16.mxu0 0
        %2097 = vmatpush1.bf16.msra.mxu0 0
        %2098 = vmatprep.subr.bf16.mxu0 0
        %2099 = vmatpush1.bf16.msra.mxu0 0
        %2100 = vmatprep.subr.bf16.mxu0 0
        %2101 = vmatpush1.bf16.msra.mxu0 0
        %2102 = vmatprep.subr.bf16.mxu0 0
        %2103 = vmatpush1.bf16.msra.mxu0 0
        %2104 = vmatprep.subr.bf16.mxu0 0
        %2105 = vmatpush1.bf16.msra.mxu0 0
        %2106 = vmatprep.subr.bf16.mxu0 0
        %2107 = vmatpush1.bf16.msra.mxu0 0
        %2108 = vmatprep.subr.bf16.mxu0 0
        %2109 = vmatpush1.bf16.msra.mxu0 0
        %2110 = vmatprep.subr.bf16.mxu0 0
        %2111 = vmatpush1.bf16.msra.mxu0 0
        %2112 = vmatprep.subr.bf16.mxu0 0
        %2113 = vmatpush1.bf16.msra.mxu0 0
        %2114 = vmatprep.subr.bf16.mxu0 0
        %2115 = vmatpush1.bf16.msra.mxu0 0
        %2116 = vmatprep.subr.bf16.mxu0 0
        %2117 = vmatpush1.bf16.msra.mxu0 0
        %2118 = vmatprep.mubr.bf16.mxu0 0
        %2119 = vmatmul.mubr.bf16.gmra.mrb[0].mxu0 %v2019
        %v2120 = vpop.f32.mrb[0].mxu0
        %v2121 = vadd.f32 %v2016, %v2120
        %v2122 = vpop.f32.mrb[0].mxu0
        %v2123 = vadd.f32 %v2016, %v2122
        %v2124 = vpop.f32.mrb[0].mxu0
        %v2125 = vpop.f32.mrb[0].mxu0
        %2126 = vdwg.mxu0
        %2127 = vmatprep.subr.bf16.mxu0 %v2037
        %2128 = vmatpush1.bf16.msra.mxu0 %v2034
        %2129 = vmatprep.subr.bf16.mxu0 0
        %2130 = vmatpush1.bf16.msra.mxu0 0
        %2131 = vmatprep.subr.bf16.mxu0 0
        %2132 = vmatpush1.bf16.msra.mxu0 0
        %2133 = vmatprep.subr.bf16.mxu0 0
        %2134 = vmatpush1.bf16.msra.mxu0 0
        %2135 = vmatprep.subr.bf16.mxu0 0
        %2136 = vmatpush1.bf16.msra.mxu0 0
        %2137 = vmatprep.subr.bf16.mxu0 0
        %2138 = vmatpush1.bf16.msra.mxu0 0
        %2139 = vmatprep.subr.bf16.mxu0 0
        %2140 = vmatpush1.bf16.msra.mxu0 0
        %2141 = vmatprep.subr.bf16.mxu0 0
        %2142 = vmatpush1.bf16.msra.mxu0 0
        %2143 = vmatprep.subr.bf16.mxu0 0
        %2144 = vmatpush1.bf16.msra.mxu0 0
        %2145 = vmatprep.subr.bf16.mxu0 0
        %2146 = vmatpush1.bf16.msra.mxu0 0
        %2147 = vmatprep.subr.bf16.mxu0 0
        %2148 = vmatpush1.bf16.msra.mxu0 0
        %2149 = vmatprep.subr.bf16.mxu0 0
        %2150 = vmatpush1.bf16.msra.mxu0 0
        %2151 = vmatprep.subr.bf16.mxu0 0
        %2152 = vmatpush1.bf16.msra.mxu0 0
        %2153 = vmatprep.subr.bf16.mxu0 0
        %2154 = vmatpush1.bf16.msra.mxu0 0
        %2155 = vmatprep.subr.bf16.mxu0 0
        %2156 = vmatpush1.bf16.msra.mxu0 0
        %2157 = vmatprep.subr.bf16.mxu0 0
        %2158 = vmatpush1.bf16.msra.mxu0 0
        %2159 = vmatprep.mubr.bf16.mxu0 0
        %2160 = vmatmul.mubr.bf16.gmra.mrb[0].mxu0 %v2019
        %v2161 = vpop.f32.mrb[0].mxu0
        %v2162 = vadd.f32 %v2016, %v2161
        %v2163 = vpop.f32.mrb[0].mxu0
        %v2164 = vadd.f32 %v2016, %v2163
        %v2165 = vpop.f32.mrb[0].mxu0
        %v2166 = vpop.f32.mrb[0].mxu0
        %2167 = vdwg.mxu0
        %2168 = vmatprep.subr.bf16.mxu0 %v2043
        %2169 = vmatpush1.bf16.msra.mxu0 %v2040
        %2170 = vmatprep.subr.bf16.mxu0 0
        %2171 = vmatpush1.bf16.msra.mxu0 0
        %2172 = vmatprep.subr.bf16.mxu0 0
        %2173 = vmatpush1.bf16.msra.mxu0 0
        %2174 = vmatprep.subr.bf16.mxu0 0
        %2175 = vmatpush1.bf16.msra.mxu0 0
        %2176 = vmatprep.subr.bf16.mxu0 0
        %2177 = vmatpush1.bf16.msra.mxu0 0
        %2178 = vmatprep.subr.bf16.mxu0 0
        %2179 = vmatpush1.bf16.msra.mxu0 0
        %2180 = vmatprep.subr.bf16.mxu0 0
        %2181 = vmatpush1.bf16.msra.mxu0 0
        %2182 = vmatprep.subr.bf16.mxu0 0
        %2183 = vmatpush1.bf16.msra.mxu0 0
        %2184 = vmatprep.subr.bf16.mxu0 0
        %2185 = vmatpush1.bf16.msra.mxu0 0
        %2186 = vmatprep.subr.bf16.mxu0 0
        %2187 = vmatpush1.bf16.msra.mxu0 0
        %2188 = vmatprep.subr.bf16.mxu0 0
        %2189 = vmatpush1.bf16.msra.mxu0 0
        %2190 = vmatprep.subr.bf16.mxu0 0
        %2191 = vmatpush1.bf16.msra.mxu0 0
        %2192 = vmatprep.subr.bf16.mxu0 0
        %2193 = vmatpush1.bf16.msra.mxu0 0
        %2194 = vmatprep.subr.bf16.mxu0 0
        %2195 = vmatpush1.bf16.msra.mxu0 0
        %2196 = vmatprep.subr.bf16.mxu0 0
        %2197 = vmatpush1.bf16.msra.mxu0 0
        %2198 = vmatprep.subr.bf16.mxu0 0
        %2199 = vmatpush1.bf16.msra.mxu0 0
        %2200 = vmatprep.mubr.bf16.mxu0 0
        %2201 = vmatmul.mubr.bf16.gmra.mrb[0].mxu0 %v2019
        %v2202 = vpop.f32.mrb[0].mxu0
        %v2203 = vadd.f32 %v2016, %v2202
        %v2204 = vpop.f32.mrb[0].mxu0
        %v2205 = vadd.f32 %v2016, %v2204
        %v2206 = vpop.f32.mrb[0].mxu0
        %v2207 = vpop.f32.mrb[0].mxu0
        %2208 = vdwg.mxu0
        %v2209 = vadd.f32 %v2080, %v1359
        %v2210 = vadd.f32 %v2082, %v1360
        %v2211 = vadd.f32 %v2121, %v1361
        %v2212 = vadd.f32 %v2123, %v1362
        %v2213 = vadd.f32 %v2162, %v1363
        %v2214 = vadd.f32 %v2164, %v1364
        %v2215 = vadd.f32 %v2203, %v1365
        %v2216 = vadd.f32 %v2205, %v1366
        %s2217 = scalar_lea.vmem %s2, 8
        %v2218 = vld [vmem:[%s2217] sm:$0xf]
        %v2219 = vpack.c.bf16 %v2209, %v2209
        %v2220 = vpack.c.bf16 %v2210, %v2210
        %v2221 = vpack.c.bf16 %v2211, %v2211
        %v2222 = vpack.c.bf16 %v2212, %v2212
        %v2223 = vpack.c.bf16 %v2213, %v2213
        %v2224 = vpack.c.bf16 %v2214, %v2214
        %v2225 = vpack.c.bf16 %v2215, %v2215
        %v2226 = vpack.c.bf16 %v2216, %v2216
        %s2227 = scalar_lea.vmem %s3, 16
        %v2228 = vld [vmem:[%s2227] sm:$0xff]
        %2230 = vset.pattern.permute.xlu0 0
        %2231 = vperm.xlu0 %2230, %v2228
        %v2232 = vpop.permute.xlu0 %2231
        %v2235 = vsel %vm407, %v2218, 0
        %v2238 = vsel %vm411, %v2219, 0
        %v2241 = vsel %vm411, %v2220, 0
        %v2244 = vsel %vm411, %v2221, 0
        %v2247 = vsel %vm411, %v2222, 0
        %v2250 = vsel %vm411, %v2223, 0
        %v2253 = vsel %vm411, %v2224, 0
        %v2256 = vsel %vm411, %v2225, 0
        %v2259 = vsel %vm411, %v2226, 0
        %2261 = vmatprep.subr.bf16.mxu0 %v2241
        %2262 = vmatpush1.bf16.msra.mxu0 %v2238
        %2263 = vmatprep.subr.bf16.mxu0 0
        %2264 = vmatpush1.bf16.msra.mxu0 0
        %2265 = vmatprep.subr.bf16.mxu0 0
        %2266 = vmatpush1.bf16.msra.mxu0 0
        %2267 = vmatprep.subr.bf16.mxu0 0
        %2268 = vmatpush1.bf16.msra.mxu0 0
        %2269 = vmatprep.subr.bf16.mxu0 0
        %2270 = vmatpush1.bf16.msra.mxu0 0
        %2271 = vmatprep.subr.bf16.mxu0 0
        %2272 = vmatpush1.bf16.msra.mxu0 0
        %2273 = vmatprep.subr.bf16.mxu0 0
        %2274 = vmatpush1.bf16.msra.mxu0 0
        %2275 = vmatprep.subr.bf16.mxu0 0
        %2276 = vmatpush1.bf16.msra.mxu0 0
        %2277 = vmatprep.subr.bf16.mxu0 0
        %2278 = vmatpush1.bf16.msra.mxu0 0
        %2279 = vmatprep.subr.bf16.mxu0 0
        %2280 = vmatpush1.bf16.msra.mxu0 0
        %2281 = vmatprep.subr.bf16.mxu0 0
        %2282 = vmatpush1.bf16.msra.mxu0 0
        %2283 = vmatprep.subr.bf16.mxu0 0
        %2284 = vmatpush1.bf16.msra.mxu0 0
        %2285 = vmatprep.subr.bf16.mxu0 0
        %2286 = vmatpush1.bf16.msra.mxu0 0
        %2287 = vmatprep.subr.bf16.mxu0 0
        %2288 = vmatpush1.bf16.msra.mxu0 0
        %2289 = vmatprep.subr.bf16.mxu0 0
        %2290 = vmatpush1.bf16.msra.mxu0 0
        %2291 = vmatprep.subr.bf16.mxu0 0
        %2292 = vmatpush1.bf16.msra.mxu0 0
        %2293 = vmatprep.mubr.bf16.mxu0 0
        %2294 = vmatmul.mubr.bf16.gmra.mrb[0].mxu0 %v2235
        %v2295 = vpop.f32.mrb[0].mxu0
        %v2296 = vadd.f32 %v2232, %v2295
        %v2297 = vpop.f32.mrb[0].mxu0
        %v2298 = vadd.f32 %v2232, %v2297
        %v2299 = vpop.f32.mrb[0].mxu0
        %v2300 = vpop.f32.mrb[0].mxu0
        %2301 = vdwg.mxu0
        %2302 = vmatprep.subr.bf16.mxu0 %v2247
        %2303 = vmatpush1.bf16.msra.mxu0 %v2244
        %2304 = vmatprep.subr.bf16.mxu0 0
        %2305 = vmatpush1.bf16.msra.mxu0 0
        %2306 = vmatprep.subr.bf16.mxu0 0
        %2307 = vmatpush1.bf16.msra.mxu0 0
        %2308 = vmatprep.subr.bf16.mxu0 0
        %2309 = vmatpush1.bf16.msra.mxu0 0
        %2310 = vmatprep.subr.bf16.mxu0 0
        %2311 = vmatpush1.bf16.msra.mxu0 0
        %2312 = vmatprep.subr.bf16.mxu0 0
        %2313 = vmatpush1.bf16.msra.mxu0 0
        %2314 = vmatprep.subr.bf16.mxu0 0
        %2315 = vmatpush1.bf16.msra.mxu0 0
        %2316 = vmatprep.subr.bf16.mxu0 0
        %2317 = vmatpush1.bf16.msra.mxu0 0
        %2318 = vmatprep.subr.bf16.mxu0 0
        %2319 = vmatpush1.bf16.msra.mxu0 0
        %2320 = vmatprep.subr.bf16.mxu0 0
        %2321 = vmatpush1.bf16.msra.mxu0 0
        %2322 = vmatprep.subr.bf16.mxu0 0
        %2323 = vmatpush1.bf16.msra.mxu0 0
        %2324 = vmatprep.subr.bf16.mxu0 0
        %2325 = vmatpush1.bf16.msra.mxu0 0
        %2326 = vmatprep.subr.bf16.mxu0 0
        %2327 = vmatpush1.bf16.msra.mxu0 0
        %2328 = vmatprep.subr.bf16.mxu0 0
        %2329 = vmatpush1.bf16.msra.mxu0 0
        %2330 = vmatprep.subr.bf16.mxu0 0
        %2331 = vmatpush1.bf16.msra.mxu0 0
        %2332 = vmatprep.subr.bf16.mxu0 0
        %2333 = vmatpush1.bf16.msra.mxu0 0
        %2334 = vmatprep.mubr.bf16.mxu0 0
        %2335 = vmatmul.mubr.bf16.gmra.mrb[0].mxu0 %v2235
        %v2336 = vpop.f32.mrb[0].mxu0
        %v2337 = vadd.f32 %v2232, %v2336
        %v2338 = vpop.f32.mrb[0].mxu0
        %v2339 = vadd.f32 %v2232, %v2338
        %v2340 = vpop.f32.mrb[0].mxu0
        %v2341 = vpop.f32.mrb[0].mxu0
        %2342 = vdwg.mxu0
        %2343 = vmatprep.subr.bf16.mxu0 %v2253
        %2344 = vmatpush1.bf16.msra.mxu0 %v2250
        %2345 = vmatprep.subr.bf16.mxu0 0
        %2346 = vmatpush1.bf16.msra.mxu0 0
        %2347 = vmatprep.subr.bf16.mxu0 0
        %2348 = vmatpush1.bf16.msra.mxu0 0
        %2349 = vmatprep.subr.bf16.mxu0 0
        %2350 = vmatpush1.bf16.msra.mxu0 0
        %2351 = vmatprep.subr.bf16.mxu0 0
        %2352 = vmatpush1.bf16.msra.mxu0 0
        %2353 = vmatprep.subr.bf16.mxu0 0
        %2354 = vmatpush1.bf16.msra.mxu0 0
        %2355 = vmatprep.subr.bf16.mxu0 0
        %2356 = vmatpush1.bf16.msra.mxu0 0
        %2357 = vmatprep.subr.bf16.mxu0 0
        %2358 = vmatpush1.bf16.msra.mxu0 0
        %2359 = vmatprep.subr.bf16.mxu0 0
        %2360 = vmatpush1.bf16.msra.mxu0 0
        %2361 = vmatprep.subr.bf16.mxu0 0
        %2362 = vmatpush1.bf16.msra.mxu0 0
        %2363 = vmatprep.subr.bf16.mxu0 0
        %2364 = vmatpush1.bf16.msra.mxu0 0
        %2365 = vmatprep.subr.bf16.mxu0 0
        %2366 = vmatpush1.bf16.msra.mxu0 0
        %2367 = vmatprep.subr.bf16.mxu0 0
        %2368 = vmatpush1.bf16.msra.mxu0 0
        %2369 = vmatprep.subr.bf16.mxu0 0
        %2370 = vmatpush1.bf16.msra.mxu0 0
        %2371 = vmatprep.subr.bf16.mxu0 0
        %2372 = vmatpush1.bf16.msra.mxu0 0
        %2373 = vmatprep.subr.bf16.mxu0 0
        %2374 = vmatpush1.bf16.msra.mxu0 0
        %2375 = vmatprep.mubr.bf16.mxu0 0
        %2376 = vmatmul.mubr.bf16.gmra.mrb[0].mxu0 %v2235
        %v2377 = vpop.f32.mrb[0].mxu0
        %v2378 = vadd.f32 %v2232, %v2377
        %v2379 = vpop.f32.mrb[0].mxu0
        %v2380 = vadd.f32 %v2232, %v2379
        %v2381 = vpop.f32.mrb[0].mxu0
        %v2382 = vpop.f32.mrb[0].mxu0
        %2383 = vdwg.mxu0
        %2384 = vmatprep.subr.bf16.mxu0 %v2259
        %2385 = vmatpush1.bf16.msra.mxu0 %v2256
        %2386 = vmatprep.subr.bf16.mxu0 0
        %2387 = vmatpush1.bf16.msra.mxu0 0
        %2388 = vmatprep.subr.bf16.mxu0 0
        %2389 = vmatpush1.bf16.msra.mxu0 0
        %2390 = vmatprep.subr.bf16.mxu0 0
        %2391 = vmatpush1.bf16.msra.mxu0 0
        %2392 = vmatprep.subr.bf16.mxu0 0
        %2393 = vmatpush1.bf16.msra.mxu0 0
        %2394 = vmatprep.subr.bf16.mxu0 0
        %2395 = vmatpush1.bf16.msra.mxu0 0
        %2396 = vmatprep.subr.bf16.mxu0 0
        %2397 = vmatpush1.bf16.msra.mxu0 0
        %2398 = vmatprep.subr.bf16.mxu0 0
        %2399 = vmatpush1.bf16.msra.mxu0 0
        %2400 = vmatprep.subr.bf16.mxu0 0
        %2401 = vmatpush1.bf16.msra.mxu0 0
        %2402 = vmatprep.subr.bf16.mxu0 0
        %2403 = vmatpush1.bf16.msra.mxu0 0
        %2404 = vmatprep.subr.bf16.mxu0 0
        %2405 = vmatpush1.bf16.msra.mxu0 0
        %2406 = vmatprep.subr.bf16.mxu0 0
        %2407 = vmatpush1.bf16.msra.mxu0 0
        %2408 = vmatprep.subr.bf16.mxu0 0
        %2409 = vmatpush1.bf16.msra.mxu0 0
        %2410 = vmatprep.subr.bf16.mxu0 0
        %2411 = vmatpush1.bf16.msra.mxu0 0
        %2412 = vmatprep.subr.bf16.mxu0 0
        %2413 = vmatpush1.bf16.msra.mxu0 0
        %2414 = vmatprep.subr.bf16.mxu0 0
        %2415 = vmatpush1.bf16.msra.mxu0 0
        %2416 = vmatprep.mubr.bf16.mxu0 0
        %2417 = vmatmul.mubr.bf16.gmra.mrb[0].mxu0 %v2235
        %v2418 = vpop.f32.mrb[0].mxu0
        %v2419 = vadd.f32 %v2232, %v2418
        %v2420 = vpop.f32.mrb[0].mxu0
        %v2421 = vadd.f32 %v2232, %v2420
        %v2422 = vpop.f32.mrb[0].mxu0
        %v2423 = vpop.f32.mrb[0].mxu0
        %2424 = vdwg.mxu0
        %vm2425 = vcmp.ge.f32.partialorder %v2296, 0.0
        %vm2426 = vcmp.ge.f32.partialorder %v2298, 0.0
        %vm2427 = vcmp.ge.f32.partialorder %v2337, 0.0
        %vm2428 = vcmp.ge.f32.partialorder %v2339, 0.0
        %vm2429 = vcmp.ge.f32.partialorder %v2378, 0.0
        %vm2430 = vcmp.ge.f32.partialorder %v2380, 0.0
        %vm2431 = vcmp.ge.f32.partialorder %v2419, 0.0
        %vm2432 = vcmp.ge.f32.partialorder %v2421, 0.0
        %s2433 = scalar_lea.vmem %s4, 16
        %v2434 = vld [vmem:[%s2433] sm:$0xff]
        %2436 = vset.pattern.permute.xlu0 0
        %2437 = vperm.xlu0 %2436, %v2434
        %v2438 = vpop.permute.xlu0 %2437
        %v2440 = vmul.f32 %v2438, %v2296
        %v2441 = vmul.f32 %v2438, %v2298
        %v2442 = vmul.f32 %v2438, %v2337
        %v2443 = vmul.f32 %v2438, %v2339
        %v2444 = vmul.f32 %v2438, %v2378
        %v2445 = vmul.f32 %v2438, %v2380
        %v2446 = vmul.f32 %v2438, %v2419
        %v2447 = vmul.f32 %v2438, %v2421
        %v2448 = vsel %vm2425, %v2296, %v2440
        %v2449 = vsel %vm2426, %v2298, %v2441
        %v2450 = vsel %vm2427, %v2337, %v2442
        %v2451 = vsel %vm2428, %v2339, %v2443
        %v2452 = vsel %vm2429, %v2378, %v2444
        %v2453 = vsel %vm2430, %v2380, %v2445
        %v2454 = vsel %vm2431, %v2419, %v2446
        %v2455 = vsel %vm2432, %v2421, %v2447
        %2456 = vrot.lane.b32.xlu0 %v2448, 64
        %v2457 = vpop.permute.xlu0 %2456
        %2458 = vrot.lane.b32.xlu0 %v2449, 64
        %v2459 = vpop.permute.xlu0 %2458
        %2460 = vrot.lane.b32.xlu0 %v2450, 64
        %v2461 = vpop.permute.xlu0 %2460
        %2462 = vrot.lane.b32.xlu0 %v2451, 64
        %v2463 = vpop.permute.xlu0 %2462
        %2464 = vrot.lane.b32.xlu0 %v2452, 64
        %v2465 = vpop.permute.xlu0 %2464
        %2466 = vrot.lane.b32.xlu0 %v2453, 64
        %v2467 = vpop.permute.xlu0 %2466
        %2468 = vrot.lane.b32.xlu0 %v2454, 64
        %v2469 = vpop.permute.xlu0 %2468
        %2470 = vrot.lane.b32.xlu0 %v2455, 64
        %v2471 = vpop.permute.xlu0 %2470
        %v2472 = vsel %vm648, %v2469, %v2471
        %v2473 = vsel %vm648, %v2467, %v2469
        %v2474 = vsel %vm648, %v2465, %v2467
        %v2475 = vsel %vm648, %v2463, %v2465
        %v2476 = vsel %vm648, %v2461, %v2463
        %v2477 = vsel %vm648, %v2459, %v2461
        %v2478 = vsel %vm648, %v2457, %v2459
        %v2479 = vsel %vm648, %v2471, %v2457
        %v2480 = vmul.f32 %v661, %v2479
        %v2481 = vmul.f32 %v665, %v2478
        %v2482 = vmul.f32 %v669, %v2477
        %v2483 = vmul.f32 %v673, %v2476
        %v2484 = vmul.f32 %v677, %v2475
        %v2485 = vmul.f32 %v681, %v2474
        %v2486 = vmul.f32 %v685, %v2473
        %v2487 = vmul.f32 %v689, %v2472
        %v2488 = vmul.f32 %v710, %v2478
        %v2489 = vmul.f32 %v714, %v2477
        %v2490 = vmul.f32 %v718, %v2476
        %v2491 = vmul.f32 %v722, %v2475
        %v2492 = vmul.f32 %v726, %v2474
        %v2493 = vmul.f32 %v730, %v2473
        %v2494 = vmul.f32 %v734, %v2472
        %v2495 = vmul.f32 %v738, %v2479
        %s2496 = scalar_lea.vmem %s5, 144
        %v2497 = vld [vmem:[%s2496] sm:$0xff]
        %2499 = vset.pattern.permute.xlu0 0
        %2500 = vperm.xlu0 %2499, %v2497
        %v2501 = vpop.permute.xlu0 %2500
        %v2503 = vmul.f32 %v2501, %v2480
        %v2504 = vmul.f32 %v2501, %v2481
        %v2505 = vmul.f32 %v2501, %v2482
        %v2506 = vmul.f32 %v2501, %v2483
        %v2507 = vmul.f32 %v2501, %v2484
        %v2508 = vmul.f32 %v2501, %v2485
        %v2509 = vmul.f32 %v2501, %v2486
        %v2510 = vmul.f32 %v2501, %v2487
        %s2511 = scalar_lea.vmem %s5, 168
        %v2512 = vld [vmem:[%s2511] sm:$0xff]
        %2514 = vset.pattern.permute.xlu0 0
        %2515 = vperm.xlu0 %2514, %v2512
        %v2516 = vpop.permute.xlu0 %2515
        %v2518 = vmul.f32 %v2516, %v2448
        %v2519 = vmul.f32 %v2516, %v2449
        %v2520 = vmul.f32 %v2516, %v2450
        %v2521 = vmul.f32 %v2516, %v2451
        %v2522 = vmul.f32 %v2516, %v2452
        %v2523 = vmul.f32 %v2516, %v2453
        %v2524 = vmul.f32 %v2516, %v2454
        %v2525 = vmul.f32 %v2516, %v2455
        %v2526 = vadd.f32 %v2503, %v2518
        %v2527 = vadd.f32 %v2504, %v2519
        %v2528 = vadd.f32 %v2505, %v2520
        %v2529 = vadd.f32 %v2506, %v2521
        %v2530 = vadd.f32 %v2507, %v2522
        %v2531 = vadd.f32 %v2508, %v2523
        %v2532 = vadd.f32 %v2509, %v2524
        %v2533 = vadd.f32 %v2510, %v2525
        %s2534 = scalar_lea.vmem %s5, 192
        %v2535 = vld [vmem:[%s2534] sm:$0xff]
        %2537 = vset.pattern.permute.xlu0 0
        %2538 = vperm.xlu0 %2537, %v2535
        %v2539 = vpop.permute.xlu0 %2538
        %v2541 = vmul.f32 %v2539, %v2488
        %v2542 = vmul.f32 %v2539, %v2489
        %v2543 = vmul.f32 %v2539, %v2490
        %v2544 = vmul.f32 %v2539, %v2491
        %v2545 = vmul.f32 %v2539, %v2492
        %v2546 = vmul.f32 %v2539, %v2493
        %v2547 = vmul.f32 %v2539, %v2494
        %v2548 = vmul.f32 %v2539, %v2495
        %v2549 = vadd.f32 %v2526, %v2541
        %v2550 = vadd.f32 %v2527, %v2542
        %v2551 = vadd.f32 %v2528, %v2543
        %v2552 = vadd.f32 %v2529, %v2544
        %v2553 = vadd.f32 %v2530, %v2545
        %v2554 = vadd.f32 %v2531, %v2546
        %v2555 = vadd.f32 %v2532, %v2547
        %v2556 = vadd.f32 %v2533, %v2548
        %2557 = vrot.lane.b32.xlu0 %v2549, 8
        %v2558 = vpop.permute.xlu0 %2557
        %2559 = vrot.lane.b32.xlu0 %v2550, 8
        %v2560 = vpop.permute.xlu0 %2559
        %2561 = vrot.lane.b32.xlu0 %v2551, 8
        %v2562 = vpop.permute.xlu0 %2561
        %2563 = vrot.lane.b32.xlu0 %v2552, 8
        %v2564 = vpop.permute.xlu0 %2563
        %2565 = vrot.lane.b32.xlu0 %v2553, 8
        %v2566 = vpop.permute.xlu0 %2565
        %2567 = vrot.lane.b32.xlu0 %v2554, 8
        %v2568 = vpop.permute.xlu0 %2567
        %2569 = vrot.lane.b32.xlu0 %v2555, 8
        %v2570 = vpop.permute.xlu0 %2569
        %2571 = vrot.lane.b32.xlu0 %v2556, 8
        %v2572 = vpop.permute.xlu0 %2571
        %vm2573 = vcmp.lt.s32.totalorder %v647, 8
        %v2574 = vsel %vm2573, %v2570, %v2572
        %v2575 = vsel %vm2573, %v2568, %v2570
        %v2576 = vsel %vm2573, %v2566, %v2568
        %v2577 = vsel %vm2573, %v2564, %v2566
        %v2578 = vsel %vm2573, %v2562, %v2564
        %v2579 = vsel %vm2573, %v2560, %v2562
        %v2580 = vsel %vm2573, %v2558, %v2560
        %v2581 = vsel %vm2573, %v2572, %v2558
        %s2582 = scalar_lea.vmem %s1, 5
        %v2583 = vld [vmem:[%s2582] ss:$8 sm:$0xf]
        %v2584 = vld [vmem:[%s2582] ss:$8 sm:$0xf0]
        %v2585 = vor.u32 %v2583, %v2584
        %v2587 = vlaneseq
        %v2588 = vshrl.u32 %v2587, 7
        %v2589 = vsub.s32 0, %v2588
        %v2590 = vrot.slane %v2585, %v2589
        %v2591 = vlaneseq
        %v2592 = vshrl.u32 %v2591, 7
        %v2593 = vsub.s32 1, %v2592
        %v2594 = vrot.slane %v2585, %v2593
        %v2595 = vlaneseq
        %v2596 = vshrl.u32 %v2595, 7
        %v2597 = vsub.s32 2, %v2596
        %v2598 = vrot.slane %v2585, %v2597
        %v2599 = vlaneseq
        %v2600 = vshrl.u32 %v2599, 7
        %v2601 = vsub.s32 3, %v2600
        %v2602 = vrot.slane %v2585, %v2601
        %v2603 = vlaneseq
        %v2604 = vshrl.u32 %v2603, 7
        %v2605 = vsub.s32 4, %v2604
        %v2606 = vrot.slane %v2585, %v2605
        %v2607 = vlaneseq
        %v2608 = vshrl.u32 %v2607, 7
        %v2609 = vsub.s32 5, %v2608
        %v2610 = vrot.slane %v2585, %v2609
        %v2611 = vlaneseq
        %v2612 = vshrl.u32 %v2611, 7
        %v2613 = vsub.s32 6, %v2612
        %v2614 = vrot.slane %v2585, %v2613
        %v2615 = vlaneseq
        %v2616 = vshrl.u32 %v2615, 7
        %v2617 = vsub.s32 7, %v2616
        %v2618 = vrot.slane %v2585, %v2617
        %v2627 = vmul.f32 %v2581, %v2590
        %v2628 = vmul.f32 %v2580, %v2594
        %v2629 = vmul.f32 %v2579, %v2598
        %v2630 = vmul.f32 %v2578, %v2602
        %v2631 = vmul.f32 %v2577, %v2606
        %v2632 = vmul.f32 %v2576, %v2610
        %v2633 = vmul.f32 %v2575, %v2614
        %v2634 = vmul.f32 %v2574, %v2618
        %s2635 = scalar_lea.vmem %s5, 152
        %v2636 = vld [vmem:[%s2635] sm:$0xff]
        %2638 = vset.pattern.permute.xlu0 0
        %2639 = vperm.xlu0 %2638, %v2636
        %v2640 = vpop.permute.xlu0 %2639
        %v2642 = vmul.f32 %v2640, %v2480
        %v2643 = vmul.f32 %v2640, %v2481
        %v2644 = vmul.f32 %v2640, %v2482
        %v2645 = vmul.f32 %v2640, %v2483
        %v2646 = vmul.f32 %v2640, %v2484
        %v2647 = vmul.f32 %v2640, %v2485
        %v2648 = vmul.f32 %v2640, %v2486
        %v2649 = vmul.f32 %v2640, %v2487
        %s2650 = scalar_lea.vmem %s5, 176
        %v2651 = vld [vmem:[%s2650] sm:$0xff]
        %2653 = vset.pattern.permute.xlu0 0
        %2654 = vperm.xlu0 %2653, %v2651
        %v2655 = vpop.permute.xlu0 %2654
        %v2657 = vmul.f32 %v2655, %v2448
        %v2658 = vmul.f32 %v2655, %v2449
        %v2659 = vmul.f32 %v2655, %v2450
        %v2660 = vmul.f32 %v2655, %v2451
        %v2661 = vmul.f32 %v2655, %v2452
        %v2662 = vmul.f32 %v2655, %v2453
        %v2663 = vmul.f32 %v2655, %v2454
        %v2664 = vmul.f32 %v2655, %v2455
        %v2665 = vadd.f32 %v2642, %v2657
        %v2666 = vadd.f32 %v2643, %v2658
        %v2667 = vadd.f32 %v2644, %v2659
        %v2668 = vadd.f32 %v2645, %v2660
        %v2669 = vadd.f32 %v2646, %v2661
        %v2670 = vadd.f32 %v2647, %v2662
        %v2671 = vadd.f32 %v2648, %v2663
        %v2672 = vadd.f32 %v2649, %v2664
        %s2673 = scalar_lea.vmem %s5, 200
        %v2674 = vld [vmem:[%s2673] sm:$0xff]
        %2676 = vset.pattern.permute.xlu0 0
        %2677 = vperm.xlu0 %2676, %v2674
        %v2678 = vpop.permute.xlu0 %2677
        %v2680 = vmul.f32 %v2678, %v2488
        %v2681 = vmul.f32 %v2678, %v2489
        %v2682 = vmul.f32 %v2678, %v2490
        %v2683 = vmul.f32 %v2678, %v2491
        %v2684 = vmul.f32 %v2678, %v2492
        %v2685 = vmul.f32 %v2678, %v2493
        %v2686 = vmul.f32 %v2678, %v2494
        %v2687 = vmul.f32 %v2678, %v2495
        %v2688 = vadd.f32 %v2665, %v2680
        %v2689 = vadd.f32 %v2666, %v2681
        %v2690 = vadd.f32 %v2667, %v2682
        %v2691 = vadd.f32 %v2668, %v2683
        %v2692 = vadd.f32 %v2669, %v2684
        %v2693 = vadd.f32 %v2670, %v2685
        %v2694 = vadd.f32 %v2671, %v2686
        %v2695 = vadd.f32 %v2672, %v2687
        %2696 = vrot.lane.b32.xlu0 %v2688, 4
        %v2697 = vpop.permute.xlu0 %2696
        %2698 = vrot.lane.b32.xlu0 %v2689, 4
        %v2699 = vpop.permute.xlu0 %2698
        %2700 = vrot.lane.b32.xlu0 %v2690, 4
        %v2701 = vpop.permute.xlu0 %2700
        %2702 = vrot.lane.b32.xlu0 %v2691, 4
        %v2703 = vpop.permute.xlu0 %2702
        %2704 = vrot.lane.b32.xlu0 %v2692, 4
        %v2705 = vpop.permute.xlu0 %2704
        %2706 = vrot.lane.b32.xlu0 %v2693, 4
        %v2707 = vpop.permute.xlu0 %2706
        %2708 = vrot.lane.b32.xlu0 %v2694, 4
        %v2709 = vpop.permute.xlu0 %2708
        %2710 = vrot.lane.b32.xlu0 %v2695, 4
        %v2711 = vpop.permute.xlu0 %2710
        %v2712 = vsel %vm1723, %v2709, %v2711
        %v2713 = vsel %vm1723, %v2707, %v2709
        %v2714 = vsel %vm1723, %v2705, %v2707
        %v2715 = vsel %vm1723, %v2703, %v2705
        %v2716 = vsel %vm1723, %v2701, %v2703
        %v2717 = vsel %vm1723, %v2699, %v2701
        %v2718 = vsel %vm1723, %v2697, %v2699
        %v2719 = vsel %vm1723, %v2711, %v2697
        %v2720 = vmul.f32 %v2719, %v1740
        %v2721 = vmul.f32 %v2718, %v1744
        %v2722 = vmul.f32 %v2717, %v1748
        %v2723 = vmul.f32 %v2716, %v1752
        %v2724 = vmul.f32 %v2715, %v1756
        %v2725 = vmul.f32 %v2714, %v1760
        %v2726 = vmul.f32 %v2713, %v1764
        %v2727 = vmul.f32 %v2712, %v1768
        %v2728 = vadd.f32 %v2627, %v2720
        %v2729 = vadd.f32 %v2628, %v2721
        %v2730 = vadd.f32 %v2629, %v2722
        %v2731 = vadd.f32 %v2630, %v2723
        %v2732 = vadd.f32 %v2631, %v2724
        %v2733 = vadd.f32 %v2632, %v2725
        %v2734 = vadd.f32 %v2633, %v2726
        %v2735 = vadd.f32 %v2634, %v2727
        %s2736 = scalar_lea.vmem %s5, 160
        %v2737 = vld [vmem:[%s2736] sm:$0xff]
        %2739 = vset.pattern.permute.xlu0 0
        %2740 = vperm.xlu0 %2739, %v2737
        %v2741 = vpop.permute.xlu0 %2740
        %v2743 = vmul.f32 %v2741, %v2480
        %v2744 = vmul.f32 %v2741, %v2481
        %v2745 = vmul.f32 %v2741, %v2482
        %v2746 = vmul.f32 %v2741, %v2483
        %v2747 = vmul.f32 %v2741, %v2484
        %v2748 = vmul.f32 %v2741, %v2485
        %v2749 = vmul.f32 %v2741, %v2486
        %v2750 = vmul.f32 %v2741, %v2487
        %s2751 = scalar_lea.vmem %s5, 184
        %v2752 = vld [vmem:[%s2751] sm:$0xff]
        %2754 = vset.pattern.permute.xlu0 0
        %2755 = vperm.xlu0 %2754, %v2752
        %v2756 = vpop.permute.xlu0 %2755
        %v2758 = vmul.f32 %v2756, %v2448
        %v2759 = vmul.f32 %v2756, %v2449
        %v2760 = vmul.f32 %v2756, %v2450
        %v2761 = vmul.f32 %v2756, %v2451
        %v2762 = vmul.f32 %v2756, %v2452
        %v2763 = vmul.f32 %v2756, %v2453
        %v2764 = vmul.f32 %v2756, %v2454
        %v2765 = vmul.f32 %v2756, %v2455
        %v2766 = vadd.f32 %v2743, %v2758
        %v2767 = vadd.f32 %v2744, %v2759
        %v2768 = vadd.f32 %v2745, %v2760
        %v2769 = vadd.f32 %v2746, %v2761
        %v2770 = vadd.f32 %v2747, %v2762
        %v2771 = vadd.f32 %v2748, %v2763
        %v2772 = vadd.f32 %v2749, %v2764
        %v2773 = vadd.f32 %v2750, %v2765
        %s2774 = scalar_lea.vmem %s5, 208
        %v2775 = vld [vmem:[%s2774] sm:$0xff]
        %2777 = vset.pattern.permute.xlu0 0
        %2778 = vperm.xlu0 %2777, %v2775
        %v2779 = vpop.permute.xlu0 %2778
        %v2781 = vmul.f32 %v2779, %v2488
        %v2782 = vmul.f32 %v2779, %v2489
        %v2783 = vmul.f32 %v2779, %v2490
        %v2784 = vmul.f32 %v2779, %v2491
        %v2785 = vmul.f32 %v2779, %v2492
        %v2786 = vmul.f32 %v2779, %v2493
        %v2787 = vmul.f32 %v2779, %v2494
        %v2788 = vmul.f32 %v2779, %v2495
        %v2789 = vadd.f32 %v2766, %v2781
        %v2790 = vadd.f32 %v2767, %v2782
        %v2791 = vadd.f32 %v2768, %v2783
        %v2792 = vadd.f32 %v2769, %v2784
        %v2793 = vadd.f32 %v2770, %v2785
        %v2794 = vadd.f32 %v2771, %v2786
        %v2795 = vadd.f32 %v2772, %v2787
        %v2796 = vadd.f32 %v2773, %v2788
        %v2797 = vadd.f32 %v2728, %v2789
        %v2798 = vadd.f32 %v2729, %v2790
        %v2799 = vadd.f32 %v2730, %v2791
        %v2800 = vadd.f32 %v2731, %v2792
        %v2801 = vadd.f32 %v2732, %v2793
        %v2802 = vadd.f32 %v2733, %v2794
        %v2803 = vadd.f32 %v2734, %v2795
        %v2804 = vadd.f32 %v2735, %v2796
        %s2805 = scalar_lea.vmem %s6, 16
        %v2806 = vld [vmem:[%s2805] sm:$0xff]
        %2808 = vset.pattern.permute.xlu0 0
        %2809 = vperm.xlu0 %2808, %v2806
        %v2810 = vpop.permute.xlu0 %2809
        %v2812 = vadd.f32 %v2797, %v2810
        %v2813 = vadd.f32 %v2798, %v2810
        %v2814 = vadd.f32 %v2799, %v2810
        %v2815 = vadd.f32 %v2800, %v2810
        %v2816 = vadd.f32 %v2801, %v2810
        %v2817 = vadd.f32 %v2802, %v2810
        %v2818 = vadd.f32 %v2803, %v2810
        %v2819 = vadd.f32 %v2804, %v2810
        %vm2820 = vcmp.ge.f32.partialorder %v2812, 0.0
        %vm2821 = vcmp.ge.f32.partialorder %v2813, 0.0
        %vm2822 = vcmp.ge.f32.partialorder %v2814, 0.0
        %vm2823 = vcmp.ge.f32.partialorder %v2815, 0.0
        %vm2824 = vcmp.ge.f32.partialorder %v2816, 0.0
        %vm2825 = vcmp.ge.f32.partialorder %v2817, 0.0
        %vm2826 = vcmp.ge.f32.partialorder %v2818, 0.0
        %vm2827 = vcmp.ge.f32.partialorder %v2819, 0.0
        %s2828 = scalar_lea.vmem %s7, 16
        %v2829 = vld [vmem:[%s2828] sm:$0xff]
        %2831 = vset.pattern.permute.xlu0 0
        %2832 = vperm.xlu0 %2831, %v2829
        %v2833 = vpop.permute.xlu0 %2832
        %v2835 = vmul.f32 %v2833, %v2812
        %v2836 = vmul.f32 %v2833, %v2813
        %v2837 = vmul.f32 %v2833, %v2814
        %v2838 = vmul.f32 %v2833, %v2815
        %v2839 = vmul.f32 %v2833, %v2816
        %v2840 = vmul.f32 %v2833, %v2817
        %v2841 = vmul.f32 %v2833, %v2818
        %v2842 = vmul.f32 %v2833, %v2819
        %v2843 = vsel %vm2820, %v2812, %v2835
        %v2844 = vsel %vm2821, %v2813, %v2836
        %v2845 = vsel %vm2822, %v2814, %v2837
        %v2846 = vsel %vm2823, %v2815, %v2838
        %v2847 = vsel %vm2824, %v2816, %v2839
        %v2848 = vsel %vm2825, %v2817, %v2840
        %v2849 = vsel %vm2826, %v2818, %v2841
        %v2850 = vsel %vm2827, %v2819, %v2842
        %s2851 = scalar_lea.vmem %s8, 8
        %v2852 = vld [vmem:[%s2851] sm:$0xf]
        %v2853 = vpack.c.bf16 %v2843, %v2843
        %v2854 = vpack.c.bf16 %v2844, %v2844
        %v2855 = vpack.c.bf16 %v2845, %v2845
        %v2856 = vpack.c.bf16 %v2846, %v2846
        %v2857 = vpack.c.bf16 %v2847, %v2847
        %v2858 = vpack.c.bf16 %v2848, %v2848
        %v2859 = vpack.c.bf16 %v2849, %v2849
        %v2860 = vpack.c.bf16 %v2850, %v2850
        %s2861 = scalar_lea.vmem %s9, 16
        %v2862 = vld [vmem:[%s2861] sm:$0xff]
        %2864 = vset.pattern.permute.xlu0 0
        %2865 = vperm.xlu0 %2864, %v2862
        %v2866 = vpop.permute.xlu0 %2865
        %v2869 = vsel %vm407, %v2852, 0
        %v2872 = vsel %vm411, %v2853, 0
        %v2875 = vsel %vm411, %v2854, 0
        %v2878 = vsel %vm411, %v2855, 0
        %v2881 = vsel %vm411, %v2856, 0
        %v2884 = vsel %vm411, %v2857, 0
        %v2887 = vsel %vm411, %v2858, 0
        %v2890 = vsel %vm411, %v2859, 0
        %v2893 = vsel %vm411, %v2860, 0
        %2895 = vmatprep.subr.bf16.mxu0 %v2875
        %2896 = vmatpush1.bf16.msra.mxu0 %v2872
        %2897 = vmatprep.subr.bf16.mxu0 0
        %2898 = vmatpush1.bf16.msra.mxu0 0
        %2899 = vmatprep.subr.bf16.mxu0 0
        %2900 = vmatpush1.bf16.msra.mxu0 0
        %2901 = vmatprep.subr.bf16.mxu0 0
        %2902 = vmatpush1.bf16.msra.mxu0 0
        %2903 = vmatprep.subr.bf16.mxu0 0
        %2904 = vmatpush1.bf16.msra.mxu0 0
        %2905 = vmatprep.subr.bf16.mxu0 0
        %2906 = vmatpush1.bf16.msra.mxu0 0
        %2907 = vmatprep.subr.bf16.mxu0 0
        %2908 = vmatpush1.bf16.msra.mxu0 0
        %2909 = vmatprep.subr.bf16.mxu0 0
        %2910 = vmatpush1.bf16.msra.mxu0 0
        %2911 = vmatprep.subr.bf16.mxu0 0
        %2912 = vmatpush1.bf16.msra.mxu0 0
        %2913 = vmatprep.subr.bf16.mxu0 0
        %2914 = vmatpush1.bf16.msra.mxu0 0
        %2915 = vmatprep.subr.bf16.mxu0 0
        %2916 = vmatpush1.bf16.msra.mxu0 0
        %2917 = vmatprep.subr.bf16.mxu0 0
        %2918 = vmatpush1.bf16.msra.mxu0 0
        %2919 = vmatprep.subr.bf16.mxu0 0
        %2920 = vmatpush1.bf16.msra.mxu0 0
        %2921 = vmatprep.subr.bf16.mxu0 0
        %2922 = vmatpush1.bf16.msra.mxu0 0
        %2923 = vmatprep.subr.bf16.mxu0 0
        %2924 = vmatpush1.bf16.msra.mxu0 0
        %2925 = vmatprep.subr.bf16.mxu0 0
        %2926 = vmatpush1.bf16.msra.mxu0 0
        %2927 = vmatprep.mubr.bf16.mxu0 0
        %2928 = vmatmul.mubr.bf16.gmra.mrb[0].mxu0 %v2869
        %v2929 = vpop.f32.mrb[0].mxu0
        %v2930 = vadd.f32 %v2866, %v2929
        %v2931 = vpop.f32.mrb[0].mxu0
        %v2932 = vadd.f32 %v2866, %v2931
        %v2933 = vpop.f32.mrb[0].mxu0
        %v2934 = vpop.f32.mrb[0].mxu0
        %2935 = vdwg.mxu0
        %2936 = vmatprep.subr.bf16.mxu0 %v2881
        %2937 = vmatpush1.bf16.msra.mxu0 %v2878
        %2938 = vmatprep.subr.bf16.mxu0 0
        %2939 = vmatpush1.bf16.msra.mxu0 0
        %2940 = vmatprep.subr.bf16.mxu0 0
        %2941 = vmatpush1.bf16.msra.mxu0 0
        %2942 = vmatprep.subr.bf16.mxu0 0
        %2943 = vmatpush1.bf16.msra.mxu0 0
        %2944 = vmatprep.subr.bf16.mxu0 0
        %2945 = vmatpush1.bf16.msra.mxu0 0
        %2946 = vmatprep.subr.bf16.mxu0 0
        %2947 = vmatpush1.bf16.msra.mxu0 0
        %2948 = vmatprep.subr.bf16.mxu0 0
        %2949 = vmatpush1.bf16.msra.mxu0 0
        %2950 = vmatprep.subr.bf16.mxu0 0
        %2951 = vmatpush1.bf16.msra.mxu0 0
        %2952 = vmatprep.subr.bf16.mxu0 0
        %2953 = vmatpush1.bf16.msra.mxu0 0
        %2954 = vmatprep.subr.bf16.mxu0 0
        %2955 = vmatpush1.bf16.msra.mxu0 0
        %2956 = vmatprep.subr.bf16.mxu0 0
        %2957 = vmatpush1.bf16.msra.mxu0 0
        %2958 = vmatprep.subr.bf16.mxu0 0
        %2959 = vmatpush1.bf16.msra.mxu0 0
        %2960 = vmatprep.subr.bf16.mxu0 0
        %2961 = vmatpush1.bf16.msra.mxu0 0
        %2962 = vmatprep.subr.bf16.mxu0 0
        %2963 = vmatpush1.bf16.msra.mxu0 0
        %2964 = vmatprep.subr.bf16.mxu0 0
        %2965 = vmatpush1.bf16.msra.mxu0 0
        %2966 = vmatprep.subr.bf16.mxu0 0
        %2967 = vmatpush1.bf16.msra.mxu0 0
        %2968 = vmatprep.mubr.bf16.mxu0 0
        %2969 = vmatmul.mubr.bf16.gmra.mrb[0].mxu0 %v2869
        %v2970 = vpop.f32.mrb[0].mxu0
        %v2971 = vadd.f32 %v2866, %v2970
        %v2972 = vpop.f32.mrb[0].mxu0
        %v2973 = vadd.f32 %v2866, %v2972
        %v2974 = vpop.f32.mrb[0].mxu0
        %v2975 = vpop.f32.mrb[0].mxu0
        %2976 = vdwg.mxu0
        %2977 = vmatprep.subr.bf16.mxu0 %v2887
        %2978 = vmatpush1.bf16.msra.mxu0 %v2884
        %2979 = vmatprep.subr.bf16.mxu0 0
        %2980 = vmatpush1.bf16.msra.mxu0 0
        %2981 = vmatprep.subr.bf16.mxu0 0
        %2982 = vmatpush1.bf16.msra.mxu0 0
        %2983 = vmatprep.subr.bf16.mxu0 0
        %2984 = vmatpush1.bf16.msra.mxu0 0
        %2985 = vmatprep.subr.bf16.mxu0 0
        %2986 = vmatpush1.bf16.msra.mxu0 0
        %2987 = vmatprep.subr.bf16.mxu0 0
        %2988 = vmatpush1.bf16.msra.mxu0 0
        %2989 = vmatprep.subr.bf16.mxu0 0
        %2990 = vmatpush1.bf16.msra.mxu0 0
        %2991 = vmatprep.subr.bf16.mxu0 0
        %2992 = vmatpush1.bf16.msra.mxu0 0
        %2993 = vmatprep.subr.bf16.mxu0 0
        %2994 = vmatpush1.bf16.msra.mxu0 0
        %2995 = vmatprep.subr.bf16.mxu0 0
        %2996 = vmatpush1.bf16.msra.mxu0 0
        %2997 = vmatprep.subr.bf16.mxu0 0
        %2998 = vmatpush1.bf16.msra.mxu0 0
        %2999 = vmatprep.subr.bf16.mxu0 0
        %3000 = vmatpush1.bf16.msra.mxu0 0
        %3001 = vmatprep.subr.bf16.mxu0 0
        %3002 = vmatpush1.bf16.msra.mxu0 0
        %3003 = vmatprep.subr.bf16.mxu0 0
        %3004 = vmatpush1.bf16.msra.mxu0 0
        %3005 = vmatprep.subr.bf16.mxu0 0
        %3006 = vmatpush1.bf16.msra.mxu0 0
        %3007 = vmatprep.subr.bf16.mxu0 0
        %3008 = vmatpush1.bf16.msra.mxu0 0
        %3009 = vmatprep.mubr.bf16.mxu0 0
        %3010 = vmatmul.mubr.bf16.gmra.mrb[0].mxu0 %v2869
        %v3011 = vpop.f32.mrb[0].mxu0
        %v3012 = vadd.f32 %v2866, %v3011
        %v3013 = vpop.f32.mrb[0].mxu0
        %v3014 = vadd.f32 %v2866, %v3013
        %v3015 = vpop.f32.mrb[0].mxu0
        %v3016 = vpop.f32.mrb[0].mxu0
        %3017 = vdwg.mxu0
        %3018 = vmatprep.subr.bf16.mxu0 %v2893
        %3019 = vmatpush1.bf16.msra.mxu0 %v2890
        %3020 = vmatprep.subr.bf16.mxu0 0
        %3021 = vmatpush1.bf16.msra.mxu0 0
        %3022 = vmatprep.subr.bf16.mxu0 0
        %3023 = vmatpush1.bf16.msra.mxu0 0
        %3024 = vmatprep.subr.bf16.mxu0 0
        %3025 = vmatpush1.bf16.msra.mxu0 0
        %3026 = vmatprep.subr.bf16.mxu0 0
        %3027 = vmatpush1.bf16.msra.mxu0 0
        %3028 = vmatprep.subr.bf16.mxu0 0
        %3029 = vmatpush1.bf16.msra.mxu0 0
        %3030 = vmatprep.subr.bf16.mxu0 0
        %3031 = vmatpush1.bf16.msra.mxu0 0
        %3032 = vmatprep.subr.bf16.mxu0 0
        %3033 = vmatpush1.bf16.msra.mxu0 0
        %3034 = vmatprep.subr.bf16.mxu0 0
        %3035 = vmatpush1.bf16.msra.mxu0 0
        %3036 = vmatprep.subr.bf16.mxu0 0
        %3037 = vmatpush1.bf16.msra.mxu0 0
        %3038 = vmatprep.subr.bf16.mxu0 0
        %3039 = vmatpush1.bf16.msra.mxu0 0
        %3040 = vmatprep.subr.bf16.mxu0 0
        %3041 = vmatpush1.bf16.msra.mxu0 0
        %3042 = vmatprep.subr.bf16.mxu0 0
        %3043 = vmatpush1.bf16.msra.mxu0 0
        %3044 = vmatprep.subr.bf16.mxu0 0
        %3045 = vmatpush1.bf16.msra.mxu0 0
        %3046 = vmatprep.subr.bf16.mxu0 0
        %3047 = vmatpush1.bf16.msra.mxu0 0
        %3048 = vmatprep.subr.bf16.mxu0 0
        %3049 = vmatpush1.bf16.msra.mxu0 0
        %3050 = vmatprep.mubr.bf16.mxu0 0
        %3051 = vmatmul.mubr.bf16.gmra.mrb[0].mxu0 %v2869
        %v3052 = vpop.f32.mrb[0].mxu0
        %v3053 = vadd.f32 %v2866, %v3052
        %v3054 = vpop.f32.mrb[0].mxu0
        %v3055 = vadd.f32 %v2866, %v3054
        %v3056 = vpop.f32.mrb[0].mxu0
        %v3057 = vpop.f32.mrb[0].mxu0
        %3058 = vdwg.mxu0
        %v3059 = vadd.f32 %v2930, %v2209
        %v3060 = vadd.f32 %v2932, %v2210
        %v3061 = vadd.f32 %v2971, %v2211
        %v3062 = vadd.f32 %v2973, %v2212
        %v3063 = vadd.f32 %v3012, %v2213
        %v3064 = vadd.f32 %v3014, %v2214
        %v3065 = vadd.f32 %v3053, %v2215
        %v3066 = vadd.f32 %v3055, %v2216
        %s3067 = scalar_lea.vmem %s2, 12
        %v3068 = vld [vmem:[%s3067] sm:$0xf]
        %v3069 = vpack.c.bf16 %v3059, %v3059
        %v3070 = vpack.c.bf16 %v3060, %v3060
        %v3071 = vpack.c.bf16 %v3061, %v3061
        %v3072 = vpack.c.bf16 %v3062, %v3062
        %v3073 = vpack.c.bf16 %v3063, %v3063
        %v3074 = vpack.c.bf16 %v3064, %v3064
        %v3075 = vpack.c.bf16 %v3065, %v3065
        %v3076 = vpack.c.bf16 %v3066, %v3066
        %s3077 = scalar_lea.vmem %s3, 24
        %v3078 = vld [vmem:[%s3077] sm:$0xff]
        %3080 = vset.pattern.permute.xlu0 0
        %3081 = vperm.xlu0 %3080, %v3078
        %v3082 = vpop.permute.xlu0 %3081
        %v3085 = vsel %vm407, %v3068, 0
        %v3088 = vsel %vm411, %v3069, 0
        %v3091 = vsel %vm411, %v3070, 0
        %v3094 = vsel %vm411, %v3071, 0
        %v3097 = vsel %vm411, %v3072, 0
        %v3100 = vsel %vm411, %v3073, 0
        %v3103 = vsel %vm411, %v3074, 0
        %v3106 = vsel %vm411, %v3075, 0
        %v3109 = vsel %vm411, %v3076, 0
        %3111 = vmatprep.subr.bf16.mxu0 %v3091
        %3112 = vmatpush1.bf16.msra.mxu0 %v3088
        %3113 = vmatprep.subr.bf16.mxu0 0
        %3114 = vmatpush1.bf16.msra.mxu0 0
        %3115 = vmatprep.subr.bf16.mxu0 0
        %3116 = vmatpush1.bf16.msra.mxu0 0
        %3117 = vmatprep.subr.bf16.mxu0 0
        %3118 = vmatpush1.bf16.msra.mxu0 0
        %3119 = vmatprep.subr.bf16.mxu0 0
        %3120 = vmatpush1.bf16.msra.mxu0 0
        %3121 = vmatprep.subr.bf16.mxu0 0
        %3122 = vmatpush1.bf16.msra.mxu0 0
        %3123 = vmatprep.subr.bf16.mxu0 0
        %3124 = vmatpush1.bf16.msra.mxu0 0
        %3125 = vmatprep.subr.bf16.mxu0 0
        %3126 = vmatpush1.bf16.msra.mxu0 0
        %3127 = vmatprep.subr.bf16.mxu0 0
        %3128 = vmatpush1.bf16.msra.mxu0 0
        %3129 = vmatprep.subr.bf16.mxu0 0
        %3130 = vmatpush1.bf16.msra.mxu0 0
        %3131 = vmatprep.subr.bf16.mxu0 0
        %3132 = vmatpush1.bf16.msra.mxu0 0
        %3133 = vmatprep.subr.bf16.mxu0 0
        %3134 = vmatpush1.bf16.msra.mxu0 0
        %3135 = vmatprep.subr.bf16.mxu0 0
        %3136 = vmatpush1.bf16.msra.mxu0 0
        %3137 = vmatprep.subr.bf16.mxu0 0
        %3138 = vmatpush1.bf16.msra.mxu0 0
        %3139 = vmatprep.subr.bf16.mxu0 0
        %3140 = vmatpush1.bf16.msra.mxu0 0
        %3141 = vmatprep.subr.bf16.mxu0 0
        %3142 = vmatpush1.bf16.msra.mxu0 0
        %3143 = vmatprep.mubr.bf16.mxu0 0
        %3144 = vmatmul.mubr.bf16.gmra.mrb[0].mxu0 %v3085
        %v3145 = vpop.f32.mrb[0].mxu0
        %v3146 = vadd.f32 %v3082, %v3145
        %v3147 = vpop.f32.mrb[0].mxu0
        %v3148 = vadd.f32 %v3082, %v3147
        %v3149 = vpop.f32.mrb[0].mxu0
        %v3150 = vpop.f32.mrb[0].mxu0
        %3151 = vdwg.mxu0
        %3152 = vmatprep.subr.bf16.mxu0 %v3097
        %3153 = vmatpush1.bf16.msra.mxu0 %v3094
        %3154 = vmatprep.subr.bf16.mxu0 0
        %3155 = vmatpush1.bf16.msra.mxu0 0
        %3156 = vmatprep.subr.bf16.mxu0 0
        %3157 = vmatpush1.bf16.msra.mxu0 0
        %3158 = vmatprep.subr.bf16.mxu0 0
        %3159 = vmatpush1.bf16.msra.mxu0 0
        %3160 = vmatprep.subr.bf16.mxu0 0
        %3161 = vmatpush1.bf16.msra.mxu0 0
        %3162 = vmatprep.subr.bf16.mxu0 0
        %3163 = vmatpush1.bf16.msra.mxu0 0
        %3164 = vmatprep.subr.bf16.mxu0 0
        %3165 = vmatpush1.bf16.msra.mxu0 0
        %3166 = vmatprep.subr.bf16.mxu0 0
        %3167 = vmatpush1.bf16.msra.mxu0 0
        %3168 = vmatprep.subr.bf16.mxu0 0
        %3169 = vmatpush1.bf16.msra.mxu0 0
        %3170 = vmatprep.subr.bf16.mxu0 0
        %3171 = vmatpush1.bf16.msra.mxu0 0
        %3172 = vmatprep.subr.bf16.mxu0 0
        %3173 = vmatpush1.bf16.msra.mxu0 0
        %3174 = vmatprep.subr.bf16.mxu0 0
        %3175 = vmatpush1.bf16.msra.mxu0 0
        %3176 = vmatprep.subr.bf16.mxu0 0
        %3177 = vmatpush1.bf16.msra.mxu0 0
        %3178 = vmatprep.subr.bf16.mxu0 0
        %3179 = vmatpush1.bf16.msra.mxu0 0
        %3180 = vmatprep.subr.bf16.mxu0 0
        %3181 = vmatpush1.bf16.msra.mxu0 0
        %3182 = vmatprep.subr.bf16.mxu0 0
        %3183 = vmatpush1.bf16.msra.mxu0 0
        %3184 = vmatprep.mubr.bf16.mxu0 0
        %3185 = vmatmul.mubr.bf16.gmra.mrb[0].mxu0 %v3085
        %v3186 = vpop.f32.mrb[0].mxu0
        %v3187 = vadd.f32 %v3082, %v3186
        %v3188 = vpop.f32.mrb[0].mxu0
        %v3189 = vadd.f32 %v3082, %v3188
        %v3190 = vpop.f32.mrb[0].mxu0
        %v3191 = vpop.f32.mrb[0].mxu0
        %3192 = vdwg.mxu0
        %3193 = vmatprep.subr.bf16.mxu0 %v3103
        %3194 = vmatpush1.bf16.msra.mxu0 %v3100
        %3195 = vmatprep.subr.bf16.mxu0 0
        %3196 = vmatpush1.bf16.msra.mxu0 0
        %3197 = vmatprep.subr.bf16.mxu0 0
        %3198 = vmatpush1.bf16.msra.mxu0 0
        %3199 = vmatprep.subr.bf16.mxu0 0
        %3200 = vmatpush1.bf16.msra.mxu0 0
        %3201 = vmatprep.subr.bf16.mxu0 0
        %3202 = vmatpush1.bf16.msra.mxu0 0
        %3203 = vmatprep.subr.bf16.mxu0 0
        %3204 = vmatpush1.bf16.msra.mxu0 0
        %3205 = vmatprep.subr.bf16.mxu0 0
        %3206 = vmatpush1.bf16.msra.mxu0 0
        %3207 = vmatprep.subr.bf16.mxu0 0
        %3208 = vmatpush1.bf16.msra.mxu0 0
        %3209 = vmatprep.subr.bf16.mxu0 0
        %3210 = vmatpush1.bf16.msra.mxu0 0
        %3211 = vmatprep.subr.bf16.mxu0 0
        %3212 = vmatpush1.bf16.msra.mxu0 0
        %3213 = vmatprep.subr.bf16.mxu0 0
        %3214 = vmatpush1.bf16.msra.mxu0 0
        %3215 = vmatprep.subr.bf16.mxu0 0
        %3216 = vmatpush1.bf16.msra.mxu0 0
        %3217 = vmatprep.subr.bf16.mxu0 0
        %3218 = vmatpush1.bf16.msra.mxu0 0
        %3219 = vmatprep.subr.bf16.mxu0 0
        %3220 = vmatpush1.bf16.msra.mxu0 0
        %3221 = vmatprep.subr.bf16.mxu0 0
        %3222 = vmatpush1.bf16.msra.mxu0 0
        %3223 = vmatprep.subr.bf16.mxu0 0
        %3224 = vmatpush1.bf16.msra.mxu0 0
        %3225 = vmatprep.mubr.bf16.mxu0 0
        %3226 = vmatmul.mubr.bf16.gmra.mrb[0].mxu0 %v3085
        %v3227 = vpop.f32.mrb[0].mxu0
        %v3228 = vadd.f32 %v3082, %v3227
        %v3229 = vpop.f32.mrb[0].mxu0
        %v3230 = vadd.f32 %v3082, %v3229
        %v3231 = vpop.f32.mrb[0].mxu0
        %v3232 = vpop.f32.mrb[0].mxu0
        %3233 = vdwg.mxu0
        %3234 = vmatprep.subr.bf16.mxu0 %v3109
        %3235 = vmatpush1.bf16.msra.mxu0 %v3106
        %3236 = vmatprep.subr.bf16.mxu0 0
        %3237 = vmatpush1.bf16.msra.mxu0 0
        %3238 = vmatprep.subr.bf16.mxu0 0
        %3239 = vmatpush1.bf16.msra.mxu0 0
        %3240 = vmatprep.subr.bf16.mxu0 0
        %3241 = vmatpush1.bf16.msra.mxu0 0
        %3242 = vmatprep.subr.bf16.mxu0 0
        %3243 = vmatpush1.bf16.msra.mxu0 0
        %3244 = vmatprep.subr.bf16.mxu0 0
        %3245 = vmatpush1.bf16.msra.mxu0 0
        %3246 = vmatprep.subr.bf16.mxu0 0
        %3247 = vmatpush1.bf16.msra.mxu0 0
        %3248 = vmatprep.subr.bf16.mxu0 0
        %3249 = vmatpush1.bf16.msra.mxu0 0
        %3250 = vmatprep.subr.bf16.mxu0 0
        %3251 = vmatpush1.bf16.msra.mxu0 0
        %3252 = vmatprep.subr.bf16.mxu0 0
        %3253 = vmatpush1.bf16.msra.mxu0 0
        %3254 = vmatprep.subr.bf16.mxu0 0
        %3255 = vmatpush1.bf16.msra.mxu0 0
        %3256 = vmatprep.subr.bf16.mxu0 0
        %3257 = vmatpush1.bf16.msra.mxu0 0
        %3258 = vmatprep.subr.bf16.mxu0 0
        %3259 = vmatpush1.bf16.msra.mxu0 0
        %3260 = vmatprep.subr.bf16.mxu0 0
        %3261 = vmatpush1.bf16.msra.mxu0 0
        %3262 = vmatprep.subr.bf16.mxu0 0
        %3263 = vmatpush1.bf16.msra.mxu0 0
        %3264 = vmatprep.subr.bf16.mxu0 0
        %3265 = vmatpush1.bf16.msra.mxu0 0
        %3266 = vmatprep.mubr.bf16.mxu0 0
        %3267 = vmatmul.mubr.bf16.gmra.mrb[0].mxu0 %v3085
        %v3268 = vpop.f32.mrb[0].mxu0
        %v3269 = vadd.f32 %v3082, %v3268
        %v3270 = vpop.f32.mrb[0].mxu0
        %v3271 = vadd.f32 %v3082, %v3270
        %v3272 = vpop.f32.mrb[0].mxu0
        %v3273 = vpop.f32.mrb[0].mxu0
        %3274 = vdwg.mxu0
        %vm3275 = vcmp.ge.f32.partialorder %v3146, 0.0
        %vm3276 = vcmp.ge.f32.partialorder %v3148, 0.0
        %vm3277 = vcmp.ge.f32.partialorder %v3187, 0.0
        %vm3278 = vcmp.ge.f32.partialorder %v3189, 0.0
        %vm3279 = vcmp.ge.f32.partialorder %v3228, 0.0
        %vm3280 = vcmp.ge.f32.partialorder %v3230, 0.0
        %vm3281 = vcmp.ge.f32.partialorder %v3269, 0.0
        %vm3282 = vcmp.ge.f32.partialorder %v3271, 0.0
        %s3283 = scalar_lea.vmem %s4, 24
        %v3284 = vld [vmem:[%s3283] sm:$0xff]
        %3286 = vset.pattern.permute.xlu0 0
        %3287 = vperm.xlu0 %3286, %v3284
        %v3288 = vpop.permute.xlu0 %3287
        %v3290 = vmul.f32 %v3288, %v3146
        %v3291 = vmul.f32 %v3288, %v3148
        %v3292 = vmul.f32 %v3288, %v3187
        %v3293 = vmul.f32 %v3288, %v3189
        %v3294 = vmul.f32 %v3288, %v3228
        %v3295 = vmul.f32 %v3288, %v3230
        %v3296 = vmul.f32 %v3288, %v3269
        %v3297 = vmul.f32 %v3288, %v3271
        %v3298 = vsel %vm3275, %v3146, %v3290
        %v3299 = vsel %vm3276, %v3148, %v3291
        %v3300 = vsel %vm3277, %v3187, %v3292
        %v3301 = vsel %vm3278, %v3189, %v3293
        %v3302 = vsel %vm3279, %v3228, %v3294
        %v3303 = vsel %vm3280, %v3230, %v3295
        %v3304 = vsel %vm3281, %v3269, %v3296
        %v3305 = vsel %vm3282, %v3271, %v3297
        %3306 = vrot.lane.b32.xlu0 %v3298, 64
        %v3307 = vpop.permute.xlu0 %3306
        %3308 = vrot.lane.b32.xlu0 %v3299, 64
        %v3309 = vpop.permute.xlu0 %3308
        %3310 = vrot.lane.b32.xlu0 %v3300, 64
        %v3311 = vpop.permute.xlu0 %3310
        %3312 = vrot.lane.b32.xlu0 %v3301, 64
        %v3313 = vpop.permute.xlu0 %3312
        %3314 = vrot.lane.b32.xlu0 %v3302, 64
        %v3315 = vpop.permute.xlu0 %3314
        %3316 = vrot.lane.b32.xlu0 %v3303, 64
        %v3317 = vpop.permute.xlu0 %3316
        %3318 = vrot.lane.b32.xlu0 %v3304, 64
        %v3319 = vpop.permute.xlu0 %3318
        %3320 = vrot.lane.b32.xlu0 %v3305, 64
        %v3321 = vpop.permute.xlu0 %3320
        %v3322 = vsel %vm648, %v3319, %v3321
        %v3323 = vsel %vm648, %v3317, %v3319
        %v3324 = vsel %vm648, %v3315, %v3317
        %v3325 = vsel %vm648, %v3313, %v3315
        %v3326 = vsel %vm648, %v3311, %v3313
        %v3327 = vsel %vm648, %v3309, %v3311
        %v3328 = vsel %vm648, %v3307, %v3309
        %v3329 = vsel %vm648, %v3321, %v3307
        %v3330 = vmul.f32 %v661, %v3329
        %v3331 = vmul.f32 %v665, %v3328
        %v3332 = vmul.f32 %v669, %v3327
        %v3333 = vmul.f32 %v673, %v3326
        %v3334 = vmul.f32 %v677, %v3325
        %v3335 = vmul.f32 %v681, %v3324
        %v3336 = vmul.f32 %v685, %v3323
        %v3337 = vmul.f32 %v689, %v3322
        %v3338 = vmul.f32 %v710, %v3328
        %v3339 = vmul.f32 %v714, %v3327
        %v3340 = vmul.f32 %v718, %v3326
        %v3341 = vmul.f32 %v722, %v3325
        %v3342 = vmul.f32 %v726, %v3324
        %v3343 = vmul.f32 %v730, %v3323
        %v3344 = vmul.f32 %v734, %v3322
        %v3345 = vmul.f32 %v738, %v3329
        %s3346 = scalar_lea.vmem %s5, 216
        %v3347 = vld [vmem:[%s3346] sm:$0xff]
        %3349 = vset.pattern.permute.xlu0 0
        %3350 = vperm.xlu0 %3349, %v3347
        %v3351 = vpop.permute.xlu0 %3350
        %v3353 = vmul.f32 %v3351, %v3330
        %v3354 = vmul.f32 %v3351, %v3331
        %v3355 = vmul.f32 %v3351, %v3332
        %v3356 = vmul.f32 %v3351, %v3333
        %v3357 = vmul.f32 %v3351, %v3334
        %v3358 = vmul.f32 %v3351, %v3335
        %v3359 = vmul.f32 %v3351, %v3336
        %v3360 = vmul.f32 %v3351, %v3337
        %s3361 = scalar_lea.vmem %s5, 240
        %v3362 = vld [vmem:[%s3361] sm:$0xff]
        %3364 = vset.pattern.permute.xlu0 0
        %3365 = vperm.xlu0 %3364, %v3362
        %v3366 = vpop.permute.xlu0 %3365
        %v3368 = vmul.f32 %v3366, %v3298
        %v3369 = vmul.f32 %v3366, %v3299
        %v3370 = vmul.f32 %v3366, %v3300
        %v3371 = vmul.f32 %v3366, %v3301
        %v3372 = vmul.f32 %v3366, %v3302
        %v3373 = vmul.f32 %v3366, %v3303
        %v3374 = vmul.f32 %v3366, %v3304
        %v3375 = vmul.f32 %v3366, %v3305
        %v3376 = vadd.f32 %v3353, %v3368
        %v3377 = vadd.f32 %v3354, %v3369
        %v3378 = vadd.f32 %v3355, %v3370
        %v3379 = vadd.f32 %v3356, %v3371
        %v3380 = vadd.f32 %v3357, %v3372
        %v3381 = vadd.f32 %v3358, %v3373
        %v3382 = vadd.f32 %v3359, %v3374
        %v3383 = vadd.f32 %v3360, %v3375
        %s3384 = scalar_lea.vmem %s5, 264
        %v3385 = vld [vmem:[%s3384] sm:$0xff]
        %3387 = vset.pattern.permute.xlu0 0
        %3388 = vperm.xlu0 %3387, %v3385
        %v3389 = vpop.permute.xlu0 %3388
        %v3391 = vmul.f32 %v3389, %v3338
        %v3392 = vmul.f32 %v3389, %v3339
        %v3393 = vmul.f32 %v3389, %v3340
        %v3394 = vmul.f32 %v3389, %v3341
        %v3395 = vmul.f32 %v3389, %v3342
        %v3396 = vmul.f32 %v3389, %v3343
        %v3397 = vmul.f32 %v3389, %v3344
        %v3398 = vmul.f32 %v3389, %v3345
        %v3399 = vadd.f32 %v3376, %v3391
        %v3400 = vadd.f32 %v3377, %v3392
        %v3401 = vadd.f32 %v3378, %v3393
        %v3402 = vadd.f32 %v3379, %v3394
        %v3403 = vadd.f32 %v3380, %v3395
        %v3404 = vadd.f32 %v3381, %v3396
        %v3405 = vadd.f32 %v3382, %v3397
        %v3406 = vadd.f32 %v3383, %v3398
        %3407 = vrot.lane.b32.xlu0 %v3399, 16
        %v3408 = vpop.permute.xlu0 %3407
        %3409 = vrot.lane.b32.xlu0 %v3400, 16
        %v3410 = vpop.permute.xlu0 %3409
        %3411 = vrot.lane.b32.xlu0 %v3401, 16
        %v3412 = vpop.permute.xlu0 %3411
        %3413 = vrot.lane.b32.xlu0 %v3402, 16
        %v3414 = vpop.permute.xlu0 %3413
        %3415 = vrot.lane.b32.xlu0 %v3403, 16
        %v3416 = vpop.permute.xlu0 %3415
        %3417 = vrot.lane.b32.xlu0 %v3404, 16
        %v3418 = vpop.permute.xlu0 %3417
        %3419 = vrot.lane.b32.xlu0 %v3405, 16
        %v3420 = vpop.permute.xlu0 %3419
        %3421 = vrot.lane.b32.xlu0 %v3406, 16
        %v3422 = vpop.permute.xlu0 %3421
        %vm3423 = vcmp.lt.s32.totalorder %v647, 16
        %v3424 = vsel %vm3423, %v3420, %v3422
        %v3425 = vsel %vm3423, %v3418, %v3420
        %v3426 = vsel %vm3423, %v3416, %v3418
        %v3427 = vsel %vm3423, %v3414, %v3416
        %v3428 = vsel %vm3423, %v3412, %v3414
        %v3429 = vsel %vm3423, %v3410, %v3412
        %v3430 = vsel %vm3423, %v3408, %v3410
        %v3431 = vsel %vm3423, %v3422, %v3408
        %s3432 = scalar_lea.vmem %s1, 6
        %v3433 = vld [vmem:[%s3432] ss:$8 sm:$0xf]
        %v3434 = vld [vmem:[%s3432] ss:$8 sm:$0xf0]
        %v3435 = vor.u32 %v3433, %v3434
        %v3437 = vlaneseq
        %v3438 = vshrl.u32 %v3437, 7
        %v3439 = vsub.s32 0, %v3438
        %v3440 = vrot.slane %v3435, %v3439
        %v3441 = vlaneseq
        %v3442 = vshrl.u32 %v3441, 7
        %v3443 = vsub.s32 1, %v3442
        %v3444 = vrot.slane %v3435, %v3443
        %v3445 = vlaneseq
        %v3446 = vshrl.u32 %v3445, 7
        %v3447 = vsub.s32 2, %v3446
        %v3448 = vrot.slane %v3435, %v3447
        %v3449 = vlaneseq
        %v3450 = vshrl.u32 %v3449, 7
        %v3451 = vsub.s32 3, %v3450
        %v3452 = vrot.slane %v3435, %v3451
        %v3453 = vlaneseq
        %v3454 = vshrl.u32 %v3453, 7
        %v3455 = vsub.s32 4, %v3454
        %v3456 = vrot.slane %v3435, %v3455
        %v3457 = vlaneseq
        %v3458 = vshrl.u32 %v3457, 7
        %v3459 = vsub.s32 5, %v3458
        %v3460 = vrot.slane %v3435, %v3459
        %v3461 = vlaneseq
        %v3462 = vshrl.u32 %v3461, 7
        %v3463 = vsub.s32 6, %v3462
        %v3464 = vrot.slane %v3435, %v3463
        %v3465 = vlaneseq
        %v3466 = vshrl.u32 %v3465, 7
        %v3467 = vsub.s32 7, %v3466
        %v3468 = vrot.slane %v3435, %v3467
        %v3477 = vmul.f32 %v3431, %v3440
        %v3478 = vmul.f32 %v3430, %v3444
        %v3479 = vmul.f32 %v3429, %v3448
        %v3480 = vmul.f32 %v3428, %v3452
        %v3481 = vmul.f32 %v3427, %v3456
        %v3482 = vmul.f32 %v3426, %v3460
        %v3483 = vmul.f32 %v3425, %v3464
        %v3484 = vmul.f32 %v3424, %v3468
        %s3485 = scalar_lea.vmem %s5, 224
        %v3486 = vld [vmem:[%s3485] sm:$0xff]
        %3488 = vset.pattern.permute.xlu0 0
        %3489 = vperm.xlu0 %3488, %v3486
        %v3490 = vpop.permute.xlu0 %3489
        %v3492 = vmul.f32 %v3490, %v3330
        %v3493 = vmul.f32 %v3490, %v3331
        %v3494 = vmul.f32 %v3490, %v3332
        %v3495 = vmul.f32 %v3490, %v3333
        %v3496 = vmul.f32 %v3490, %v3334
        %v3497 = vmul.f32 %v3490, %v3335
        %v3498 = vmul.f32 %v3490, %v3336
        %v3499 = vmul.f32 %v3490, %v3337
        %s3500 = scalar_lea.vmem %s5, 248
        %v3501 = vld [vmem:[%s3500] sm:$0xff]
        %3503 = vset.pattern.permute.xlu0 0
        %3504 = vperm.xlu0 %3503, %v3501
        %v3505 = vpop.permute.xlu0 %3504
        %v3507 = vmul.f32 %v3505, %v3298
        %v3508 = vmul.f32 %v3505, %v3299
        %v3509 = vmul.f32 %v3505, %v3300
        %v3510 = vmul.f32 %v3505, %v3301
        %v3511 = vmul.f32 %v3505, %v3302
        %v3512 = vmul.f32 %v3505, %v3303
        %v3513 = vmul.f32 %v3505, %v3304
        %v3514 = vmul.f32 %v3505, %v3305
        %v3515 = vadd.f32 %v3492, %v3507
        %v3516 = vadd.f32 %v3493, %v3508
        %v3517 = vadd.f32 %v3494, %v3509
        %v3518 = vadd.f32 %v3495, %v3510
        %v3519 = vadd.f32 %v3496, %v3511
        %v3520 = vadd.f32 %v3497, %v3512
        %v3521 = vadd.f32 %v3498, %v3513
        %v3522 = vadd.f32 %v3499, %v3514
        %s3523 = scalar_lea.vmem %s5, 272
        %v3524 = vld [vmem:[%s3523] sm:$0xff]
        %3526 = vset.pattern.permute.xlu0 0
        %3527 = vperm.xlu0 %3526, %v3524
        %v3528 = vpop.permute.xlu0 %3527
        %v3530 = vmul.f32 %v3528, %v3338
        %v3531 = vmul.f32 %v3528, %v3339
        %v3532 = vmul.f32 %v3528, %v3340
        %v3533 = vmul.f32 %v3528, %v3341
        %v3534 = vmul.f32 %v3528, %v3342
        %v3535 = vmul.f32 %v3528, %v3343
        %v3536 = vmul.f32 %v3528, %v3344
        %v3537 = vmul.f32 %v3528, %v3345
        %v3538 = vadd.f32 %v3515, %v3530
        %v3539 = vadd.f32 %v3516, %v3531
        %v3540 = vadd.f32 %v3517, %v3532
        %v3541 = vadd.f32 %v3518, %v3533
        %v3542 = vadd.f32 %v3519, %v3534
        %v3543 = vadd.f32 %v3520, %v3535
        %v3544 = vadd.f32 %v3521, %v3536
        %v3545 = vadd.f32 %v3522, %v3537
        %3546 = vrot.lane.b32.xlu0 %v3538, 8
        %v3547 = vpop.permute.xlu0 %3546
        %3548 = vrot.lane.b32.xlu0 %v3539, 8
        %v3549 = vpop.permute.xlu0 %3548
        %3550 = vrot.lane.b32.xlu0 %v3540, 8
        %v3551 = vpop.permute.xlu0 %3550
        %3552 = vrot.lane.b32.xlu0 %v3541, 8
        %v3553 = vpop.permute.xlu0 %3552
        %3554 = vrot.lane.b32.xlu0 %v3542, 8
        %v3555 = vpop.permute.xlu0 %3554
        %3556 = vrot.lane.b32.xlu0 %v3543, 8
        %v3557 = vpop.permute.xlu0 %3556
        %3558 = vrot.lane.b32.xlu0 %v3544, 8
        %v3559 = vpop.permute.xlu0 %3558
        %3560 = vrot.lane.b32.xlu0 %v3545, 8
        %v3561 = vpop.permute.xlu0 %3560
        %v3562 = vsel %vm2573, %v3559, %v3561
        %v3563 = vsel %vm2573, %v3557, %v3559
        %v3564 = vsel %vm2573, %v3555, %v3557
        %v3565 = vsel %vm2573, %v3553, %v3555
        %v3566 = vsel %vm2573, %v3551, %v3553
        %v3567 = vsel %vm2573, %v3549, %v3551
        %v3568 = vsel %vm2573, %v3547, %v3549
        %v3569 = vsel %vm2573, %v3561, %v3547
        %v3570 = vmul.f32 %v3569, %v2590
        %v3571 = vmul.f32 %v3568, %v2594
        %v3572 = vmul.f32 %v3567, %v2598
        %v3573 = vmul.f32 %v3566, %v2602
        %v3574 = vmul.f32 %v3565, %v2606
        %v3575 = vmul.f32 %v3564, %v2610
        %v3576 = vmul.f32 %v3563, %v2614
        %v3577 = vmul.f32 %v3562, %v2618
        %v3578 = vadd.f32 %v3477, %v3570
        %v3579 = vadd.f32 %v3478, %v3571
        %v3580 = vadd.f32 %v3479, %v3572
        %v3581 = vadd.f32 %v3480, %v3573
        %v3582 = vadd.f32 %v3481, %v3574
        %v3583 = vadd.f32 %v3482, %v3575
        %v3584 = vadd.f32 %v3483, %v3576
        %v3585 = vadd.f32 %v3484, %v3577
        %s3586 = scalar_lea.vmem %s5, 232
        %v3587 = vld [vmem:[%s3586] sm:$0xff]
        %3589 = vset.pattern.permute.xlu0 0
        %3590 = vperm.xlu0 %3589, %v3587
        %v3591 = vpop.permute.xlu0 %3590
        %v3593 = vmul.f32 %v3591, %v3330
        %v3594 = vmul.f32 %v3591, %v3331
        %v3595 = vmul.f32 %v3591, %v3332
        %v3596 = vmul.f32 %v3591, %v3333
        %v3597 = vmul.f32 %v3591, %v3334
        %v3598 = vmul.f32 %v3591, %v3335
        %v3599 = vmul.f32 %v3591, %v3336
        %v3600 = vmul.f32 %v3591, %v3337
        %s3601 = scalar_lea.vmem %s5, 256
        %v3602 = vld [vmem:[%s3601] sm:$0xff]
        %3604 = vset.pattern.permute.xlu0 0
        %3605 = vperm.xlu0 %3604, %v3602
        %v3606 = vpop.permute.xlu0 %3605
        %v3608 = vmul.f32 %v3606, %v3298
        %v3609 = vmul.f32 %v3606, %v3299
        %v3610 = vmul.f32 %v3606, %v3300
        %v3611 = vmul.f32 %v3606, %v3301
        %v3612 = vmul.f32 %v3606, %v3302
        %v3613 = vmul.f32 %v3606, %v3303
        %v3614 = vmul.f32 %v3606, %v3304
        %v3615 = vmul.f32 %v3606, %v3305
        %v3616 = vadd.f32 %v3593, %v3608
        %v3617 = vadd.f32 %v3594, %v3609
        %v3618 = vadd.f32 %v3595, %v3610
        %v3619 = vadd.f32 %v3596, %v3611
        %v3620 = vadd.f32 %v3597, %v3612
        %v3621 = vadd.f32 %v3598, %v3613
        %v3622 = vadd.f32 %v3599, %v3614
        %v3623 = vadd.f32 %v3600, %v3615
        %s3624 = scalar_lea.vmem %s5, 280
        %v3625 = vld [vmem:[%s3624] sm:$0xff]
        %3627 = vset.pattern.permute.xlu0 0
        %3628 = vperm.xlu0 %3627, %v3625
        %v3629 = vpop.permute.xlu0 %3628
        %v3631 = vmul.f32 %v3629, %v3338
        %v3632 = vmul.f32 %v3629, %v3339
        %v3633 = vmul.f32 %v3629, %v3340
        %v3634 = vmul.f32 %v3629, %v3341
        %v3635 = vmul.f32 %v3629, %v3342
        %v3636 = vmul.f32 %v3629, %v3343
        %v3637 = vmul.f32 %v3629, %v3344
        %v3638 = vmul.f32 %v3629, %v3345
        %v3639 = vadd.f32 %v3616, %v3631
        %v3640 = vadd.f32 %v3617, %v3632
        %v3641 = vadd.f32 %v3618, %v3633
        %v3642 = vadd.f32 %v3619, %v3634
        %v3643 = vadd.f32 %v3620, %v3635
        %v3644 = vadd.f32 %v3621, %v3636
        %v3645 = vadd.f32 %v3622, %v3637
        %v3646 = vadd.f32 %v3623, %v3638
        %v3647 = vadd.f32 %v3578, %v3639
        %v3648 = vadd.f32 %v3579, %v3640
        %v3649 = vadd.f32 %v3580, %v3641
        %v3650 = vadd.f32 %v3581, %v3642
        %v3651 = vadd.f32 %v3582, %v3643
        %v3652 = vadd.f32 %v3583, %v3644
        %v3653 = vadd.f32 %v3584, %v3645
        %v3654 = vadd.f32 %v3585, %v3646
        %s3655 = scalar_lea.vmem %s6, 24
        %v3656 = vld [vmem:[%s3655] sm:$0xff]
        %3658 = vset.pattern.permute.xlu0 0
        %3659 = vperm.xlu0 %3658, %v3656
        %v3660 = vpop.permute.xlu0 %3659
        %v3662 = vadd.f32 %v3647, %v3660
        %v3663 = vadd.f32 %v3648, %v3660
        %v3664 = vadd.f32 %v3649, %v3660
        %v3665 = vadd.f32 %v3650, %v3660
        %v3666 = vadd.f32 %v3651, %v3660
        %v3667 = vadd.f32 %v3652, %v3660
        %v3668 = vadd.f32 %v3653, %v3660
        %v3669 = vadd.f32 %v3654, %v3660
        %vm3670 = vcmp.ge.f32.partialorder %v3662, 0.0
        %vm3671 = vcmp.ge.f32.partialorder %v3663, 0.0
        %vm3672 = vcmp.ge.f32.partialorder %v3664, 0.0
        %vm3673 = vcmp.ge.f32.partialorder %v3665, 0.0
        %vm3674 = vcmp.ge.f32.partialorder %v3666, 0.0
        %vm3675 = vcmp.ge.f32.partialorder %v3667, 0.0
        %vm3676 = vcmp.ge.f32.partialorder %v3668, 0.0
        %vm3677 = vcmp.ge.f32.partialorder %v3669, 0.0
        %s3678 = scalar_lea.vmem %s7, 24
        %v3679 = vld [vmem:[%s3678] sm:$0xff]
        %3681 = vset.pattern.permute.xlu0 0
        %3682 = vperm.xlu0 %3681, %v3679
        %v3683 = vpop.permute.xlu0 %3682
        %v3685 = vmul.f32 %v3683, %v3662
        %v3686 = vmul.f32 %v3683, %v3663
        %v3687 = vmul.f32 %v3683, %v3664
        %v3688 = vmul.f32 %v3683, %v3665
        %v3689 = vmul.f32 %v3683, %v3666
        %v3690 = vmul.f32 %v3683, %v3667
        %v3691 = vmul.f32 %v3683, %v3668
        %v3692 = vmul.f32 %v3683, %v3669
        %v3693 = vsel %vm3670, %v3662, %v3685
        %v3694 = vsel %vm3671, %v3663, %v3686
        %v3695 = vsel %vm3672, %v3664, %v3687
        %v3696 = vsel %vm3673, %v3665, %v3688
        %v3697 = vsel %vm3674, %v3666, %v3689
        %v3698 = vsel %vm3675, %v3667, %v3690
        %v3699 = vsel %vm3676, %v3668, %v3691
        %v3700 = vsel %vm3677, %v3669, %v3692
        %s3701 = scalar_lea.vmem %s8, 12
        %v3702 = vld [vmem:[%s3701] sm:$0xf]
        %v3703 = vpack.c.bf16 %v3693, %v3693
        %v3704 = vpack.c.bf16 %v3694, %v3694
        %v3705 = vpack.c.bf16 %v3695, %v3695
        %v3706 = vpack.c.bf16 %v3696, %v3696
        %v3707 = vpack.c.bf16 %v3697, %v3697
        %v3708 = vpack.c.bf16 %v3698, %v3698
        %v3709 = vpack.c.bf16 %v3699, %v3699
        %v3710 = vpack.c.bf16 %v3700, %v3700
        %s3711 = scalar_lea.vmem %s9, 24
        %v3712 = vld [vmem:[%s3711] sm:$0xff]
        %3714 = vset.pattern.permute.xlu0 0
        %3715 = vperm.xlu0 %3714, %v3712
        %v3716 = vpop.permute.xlu0 %3715
        %v3719 = vsel %vm407, %v3702, 0
        %v3722 = vsel %vm411, %v3703, 0
        %v3725 = vsel %vm411, %v3704, 0
        %v3728 = vsel %vm411, %v3705, 0
        %v3731 = vsel %vm411, %v3706, 0
        %v3734 = vsel %vm411, %v3707, 0
        %v3737 = vsel %vm411, %v3708, 0
        %v3740 = vsel %vm411, %v3709, 0
        %v3743 = vsel %vm411, %v3710, 0
        %3745 = vmatprep.subr.bf16.mxu0 %v3725
        %3746 = vmatpush1.bf16.msra.mxu0 %v3722
        %3747 = vmatprep.subr.bf16.mxu0 0
        %3748 = vmatpush1.bf16.msra.mxu0 0
        %3749 = vmatprep.subr.bf16.mxu0 0
        %3750 = vmatpush1.bf16.msra.mxu0 0
        %3751 = vmatprep.subr.bf16.mxu0 0
        %3752 = vmatpush1.bf16.msra.mxu0 0
        %3753 = vmatprep.subr.bf16.mxu0 0
        %3754 = vmatpush1.bf16.msra.mxu0 0
        %3755 = vmatprep.subr.bf16.mxu0 0
        %3756 = vmatpush1.bf16.msra.mxu0 0
        %3757 = vmatprep.subr.bf16.mxu0 0
        %3758 = vmatpush1.bf16.msra.mxu0 0
        %3759 = vmatprep.subr.bf16.mxu0 0
        %3760 = vmatpush1.bf16.msra.mxu0 0
        %3761 = vmatprep.subr.bf16.mxu0 0
        %3762 = vmatpush1.bf16.msra.mxu0 0
        %3763 = vmatprep.subr.bf16.mxu0 0
        %3764 = vmatpush1.bf16.msra.mxu0 0
        %3765 = vmatprep.subr.bf16.mxu0 0
        %3766 = vmatpush1.bf16.msra.mxu0 0
        %3767 = vmatprep.subr.bf16.mxu0 0
        %3768 = vmatpush1.bf16.msra.mxu0 0
        %3769 = vmatprep.subr.bf16.mxu0 0
        %3770 = vmatpush1.bf16.msra.mxu0 0
        %3771 = vmatprep.subr.bf16.mxu0 0
        %3772 = vmatpush1.bf16.msra.mxu0 0
        %3773 = vmatprep.subr.bf16.mxu0 0
        %3774 = vmatpush1.bf16.msra.mxu0 0
        %3775 = vmatprep.subr.bf16.mxu0 0
        %3776 = vmatpush1.bf16.msra.mxu0 0
        %3777 = vmatprep.mubr.bf16.mxu0 0
        %3778 = vmatmul.mubr.bf16.gmra.mrb[0].mxu0 %v3719
        %v3779 = vpop.f32.mrb[0].mxu0
        %v3780 = vadd.f32 %v3716, %v3779
        %v3781 = vpop.f32.mrb[0].mxu0
        %v3782 = vadd.f32 %v3716, %v3781
        %v3783 = vpop.f32.mrb[0].mxu0
        %v3784 = vpop.f32.mrb[0].mxu0
        %3785 = vdwg.mxu0
        %3786 = vmatprep.subr.bf16.mxu0 %v3731
        %3787 = vmatpush1.bf16.msra.mxu0 %v3728
        %3788 = vmatprep.subr.bf16.mxu0 0
        %3789 = vmatpush1.bf16.msra.mxu0 0
        %3790 = vmatprep.subr.bf16.mxu0 0
        %3791 = vmatpush1.bf16.msra.mxu0 0
        %3792 = vmatprep.subr.bf16.mxu0 0
        %3793 = vmatpush1.bf16.msra.mxu0 0
        %3794 = vmatprep.subr.bf16.mxu0 0
        %3795 = vmatpush1.bf16.msra.mxu0 0
        %3796 = vmatprep.subr.bf16.mxu0 0
        %3797 = vmatpush1.bf16.msra.mxu0 0
        %3798 = vmatprep.subr.bf16.mxu0 0
        %3799 = vmatpush1.bf16.msra.mxu0 0
        %3800 = vmatprep.subr.bf16.mxu0 0
        %3801 = vmatpush1.bf16.msra.mxu0 0
        %3802 = vmatprep.subr.bf16.mxu0 0
        %3803 = vmatpush1.bf16.msra.mxu0 0
        %3804 = vmatprep.subr.bf16.mxu0 0
        %3805 = vmatpush1.bf16.msra.mxu0 0
        %3806 = vmatprep.subr.bf16.mxu0 0
        %3807 = vmatpush1.bf16.msra.mxu0 0
        %3808 = vmatprep.subr.bf16.mxu0 0
        %3809 = vmatpush1.bf16.msra.mxu0 0
        %3810 = vmatprep.subr.bf16.mxu0 0
        %3811 = vmatpush1.bf16.msra.mxu0 0
        %3812 = vmatprep.subr.bf16.mxu0 0
        %3813 = vmatpush1.bf16.msra.mxu0 0
        %3814 = vmatprep.subr.bf16.mxu0 0
        %3815 = vmatpush1.bf16.msra.mxu0 0
        %3816 = vmatprep.subr.bf16.mxu0 0
        %3817 = vmatpush1.bf16.msra.mxu0 0
        %3818 = vmatprep.mubr.bf16.mxu0 0
        %3819 = vmatmul.mubr.bf16.gmra.mrb[0].mxu0 %v3719
        %v3820 = vpop.f32.mrb[0].mxu0
        %v3821 = vadd.f32 %v3716, %v3820
        %v3822 = vpop.f32.mrb[0].mxu0
        %v3823 = vadd.f32 %v3716, %v3822
        %v3824 = vpop.f32.mrb[0].mxu0
        %v3825 = vpop.f32.mrb[0].mxu0
        %3826 = vdwg.mxu0
        %3827 = vmatprep.subr.bf16.mxu0 %v3737
        %3828 = vmatpush1.bf16.msra.mxu0 %v3734
        %3829 = vmatprep.subr.bf16.mxu0 0
        %3830 = vmatpush1.bf16.msra.mxu0 0
        %3831 = vmatprep.subr.bf16.mxu0 0
        %3832 = vmatpush1.bf16.msra.mxu0 0
        %3833 = vmatprep.subr.bf16.mxu0 0
        %3834 = vmatpush1.bf16.msra.mxu0 0
        %3835 = vmatprep.subr.bf16.mxu0 0
        %3836 = vmatpush1.bf16.msra.mxu0 0
        %3837 = vmatprep.subr.bf16.mxu0 0
        %3838 = vmatpush1.bf16.msra.mxu0 0
        %3839 = vmatprep.subr.bf16.mxu0 0
        %3840 = vmatpush1.bf16.msra.mxu0 0
        %3841 = vmatprep.subr.bf16.mxu0 0
        %3842 = vmatpush1.bf16.msra.mxu0 0
        %3843 = vmatprep.subr.bf16.mxu0 0
        %3844 = vmatpush1.bf16.msra.mxu0 0
        %3845 = vmatprep.subr.bf16.mxu0 0
        %3846 = vmatpush1.bf16.msra.mxu0 0
        %3847 = vmatprep.subr.bf16.mxu0 0
        %3848 = vmatpush1.bf16.msra.mxu0 0
        %3849 = vmatprep.subr.bf16.mxu0 0
        %3850 = vmatpush1.bf16.msra.mxu0 0
        %3851 = vmatprep.subr.bf16.mxu0 0
        %3852 = vmatpush1.bf16.msra.mxu0 0
        %3853 = vmatprep.subr.bf16.mxu0 0
        %3854 = vmatpush1.bf16.msra.mxu0 0
        %3855 = vmatprep.subr.bf16.mxu0 0
        %3856 = vmatpush1.bf16.msra.mxu0 0
        %3857 = vmatprep.subr.bf16.mxu0 0
        %3858 = vmatpush1.bf16.msra.mxu0 0
        %3859 = vmatprep.mubr.bf16.mxu0 0
        %3860 = vmatmul.mubr.bf16.gmra.mrb[0].mxu0 %v3719
        %v3861 = vpop.f32.mrb[0].mxu0
        %v3862 = vadd.f32 %v3716, %v3861
        %v3863 = vpop.f32.mrb[0].mxu0
        %v3864 = vadd.f32 %v3716, %v3863
        %v3865 = vpop.f32.mrb[0].mxu0
        %v3866 = vpop.f32.mrb[0].mxu0
        %3867 = vdwg.mxu0
        %3868 = vmatprep.subr.bf16.mxu0 %v3743
        %3869 = vmatpush1.bf16.msra.mxu0 %v3740
        %3870 = vmatprep.subr.bf16.mxu0 0
        %3871 = vmatpush1.bf16.msra.mxu0 0
        %3872 = vmatprep.subr.bf16.mxu0 0
        %3873 = vmatpush1.bf16.msra.mxu0 0
        %3874 = vmatprep.subr.bf16.mxu0 0
        %3875 = vmatpush1.bf16.msra.mxu0 0
        %3876 = vmatprep.subr.bf16.mxu0 0
        %3877 = vmatpush1.bf16.msra.mxu0 0
        %3878 = vmatprep.subr.bf16.mxu0 0
        %3879 = vmatpush1.bf16.msra.mxu0 0
        %3880 = vmatprep.subr.bf16.mxu0 0
        %3881 = vmatpush1.bf16.msra.mxu0 0
        %3882 = vmatprep.subr.bf16.mxu0 0
        %3883 = vmatpush1.bf16.msra.mxu0 0
        %3884 = vmatprep.subr.bf16.mxu0 0
        %3885 = vmatpush1.bf16.msra.mxu0 0
        %3886 = vmatprep.subr.bf16.mxu0 0
        %3887 = vmatpush1.bf16.msra.mxu0 0
        %3888 = vmatprep.subr.bf16.mxu0 0
        %3889 = vmatpush1.bf16.msra.mxu0 0
        %3890 = vmatprep.subr.bf16.mxu0 0
        %3891 = vmatpush1.bf16.msra.mxu0 0
        %3892 = vmatprep.subr.bf16.mxu0 0
        %3893 = vmatpush1.bf16.msra.mxu0 0
        %3894 = vmatprep.subr.bf16.mxu0 0
        %3895 = vmatpush1.bf16.msra.mxu0 0
        %3896 = vmatprep.subr.bf16.mxu0 0
        %3897 = vmatpush1.bf16.msra.mxu0 0
        %3898 = vmatprep.subr.bf16.mxu0 0
        %3899 = vmatpush1.bf16.msra.mxu0 0
        %3900 = vmatprep.mubr.bf16.mxu0 0
        %3901 = vmatmul.mubr.bf16.gmra.mrb[0].mxu0 %v3719
        %v3902 = vpop.f32.mrb[0].mxu0
        %v3903 = vadd.f32 %v3716, %v3902
        %v3904 = vpop.f32.mrb[0].mxu0
        %v3905 = vadd.f32 %v3716, %v3904
        %v3906 = vpop.f32.mrb[0].mxu0
        %v3907 = vpop.f32.mrb[0].mxu0
        %3908 = vdwg.mxu0
        %v3909 = vadd.f32 %v3780, %v3059
        %v3910 = vadd.f32 %v3782, %v3060
        %v3911 = vadd.f32 %v3821, %v3061
        %v3912 = vadd.f32 %v3823, %v3062
        %v3913 = vadd.f32 %v3862, %v3063
        %v3914 = vadd.f32 %v3864, %v3064
        %v3915 = vadd.f32 %v3903, %v3065
        %v3916 = vadd.f32 %v3905, %v3066
        %s3917 = scalar_lea.vmem %s2, 16
        %v3918 = vld [vmem:[%s3917] sm:$0xf]
        %v3919 = vpack.c.bf16 %v3909, %v3909
        %v3920 = vpack.c.bf16 %v3910, %v3910
        %v3921 = vpack.c.bf16 %v3911, %v3911
        %v3922 = vpack.c.bf16 %v3912, %v3912
        %v3923 = vpack.c.bf16 %v3913, %v3913
        %v3924 = vpack.c.bf16 %v3914, %v3914
        %v3925 = vpack.c.bf16 %v3915, %v3915
        %v3926 = vpack.c.bf16 %v3916, %v3916
        %s3927 = scalar_lea.vmem %s3, 32
        %v3928 = vld [vmem:[%s3927] sm:$0xff]
        %3930 = vset.pattern.permute.xlu0 0
        %3931 = vperm.xlu0 %3930, %v3928
        %v3932 = vpop.permute.xlu0 %3931
        %v3935 = vsel %vm407, %v3918, 0
        %v3938 = vsel %vm411, %v3919, 0
        %v3941 = vsel %vm411, %v3920, 0
        %v3944 = vsel %vm411, %v3921, 0
        %v3947 = vsel %vm411, %v3922, 0
        %v3950 = vsel %vm411, %v3923, 0
        %v3953 = vsel %vm411, %v3924, 0
        %v3956 = vsel %vm411, %v3925, 0
        %v3959 = vsel %vm411, %v3926, 0
        %3961 = vmatprep.subr.bf16.mxu0 %v3941
        %3962 = vmatpush1.bf16.msra.mxu0 %v3938
        %3963 = vmatprep.subr.bf16.mxu0 0
        %3964 = vmatpush1.bf16.msra.mxu0 0
        %3965 = vmatprep.subr.bf16.mxu0 0
        %3966 = vmatpush1.bf16.msra.mxu0 0
        %3967 = vmatprep.subr.bf16.mxu0 0
        %3968 = vmatpush1.bf16.msra.mxu0 0
        %3969 = vmatprep.subr.bf16.mxu0 0
        %3970 = vmatpush1.bf16.msra.mxu0 0
        %3971 = vmatprep.subr.bf16.mxu0 0
        %3972 = vmatpush1.bf16.msra.mxu0 0
        %3973 = vmatprep.subr.bf16.mxu0 0
        %3974 = vmatpush1.bf16.msra.mxu0 0
        %3975 = vmatprep.subr.bf16.mxu0 0
        %3976 = vmatpush1.bf16.msra.mxu0 0
        %3977 = vmatprep.subr.bf16.mxu0 0
        %3978 = vmatpush1.bf16.msra.mxu0 0
        %3979 = vmatprep.subr.bf16.mxu0 0
        %3980 = vmatpush1.bf16.msra.mxu0 0
        %3981 = vmatprep.subr.bf16.mxu0 0
        %3982 = vmatpush1.bf16.msra.mxu0 0
        %3983 = vmatprep.subr.bf16.mxu0 0
        %3984 = vmatpush1.bf16.msra.mxu0 0
        %3985 = vmatprep.subr.bf16.mxu0 0
        %3986 = vmatpush1.bf16.msra.mxu0 0
        %3987 = vmatprep.subr.bf16.mxu0 0
        %3988 = vmatpush1.bf16.msra.mxu0 0
        %3989 = vmatprep.subr.bf16.mxu0 0
        %3990 = vmatpush1.bf16.msra.mxu0 0
        %3991 = vmatprep.subr.bf16.mxu0 0
        %3992 = vmatpush1.bf16.msra.mxu0 0
        %3993 = vmatprep.mubr.bf16.mxu0 0
        %3994 = vmatmul.mubr.bf16.gmra.mrb[0].mxu0 %v3935
        %v3995 = vpop.f32.mrb[0].mxu0
        %v3996 = vadd.f32 %v3932, %v3995
        %v3997 = vpop.f32.mrb[0].mxu0
        %v3998 = vadd.f32 %v3932, %v3997
        %v3999 = vpop.f32.mrb[0].mxu0
        %v4000 = vpop.f32.mrb[0].mxu0
        %4001 = vdwg.mxu0
        %4002 = vmatprep.subr.bf16.mxu0 %v3947
        %4003 = vmatpush1.bf16.msra.mxu0 %v3944
        %4004 = vmatprep.subr.bf16.mxu0 0
        %4005 = vmatpush1.bf16.msra.mxu0 0
        %4006 = vmatprep.subr.bf16.mxu0 0
        %4007 = vmatpush1.bf16.msra.mxu0 0
        %4008 = vmatprep.subr.bf16.mxu0 0
        %4009 = vmatpush1.bf16.msra.mxu0 0
        %4010 = vmatprep.subr.bf16.mxu0 0
        %4011 = vmatpush1.bf16.msra.mxu0 0
        %4012 = vmatprep.subr.bf16.mxu0 0
        %4013 = vmatpush1.bf16.msra.mxu0 0
        %4014 = vmatprep.subr.bf16.mxu0 0
        %4015 = vmatpush1.bf16.msra.mxu0 0
        %4016 = vmatprep.subr.bf16.mxu0 0
        %4017 = vmatpush1.bf16.msra.mxu0 0
        %4018 = vmatprep.subr.bf16.mxu0 0
        %4019 = vmatpush1.bf16.msra.mxu0 0
        %4020 = vmatprep.subr.bf16.mxu0 0
        %4021 = vmatpush1.bf16.msra.mxu0 0
        %4022 = vmatprep.subr.bf16.mxu0 0
        %4023 = vmatpush1.bf16.msra.mxu0 0
        %4024 = vmatprep.subr.bf16.mxu0 0
        %4025 = vmatpush1.bf16.msra.mxu0 0
        %4026 = vmatprep.subr.bf16.mxu0 0
        %4027 = vmatpush1.bf16.msra.mxu0 0
        %4028 = vmatprep.subr.bf16.mxu0 0
        %4029 = vmatpush1.bf16.msra.mxu0 0
        %4030 = vmatprep.subr.bf16.mxu0 0
        %4031 = vmatpush1.bf16.msra.mxu0 0
        %4032 = vmatprep.subr.bf16.mxu0 0
        %4033 = vmatpush1.bf16.msra.mxu0 0
        %4034 = vmatprep.mubr.bf16.mxu0 0
        %4035 = vmatmul.mubr.bf16.gmra.mrb[0].mxu0 %v3935
        %v4036 = vpop.f32.mrb[0].mxu0
        %v4037 = vadd.f32 %v3932, %v4036
        %v4038 = vpop.f32.mrb[0].mxu0
        %v4039 = vadd.f32 %v3932, %v4038
        %v4040 = vpop.f32.mrb[0].mxu0
        %v4041 = vpop.f32.mrb[0].mxu0
        %4042 = vdwg.mxu0
        %4043 = vmatprep.subr.bf16.mxu0 %v3953
        %4044 = vmatpush1.bf16.msra.mxu0 %v3950
        %4045 = vmatprep.subr.bf16.mxu0 0
        %4046 = vmatpush1.bf16.msra.mxu0 0
        %4047 = vmatprep.subr.bf16.mxu0 0
        %4048 = vmatpush1.bf16.msra.mxu0 0
        %4049 = vmatprep.subr.bf16.mxu0 0
        %4050 = vmatpush1.bf16.msra.mxu0 0
        %4051 = vmatprep.subr.bf16.mxu0 0
        %4052 = vmatpush1.bf16.msra.mxu0 0
        %4053 = vmatprep.subr.bf16.mxu0 0
        %4054 = vmatpush1.bf16.msra.mxu0 0
        %4055 = vmatprep.subr.bf16.mxu0 0
        %4056 = vmatpush1.bf16.msra.mxu0 0
        %4057 = vmatprep.subr.bf16.mxu0 0
        %4058 = vmatpush1.bf16.msra.mxu0 0
        %4059 = vmatprep.subr.bf16.mxu0 0
        %4060 = vmatpush1.bf16.msra.mxu0 0
        %4061 = vmatprep.subr.bf16.mxu0 0
        %4062 = vmatpush1.bf16.msra.mxu0 0
        %4063 = vmatprep.subr.bf16.mxu0 0
        %4064 = vmatpush1.bf16.msra.mxu0 0
        %4065 = vmatprep.subr.bf16.mxu0 0
        %4066 = vmatpush1.bf16.msra.mxu0 0
        %4067 = vmatprep.subr.bf16.mxu0 0
        %4068 = vmatpush1.bf16.msra.mxu0 0
        %4069 = vmatprep.subr.bf16.mxu0 0
        %4070 = vmatpush1.bf16.msra.mxu0 0
        %4071 = vmatprep.subr.bf16.mxu0 0
        %4072 = vmatpush1.bf16.msra.mxu0 0
        %4073 = vmatprep.subr.bf16.mxu0 0
        %4074 = vmatpush1.bf16.msra.mxu0 0
        %4075 = vmatprep.mubr.bf16.mxu0 0
        %4076 = vmatmul.mubr.bf16.gmra.mrb[0].mxu0 %v3935
        %v4077 = vpop.f32.mrb[0].mxu0
        %v4078 = vadd.f32 %v3932, %v4077
        %v4079 = vpop.f32.mrb[0].mxu0
        %v4080 = vadd.f32 %v3932, %v4079
        %v4081 = vpop.f32.mrb[0].mxu0
        %v4082 = vpop.f32.mrb[0].mxu0
        %4083 = vdwg.mxu0
        %4084 = vmatprep.subr.bf16.mxu0 %v3959
        %4085 = vmatpush1.bf16.msra.mxu0 %v3956
        %4086 = vmatprep.subr.bf16.mxu0 0
        %4087 = vmatpush1.bf16.msra.mxu0 0
        %4088 = vmatprep.subr.bf16.mxu0 0
        %4089 = vmatpush1.bf16.msra.mxu0 0
        %4090 = vmatprep.subr.bf16.mxu0 0
        %4091 = vmatpush1.bf16.msra.mxu0 0
        %4092 = vmatprep.subr.bf16.mxu0 0
        %4093 = vmatpush1.bf16.msra.mxu0 0
        %4094 = vmatprep.subr.bf16.mxu0 0
        %4095 = vmatpush1.bf16.msra.mxu0 0
        %4096 = vmatprep.subr.bf16.mxu0 0
        %4097 = vmatpush1.bf16.msra.mxu0 0
        %4098 = vmatprep.subr.bf16.mxu0 0
        %4099 = vmatpush1.bf16.msra.mxu0 0
        %4100 = vmatprep.subr.bf16.mxu0 0
        %4101 = vmatpush1.bf16.msra.mxu0 0
        %4102 = vmatprep.subr.bf16.mxu0 0
        %4103 = vmatpush1.bf16.msra.mxu0 0
        %4104 = vmatprep.subr.bf16.mxu0 0
        %4105 = vmatpush1.bf16.msra.mxu0 0
        %4106 = vmatprep.subr.bf16.mxu0 0
        %4107 = vmatpush1.bf16.msra.mxu0 0
        %4108 = vmatprep.subr.bf16.mxu0 0
        %4109 = vmatpush1.bf16.msra.mxu0 0
        %4110 = vmatprep.subr.bf16.mxu0 0
        %4111 = vmatpush1.bf16.msra.mxu0 0
        %4112 = vmatprep.subr.bf16.mxu0 0
        %4113 = vmatpush1.bf16.msra.mxu0 0
        %4114 = vmatprep.subr.bf16.mxu0 0
        %4115 = vmatpush1.bf16.msra.mxu0 0
        %4116 = vmatprep.mubr.bf16.mxu0 0
        %4117 = vmatmul.mubr.bf16.gmra.mrb[0].mxu0 %v3935
        %v4118 = vpop.f32.mrb[0].mxu0
        %v4119 = vadd.f32 %v3932, %v4118
        %v4120 = vpop.f32.mrb[0].mxu0
        %v4121 = vadd.f32 %v3932, %v4120
        %v4122 = vpop.f32.mrb[0].mxu0
        %v4123 = vpop.f32.mrb[0].mxu0
        %4124 = vdwg.mxu0
        %vm4125 = vcmp.ge.f32.partialorder %v3996, 0.0
        %vm4126 = vcmp.ge.f32.partialorder %v3998, 0.0
        %vm4127 = vcmp.ge.f32.partialorder %v4037, 0.0
        %vm4128 = vcmp.ge.f32.partialorder %v4039, 0.0
        %vm4129 = vcmp.ge.f32.partialorder %v4078, 0.0
        %vm4130 = vcmp.ge.f32.partialorder %v4080, 0.0
        %vm4131 = vcmp.ge.f32.partialorder %v4119, 0.0
        %vm4132 = vcmp.ge.f32.partialorder %v4121, 0.0
        %s4133 = scalar_lea.vmem %s4, 32
        %v4134 = vld [vmem:[%s4133] sm:$0xff]
        %4136 = vset.pattern.permute.xlu0 0
        %4137 = vperm.xlu0 %4136, %v4134
        %v4138 = vpop.permute.xlu0 %4137
        %v4140 = vmul.f32 %v4138, %v3996
        %v4141 = vmul.f32 %v4138, %v3998
        %v4142 = vmul.f32 %v4138, %v4037
        %v4143 = vmul.f32 %v4138, %v4039
        %v4144 = vmul.f32 %v4138, %v4078
        %v4145 = vmul.f32 %v4138, %v4080
        %v4146 = vmul.f32 %v4138, %v4119
        %v4147 = vmul.f32 %v4138, %v4121
        %v4148 = vsel %vm4125, %v3996, %v4140
        %v4149 = vsel %vm4126, %v3998, %v4141
        %v4150 = vsel %vm4127, %v4037, %v4142
        %v4151 = vsel %vm4128, %v4039, %v4143
        %v4152 = vsel %vm4129, %v4078, %v4144
        %v4153 = vsel %vm4130, %v4080, %v4145
        %v4154 = vsel %vm4131, %v4119, %v4146
        %v4155 = vsel %vm4132, %v4121, %v4147
        %4156 = vrot.lane.b32.xlu0 %v4148, 64
        %v4157 = vpop.permute.xlu0 %4156
        %4158 = vrot.lane.b32.xlu0 %v4149, 64
        %v4159 = vpop.permute.xlu0 %4158
        %4160 = vrot.lane.b32.xlu0 %v4150, 64
        %v4161 = vpop.permute.xlu0 %4160
        %4162 = vrot.lane.b32.xlu0 %v4151, 64
        %v4163 = vpop.permute.xlu0 %4162
        %4164 = vrot.lane.b32.xlu0 %v4152, 64
        %v4165 = vpop.permute.xlu0 %4164
        %4166 = vrot.lane.b32.xlu0 %v4153, 64
        %v4167 = vpop.permute.xlu0 %4166
        %4168 = vrot.lane.b32.xlu0 %v4154, 64
        %v4169 = vpop.permute.xlu0 %4168
        %4170 = vrot.lane.b32.xlu0 %v4155, 64
        %v4171 = vpop.permute.xlu0 %4170
        %v4172 = vsel %vm648, %v4169, %v4171
        %v4173 = vsel %vm648, %v4167, %v4169
        %v4174 = vsel %vm648, %v4165, %v4167
        %v4175 = vsel %vm648, %v4163, %v4165
        %v4176 = vsel %vm648, %v4161, %v4163
        %v4177 = vsel %vm648, %v4159, %v4161
        %v4178 = vsel %vm648, %v4157, %v4159
        %v4179 = vsel %vm648, %v4171, %v4157
        %v4180 = vmul.f32 %v661, %v4179
        %v4181 = vmul.f32 %v665, %v4178
        %v4182 = vmul.f32 %v669, %v4177
        %v4183 = vmul.f32 %v673, %v4176
        %v4184 = vmul.f32 %v677, %v4175
        %v4185 = vmul.f32 %v681, %v4174
        %v4186 = vmul.f32 %v685, %v4173
        %v4187 = vmul.f32 %v689, %v4172
        %v4188 = vmul.f32 %v710, %v4178
        %v4189 = vmul.f32 %v714, %v4177
        %v4190 = vmul.f32 %v718, %v4176
        %v4191 = vmul.f32 %v722, %v4175
        %v4192 = vmul.f32 %v726, %v4174
        %v4193 = vmul.f32 %v730, %v4173
        %v4194 = vmul.f32 %v734, %v4172
        %v4195 = vmul.f32 %v738, %v4179
        %s4196 = scalar_lea.vmem %s5, 288
        %v4197 = vld [vmem:[%s4196] sm:$0xff]
        %4199 = vset.pattern.permute.xlu0 0
        %4200 = vperm.xlu0 %4199, %v4197
        %v4201 = vpop.permute.xlu0 %4200
        %v4203 = vmul.f32 %v4201, %v4180
        %v4204 = vmul.f32 %v4201, %v4181
        %v4205 = vmul.f32 %v4201, %v4182
        %v4206 = vmul.f32 %v4201, %v4183
        %v4207 = vmul.f32 %v4201, %v4184
        %v4208 = vmul.f32 %v4201, %v4185
        %v4209 = vmul.f32 %v4201, %v4186
        %v4210 = vmul.f32 %v4201, %v4187
        %s4211 = scalar_lea.vmem %s5, 312
        %v4212 = vld [vmem:[%s4211] sm:$0xff]
        %4214 = vset.pattern.permute.xlu0 0
        %4215 = vperm.xlu0 %4214, %v4212
        %v4216 = vpop.permute.xlu0 %4215
        %v4218 = vmul.f32 %v4216, %v4148
        %v4219 = vmul.f32 %v4216, %v4149
        %v4220 = vmul.f32 %v4216, %v4150
        %v4221 = vmul.f32 %v4216, %v4151
        %v4222 = vmul.f32 %v4216, %v4152
        %v4223 = vmul.f32 %v4216, %v4153
        %v4224 = vmul.f32 %v4216, %v4154
        %v4225 = vmul.f32 %v4216, %v4155
        %v4226 = vadd.f32 %v4203, %v4218
        %v4227 = vadd.f32 %v4204, %v4219
        %v4228 = vadd.f32 %v4205, %v4220
        %v4229 = vadd.f32 %v4206, %v4221
        %v4230 = vadd.f32 %v4207, %v4222
        %v4231 = vadd.f32 %v4208, %v4223
        %v4232 = vadd.f32 %v4209, %v4224
        %v4233 = vadd.f32 %v4210, %v4225
        %s4234 = scalar_lea.vmem %s5, 336
        %v4235 = vld [vmem:[%s4234] sm:$0xff]
        %4237 = vset.pattern.permute.xlu0 0
        %4238 = vperm.xlu0 %4237, %v4235
        %v4239 = vpop.permute.xlu0 %4238
        %v4241 = vmul.f32 %v4239, %v4188
        %v4242 = vmul.f32 %v4239, %v4189
        %v4243 = vmul.f32 %v4239, %v4190
        %v4244 = vmul.f32 %v4239, %v4191
        %v4245 = vmul.f32 %v4239, %v4192
        %v4246 = vmul.f32 %v4239, %v4193
        %v4247 = vmul.f32 %v4239, %v4194
        %v4248 = vmul.f32 %v4239, %v4195
        %v4249 = vadd.f32 %v4226, %v4241
        %v4250 = vadd.f32 %v4227, %v4242
        %v4251 = vadd.f32 %v4228, %v4243
        %v4252 = vadd.f32 %v4229, %v4244
        %v4253 = vadd.f32 %v4230, %v4245
        %v4254 = vadd.f32 %v4231, %v4246
        %v4255 = vadd.f32 %v4232, %v4247
        %v4256 = vadd.f32 %v4233, %v4248
        %4257 = vrot.lane.b32.xlu0 %v4249, 32
        %v4258 = vpop.permute.xlu0 %4257
        %4259 = vrot.lane.b32.xlu0 %v4250, 32
        %v4260 = vpop.permute.xlu0 %4259
        %4261 = vrot.lane.b32.xlu0 %v4251, 32
        %v4262 = vpop.permute.xlu0 %4261
        %4263 = vrot.lane.b32.xlu0 %v4252, 32
        %v4264 = vpop.permute.xlu0 %4263
        %4265 = vrot.lane.b32.xlu0 %v4253, 32
        %v4266 = vpop.permute.xlu0 %4265
        %4267 = vrot.lane.b32.xlu0 %v4254, 32
        %v4268 = vpop.permute.xlu0 %4267
        %4269 = vrot.lane.b32.xlu0 %v4255, 32
        %v4270 = vpop.permute.xlu0 %4269
        %4271 = vrot.lane.b32.xlu0 %v4256, 32
        %v4272 = vpop.permute.xlu0 %4271
        %vm4273 = vcmp.lt.s32.totalorder %v647, 32
        %v4274 = vsel %vm4273, %v4270, %v4272
        %v4275 = vsel %vm4273, %v4268, %v4270
        %v4276 = vsel %vm4273, %v4266, %v4268
        %v4277 = vsel %vm4273, %v4264, %v4266
        %v4278 = vsel %vm4273, %v4262, %v4264
        %v4279 = vsel %vm4273, %v4260, %v4262
        %v4280 = vsel %vm4273, %v4258, %v4260
        %v4281 = vsel %vm4273, %v4272, %v4258
        %s4282 = scalar_lea.vmem %s1, 7
        %v4283 = vld [vmem:[%s4282] ss:$8 sm:$0xf]
        %v4284 = vld [vmem:[%s4282] ss:$8 sm:$0xf0]
        %v4285 = vor.u32 %v4283, %v4284
        %v4287 = vlaneseq
        %v4288 = vshrl.u32 %v4287, 7
        %v4289 = vsub.s32 0, %v4288
        %v4290 = vrot.slane %v4285, %v4289
        %v4291 = vlaneseq
        %v4292 = vshrl.u32 %v4291, 7
        %v4293 = vsub.s32 1, %v4292
        %v4294 = vrot.slane %v4285, %v4293
        %v4295 = vlaneseq
        %v4296 = vshrl.u32 %v4295, 7
        %v4297 = vsub.s32 2, %v4296
        %v4298 = vrot.slane %v4285, %v4297
        %v4299 = vlaneseq
        %v4300 = vshrl.u32 %v4299, 7
        %v4301 = vsub.s32 3, %v4300
        %v4302 = vrot.slane %v4285, %v4301
        %v4303 = vlaneseq
        %v4304 = vshrl.u32 %v4303, 7
        %v4305 = vsub.s32 4, %v4304
        %v4306 = vrot.slane %v4285, %v4305
        %v4307 = vlaneseq
        %v4308 = vshrl.u32 %v4307, 7
        %v4309 = vsub.s32 5, %v4308
        %v4310 = vrot.slane %v4285, %v4309
        %v4311 = vlaneseq
        %v4312 = vshrl.u32 %v4311, 7
        %v4313 = vsub.s32 6, %v4312
        %v4314 = vrot.slane %v4285, %v4313
        %v4315 = vlaneseq
        %v4316 = vshrl.u32 %v4315, 7
        %v4317 = vsub.s32 7, %v4316
        %v4318 = vrot.slane %v4285, %v4317
        %v4327 = vmul.f32 %v4281, %v4290
        %v4328 = vmul.f32 %v4280, %v4294
        %v4329 = vmul.f32 %v4279, %v4298
        %v4330 = vmul.f32 %v4278, %v4302
        %v4331 = vmul.f32 %v4277, %v4306
        %v4332 = vmul.f32 %v4276, %v4310
        %v4333 = vmul.f32 %v4275, %v4314
        %v4334 = vmul.f32 %v4274, %v4318
        %s4335 = scalar_lea.vmem %s5, 296
        %v4336 = vld [vmem:[%s4335] sm:$0xff]
        %4338 = vset.pattern.permute.xlu0 0
        %4339 = vperm.xlu0 %4338, %v4336
        %v4340 = vpop.permute.xlu0 %4339
        %v4342 = vmul.f32 %v4340, %v4180
        %v4343 = vmul.f32 %v4340, %v4181
        %v4344 = vmul.f32 %v4340, %v4182
        %v4345 = vmul.f32 %v4340, %v4183
        %v4346 = vmul.f32 %v4340, %v4184
        %v4347 = vmul.f32 %v4340, %v4185
        %v4348 = vmul.f32 %v4340, %v4186
        %v4349 = vmul.f32 %v4340, %v4187
        %s4350 = scalar_lea.vmem %s5, 320
        %v4351 = vld [vmem:[%s4350] sm:$0xff]
        %4353 = vset.pattern.permute.xlu0 0
        %4354 = vperm.xlu0 %4353, %v4351
        %v4355 = vpop.permute.xlu0 %4354
        %v4357 = vmul.f32 %v4355, %v4148
        %v4358 = vmul.f32 %v4355, %v4149
        %v4359 = vmul.f32 %v4355, %v4150
        %v4360 = vmul.f32 %v4355, %v4151
        %v4361 = vmul.f32 %v4355, %v4152
        %v4362 = vmul.f32 %v4355, %v4153
        %v4363 = vmul.f32 %v4355, %v4154
        %v4364 = vmul.f32 %v4355, %v4155
        %v4365 = vadd.f32 %v4342, %v4357
        %v4366 = vadd.f32 %v4343, %v4358
        %v4367 = vadd.f32 %v4344, %v4359
        %v4368 = vadd.f32 %v4345, %v4360
        %v4369 = vadd.f32 %v4346, %v4361
        %v4370 = vadd.f32 %v4347, %v4362
        %v4371 = vadd.f32 %v4348, %v4363
        %v4372 = vadd.f32 %v4349, %v4364
        %s4373 = scalar_lea.vmem %s5, 344
        %v4374 = vld [vmem:[%s4373] sm:$0xff]
        %4376 = vset.pattern.permute.xlu0 0
        %4377 = vperm.xlu0 %4376, %v4374
        %v4378 = vpop.permute.xlu0 %4377
        %v4380 = vmul.f32 %v4378, %v4188
        %v4381 = vmul.f32 %v4378, %v4189
        %v4382 = vmul.f32 %v4378, %v4190
        %v4383 = vmul.f32 %v4378, %v4191
        %v4384 = vmul.f32 %v4378, %v4192
        %v4385 = vmul.f32 %v4378, %v4193
        %v4386 = vmul.f32 %v4378, %v4194
        %v4387 = vmul.f32 %v4378, %v4195
        %v4388 = vadd.f32 %v4365, %v4380
        %v4389 = vadd.f32 %v4366, %v4381
        %v4390 = vadd.f32 %v4367, %v4382
        %v4391 = vadd.f32 %v4368, %v4383
        %v4392 = vadd.f32 %v4369, %v4384
        %v4393 = vadd.f32 %v4370, %v4385
        %v4394 = vadd.f32 %v4371, %v4386
        %v4395 = vadd.f32 %v4372, %v4387
        %4396 = vrot.lane.b32.xlu0 %v4388, 16
        %v4397 = vpop.permute.xlu0 %4396
        %4398 = vrot.lane.b32.xlu0 %v4389, 16
        %v4399 = vpop.permute.xlu0 %4398
        %4400 = vrot.lane.b32.xlu0 %v4390, 16
        %v4401 = vpop.permute.xlu0 %4400
        %4402 = vrot.lane.b32.xlu0 %v4391, 16
        %v4403 = vpop.permute.xlu0 %4402
        %4404 = vrot.lane.b32.xlu0 %v4392, 16
        %v4405 = vpop.permute.xlu0 %4404
        %4406 = vrot.lane.b32.xlu0 %v4393, 16
        %v4407 = vpop.permute.xlu0 %4406
        %4408 = vrot.lane.b32.xlu0 %v4394, 16
        %v4409 = vpop.permute.xlu0 %4408
        %4410 = vrot.lane.b32.xlu0 %v4395, 16
        %v4411 = vpop.permute.xlu0 %4410
        %v4412 = vsel %vm3423, %v4409, %v4411
        %v4413 = vsel %vm3423, %v4407, %v4409
        %v4414 = vsel %vm3423, %v4405, %v4407
        %v4415 = vsel %vm3423, %v4403, %v4405
        %v4416 = vsel %vm3423, %v4401, %v4403
        %v4417 = vsel %vm3423, %v4399, %v4401
        %v4418 = vsel %vm3423, %v4397, %v4399
        %v4419 = vsel %vm3423, %v4411, %v4397
        %v4420 = vmul.f32 %v4419, %v3440
        %v4421 = vmul.f32 %v4418, %v3444
        %v4422 = vmul.f32 %v4417, %v3448
        %v4423 = vmul.f32 %v4416, %v3452
        %v4424 = vmul.f32 %v4415, %v3456
        %v4425 = vmul.f32 %v4414, %v3460
        %v4426 = vmul.f32 %v4413, %v3464
        %v4427 = vmul.f32 %v4412, %v3468
        %v4428 = vadd.f32 %v4327, %v4420
        %v4429 = vadd.f32 %v4328, %v4421
        %v4430 = vadd.f32 %v4329, %v4422
        %v4431 = vadd.f32 %v4330, %v4423
        %v4432 = vadd.f32 %v4331, %v4424
        %v4433 = vadd.f32 %v4332, %v4425
        %v4434 = vadd.f32 %v4333, %v4426
        %v4435 = vadd.f32 %v4334, %v4427
        %s4436 = scalar_lea.vmem %s5, 304
        %v4437 = vld [vmem:[%s4436] sm:$0xff]
        %4439 = vset.pattern.permute.xlu0 0
        %4440 = vperm.xlu0 %4439, %v4437
        %v4441 = vpop.permute.xlu0 %4440
        %v4443 = vmul.f32 %v4441, %v4180
        %v4444 = vmul.f32 %v4441, %v4181
        %v4445 = vmul.f32 %v4441, %v4182
        %v4446 = vmul.f32 %v4441, %v4183
        %v4447 = vmul.f32 %v4441, %v4184
        %v4448 = vmul.f32 %v4441, %v4185
        %v4449 = vmul.f32 %v4441, %v4186
        %v4450 = vmul.f32 %v4441, %v4187
        %s4451 = scalar_lea.vmem %s5, 328
        %v4452 = vld [vmem:[%s4451] sm:$0xff]
        %4454 = vset.pattern.permute.xlu0 0
        %4455 = vperm.xlu0 %4454, %v4452
        %v4456 = vpop.permute.xlu0 %4455
        %v4458 = vmul.f32 %v4456, %v4148
        %v4459 = vmul.f32 %v4456, %v4149
        %v4460 = vmul.f32 %v4456, %v4150
        %v4461 = vmul.f32 %v4456, %v4151
        %v4462 = vmul.f32 %v4456, %v4152
        %v4463 = vmul.f32 %v4456, %v4153
        %v4464 = vmul.f32 %v4456, %v4154
        %v4465 = vmul.f32 %v4456, %v4155
        %v4466 = vadd.f32 %v4443, %v4458
        %v4467 = vadd.f32 %v4444, %v4459
        %v4468 = vadd.f32 %v4445, %v4460
        %v4469 = vadd.f32 %v4446, %v4461
        %v4470 = vadd.f32 %v4447, %v4462
        %v4471 = vadd.f32 %v4448, %v4463
        %v4472 = vadd.f32 %v4449, %v4464
        %v4473 = vadd.f32 %v4450, %v4465
        %s4474 = scalar_lea.vmem %s5, 352
        %v4475 = vld [vmem:[%s4474] sm:$0xff]
        %4477 = vset.pattern.permute.xlu0 0
        %4478 = vperm.xlu0 %4477, %v4475
        %v4479 = vpop.permute.xlu0 %4478
        %v4481 = vmul.f32 %v4479, %v4188
        %v4482 = vmul.f32 %v4479, %v4189
        %v4483 = vmul.f32 %v4479, %v4190
        %v4484 = vmul.f32 %v4479, %v4191
        %v4485 = vmul.f32 %v4479, %v4192
        %v4486 = vmul.f32 %v4479, %v4193
        %v4487 = vmul.f32 %v4479, %v4194
        %v4488 = vmul.f32 %v4479, %v4195
        %v4489 = vadd.f32 %v4466, %v4481
        %v4490 = vadd.f32 %v4467, %v4482
        %v4491 = vadd.f32 %v4468, %v4483
        %v4492 = vadd.f32 %v4469, %v4484
        %v4493 = vadd.f32 %v4470, %v4485
        %v4494 = vadd.f32 %v4471, %v4486
        %v4495 = vadd.f32 %v4472, %v4487
        %v4496 = vadd.f32 %v4473, %v4488
        %v4497 = vadd.f32 %v4428, %v4489
        %v4498 = vadd.f32 %v4429, %v4490
        %v4499 = vadd.f32 %v4430, %v4491
        %v4500 = vadd.f32 %v4431, %v4492
        %v4501 = vadd.f32 %v4432, %v4493
        %v4502 = vadd.f32 %v4433, %v4494
        %v4503 = vadd.f32 %v4434, %v4495
        %v4504 = vadd.f32 %v4435, %v4496
        %s4505 = scalar_lea.vmem %s6, 32
        %v4506 = vld [vmem:[%s4505] sm:$0xff]
        %4508 = vset.pattern.permute.xlu0 0
        %4509 = vperm.xlu0 %4508, %v4506
        %v4510 = vpop.permute.xlu0 %4509
        %v4512 = vadd.f32 %v4497, %v4510
        %v4513 = vadd.f32 %v4498, %v4510
        %v4514 = vadd.f32 %v4499, %v4510
        %v4515 = vadd.f32 %v4500, %v4510
        %v4516 = vadd.f32 %v4501, %v4510
        %v4517 = vadd.f32 %v4502, %v4510
        %v4518 = vadd.f32 %v4503, %v4510
        %v4519 = vadd.f32 %v4504, %v4510
        %vm4520 = vcmp.ge.f32.partialorder %v4512, 0.0
        %vm4521 = vcmp.ge.f32.partialorder %v4513, 0.0
        %vm4522 = vcmp.ge.f32.partialorder %v4514, 0.0
        %vm4523 = vcmp.ge.f32.partialorder %v4515, 0.0
        %vm4524 = vcmp.ge.f32.partialorder %v4516, 0.0
        %vm4525 = vcmp.ge.f32.partialorder %v4517, 0.0
        %vm4526 = vcmp.ge.f32.partialorder %v4518, 0.0
        %vm4527 = vcmp.ge.f32.partialorder %v4519, 0.0
        %s4528 = scalar_lea.vmem %s7, 32
        %v4529 = vld [vmem:[%s4528] sm:$0xff]
        %4531 = vset.pattern.permute.xlu0 0
        %4532 = vperm.xlu0 %4531, %v4529
        %v4533 = vpop.permute.xlu0 %4532
        %v4535 = vmul.f32 %v4533, %v4512
        %v4536 = vmul.f32 %v4533, %v4513
        %v4537 = vmul.f32 %v4533, %v4514
        %v4538 = vmul.f32 %v4533, %v4515
        %v4539 = vmul.f32 %v4533, %v4516
        %v4540 = vmul.f32 %v4533, %v4517
        %v4541 = vmul.f32 %v4533, %v4518
        %v4542 = vmul.f32 %v4533, %v4519
        %v4543 = vsel %vm4520, %v4512, %v4535
        %v4544 = vsel %vm4521, %v4513, %v4536
        %v4545 = vsel %vm4522, %v4514, %v4537
        %v4546 = vsel %vm4523, %v4515, %v4538
        %v4547 = vsel %vm4524, %v4516, %v4539
        %v4548 = vsel %vm4525, %v4517, %v4540
        %v4549 = vsel %vm4526, %v4518, %v4541
        %v4550 = vsel %vm4527, %v4519, %v4542
        %s4551 = scalar_lea.vmem %s8, 16
        %v4552 = vld [vmem:[%s4551] sm:$0xf]
        %v4553 = vpack.c.bf16 %v4543, %v4543
        %v4554 = vpack.c.bf16 %v4544, %v4544
        %v4555 = vpack.c.bf16 %v4545, %v4545
        %v4556 = vpack.c.bf16 %v4546, %v4546
        %v4557 = vpack.c.bf16 %v4547, %v4547
        %v4558 = vpack.c.bf16 %v4548, %v4548
        %v4559 = vpack.c.bf16 %v4549, %v4549
        %v4560 = vpack.c.bf16 %v4550, %v4550
        %s4561 = scalar_lea.vmem %s9, 32
        %v4562 = vld [vmem:[%s4561] sm:$0xff]
        %4564 = vset.pattern.permute.xlu0 0
        %4565 = vperm.xlu0 %4564, %v4562
        %v4566 = vpop.permute.xlu0 %4565
        %v4569 = vsel %vm407, %v4552, 0
        %v4572 = vsel %vm411, %v4553, 0
        %v4575 = vsel %vm411, %v4554, 0
        %v4578 = vsel %vm411, %v4555, 0
        %v4581 = vsel %vm411, %v4556, 0
        %v4584 = vsel %vm411, %v4557, 0
        %v4587 = vsel %vm411, %v4558, 0
        %v4590 = vsel %vm411, %v4559, 0
        %v4593 = vsel %vm411, %v4560, 0
        %4595 = vmatprep.subr.bf16.mxu0 %v4575
        %4596 = vmatpush1.bf16.msra.mxu0 %v4572
        %4597 = vmatprep.subr.bf16.mxu0 0
        %4598 = vmatpush1.bf16.msra.mxu0 0
        %4599 = vmatprep.subr.bf16.mxu0 0
        %4600 = vmatpush1.bf16.msra.mxu0 0
        %4601 = vmatprep.subr.bf16.mxu0 0
        %4602 = vmatpush1.bf16.msra.mxu0 0
        %4603 = vmatprep.subr.bf16.mxu0 0
        %4604 = vmatpush1.bf16.msra.mxu0 0
        %4605 = vmatprep.subr.bf16.mxu0 0
        %4606 = vmatpush1.bf16.msra.mxu0 0
        %4607 = vmatprep.subr.bf16.mxu0 0
        %4608 = vmatpush1.bf16.msra.mxu0 0
        %4609 = vmatprep.subr.bf16.mxu0 0
        %4610 = vmatpush1.bf16.msra.mxu0 0
        %4611 = vmatprep.subr.bf16.mxu0 0
        %4612 = vmatpush1.bf16.msra.mxu0 0
        %4613 = vmatprep.subr.bf16.mxu0 0
        %4614 = vmatpush1.bf16.msra.mxu0 0
        %4615 = vmatprep.subr.bf16.mxu0 0
        %4616 = vmatpush1.bf16.msra.mxu0 0
        %4617 = vmatprep.subr.bf16.mxu0 0
        %4618 = vmatpush1.bf16.msra.mxu0 0
        %4619 = vmatprep.subr.bf16.mxu0 0
        %4620 = vmatpush1.bf16.msra.mxu0 0
        %4621 = vmatprep.subr.bf16.mxu0 0
        %4622 = vmatpush1.bf16.msra.mxu0 0
        %4623 = vmatprep.subr.bf16.mxu0 0
        %4624 = vmatpush1.bf16.msra.mxu0 0
        %4625 = vmatprep.subr.bf16.mxu0 0
        %4626 = vmatpush1.bf16.msra.mxu0 0
        %4627 = vmatprep.mubr.bf16.mxu0 0
        %4628 = vmatmul.mubr.bf16.gmra.mrb[0].mxu0 %v4569
        %v4629 = vpop.f32.mrb[0].mxu0
        %v4630 = vadd.f32 %v4566, %v4629
        %v4631 = vpop.f32.mrb[0].mxu0
        %v4632 = vadd.f32 %v4566, %v4631
        %v4633 = vpop.f32.mrb[0].mxu0
        %v4634 = vpop.f32.mrb[0].mxu0
        %4635 = vdwg.mxu0
        %4636 = vmatprep.subr.bf16.mxu0 %v4581
        %4637 = vmatpush1.bf16.msra.mxu0 %v4578
        %4638 = vmatprep.subr.bf16.mxu0 0
        %4639 = vmatpush1.bf16.msra.mxu0 0
        %4640 = vmatprep.subr.bf16.mxu0 0
        %4641 = vmatpush1.bf16.msra.mxu0 0
        %4642 = vmatprep.subr.bf16.mxu0 0
        %4643 = vmatpush1.bf16.msra.mxu0 0
        %4644 = vmatprep.subr.bf16.mxu0 0
        %4645 = vmatpush1.bf16.msra.mxu0 0
        %4646 = vmatprep.subr.bf16.mxu0 0
        %4647 = vmatpush1.bf16.msra.mxu0 0
        %4648 = vmatprep.subr.bf16.mxu0 0
        %4649 = vmatpush1.bf16.msra.mxu0 0
        %4650 = vmatprep.subr.bf16.mxu0 0
        %4651 = vmatpush1.bf16.msra.mxu0 0
        %4652 = vmatprep.subr.bf16.mxu0 0
        %4653 = vmatpush1.bf16.msra.mxu0 0
        %4654 = vmatprep.subr.bf16.mxu0 0
        %4655 = vmatpush1.bf16.msra.mxu0 0
        %4656 = vmatprep.subr.bf16.mxu0 0
        %4657 = vmatpush1.bf16.msra.mxu0 0
        %4658 = vmatprep.subr.bf16.mxu0 0
        %4659 = vmatpush1.bf16.msra.mxu0 0
        %4660 = vmatprep.subr.bf16.mxu0 0
        %4661 = vmatpush1.bf16.msra.mxu0 0
        %4662 = vmatprep.subr.bf16.mxu0 0
        %4663 = vmatpush1.bf16.msra.mxu0 0
        %4664 = vmatprep.subr.bf16.mxu0 0
        %4665 = vmatpush1.bf16.msra.mxu0 0
        %4666 = vmatprep.subr.bf16.mxu0 0
        %4667 = vmatpush1.bf16.msra.mxu0 0
        %4668 = vmatprep.mubr.bf16.mxu0 0
        %4669 = vmatmul.mubr.bf16.gmra.mrb[0].mxu0 %v4569
        %v4670 = vpop.f32.mrb[0].mxu0
        %v4671 = vadd.f32 %v4566, %v4670
        %v4672 = vpop.f32.mrb[0].mxu0
        %v4673 = vadd.f32 %v4566, %v4672
        %v4674 = vpop.f32.mrb[0].mxu0
        %v4675 = vpop.f32.mrb[0].mxu0
        %4676 = vdwg.mxu0
        %4677 = vmatprep.subr.bf16.mxu0 %v4587
        %4678 = vmatpush1.bf16.msra.mxu0 %v4584
        %4679 = vmatprep.subr.bf16.mxu0 0
        %4680 = vmatpush1.bf16.msra.mxu0 0
        %4681 = vmatprep.subr.bf16.mxu0 0
        %4682 = vmatpush1.bf16.msra.mxu0 0
        %4683 = vmatprep.subr.bf16.mxu0 0
        %4684 = vmatpush1.bf16.msra.mxu0 0
        %4685 = vmatprep.subr.bf16.mxu0 0
        %4686 = vmatpush1.bf16.msra.mxu0 0
        %4687 = vmatprep.subr.bf16.mxu0 0
        %4688 = vmatpush1.bf16.msra.mxu0 0
        %4689 = vmatprep.subr.bf16.mxu0 0
        %4690 = vmatpush1.bf16.msra.mxu0 0
        %4691 = vmatprep.subr.bf16.mxu0 0
        %4692 = vmatpush1.bf16.msra.mxu0 0
        %4693 = vmatprep.subr.bf16.mxu0 0
        %4694 = vmatpush1.bf16.msra.mxu0 0
        %4695 = vmatprep.subr.bf16.mxu0 0
        %4696 = vmatpush1.bf16.msra.mxu0 0
        %4697 = vmatprep.subr.bf16.mxu0 0
        %4698 = vmatpush1.bf16.msra.mxu0 0
        %4699 = vmatprep.subr.bf16.mxu0 0
        %4700 = vmatpush1.bf16.msra.mxu0 0
        %4701 = vmatprep.subr.bf16.mxu0 0
        %4702 = vmatpush1.bf16.msra.mxu0 0
        %4703 = vmatprep.subr.bf16.mxu0 0
        %4704 = vmatpush1.bf16.msra.mxu0 0
        %4705 = vmatprep.subr.bf16.mxu0 0
        %4706 = vmatpush1.bf16.msra.mxu0 0
        %4707 = vmatprep.subr.bf16.mxu0 0
        %4708 = vmatpush1.bf16.msra.mxu0 0
        %4709 = vmatprep.mubr.bf16.mxu0 0
        %4710 = vmatmul.mubr.bf16.gmra.mrb[0].mxu0 %v4569
        %v4711 = vpop.f32.mrb[0].mxu0
        %v4712 = vadd.f32 %v4566, %v4711
        %v4713 = vpop.f32.mrb[0].mxu0
        %v4714 = vadd.f32 %v4566, %v4713
        %v4715 = vpop.f32.mrb[0].mxu0
        %v4716 = vpop.f32.mrb[0].mxu0
        %4717 = vdwg.mxu0
        %4718 = vmatprep.subr.bf16.mxu0 %v4593
        %4719 = vmatpush1.bf16.msra.mxu0 %v4590
        %4720 = vmatprep.subr.bf16.mxu0 0
        %4721 = vmatpush1.bf16.msra.mxu0 0
        %4722 = vmatprep.subr.bf16.mxu0 0
        %4723 = vmatpush1.bf16.msra.mxu0 0
        %4724 = vmatprep.subr.bf16.mxu0 0
        %4725 = vmatpush1.bf16.msra.mxu0 0
        %4726 = vmatprep.subr.bf16.mxu0 0
        %4727 = vmatpush1.bf16.msra.mxu0 0
        %4728 = vmatprep.subr.bf16.mxu0 0
        %4729 = vmatpush1.bf16.msra.mxu0 0
        %4730 = vmatprep.subr.bf16.mxu0 0
        %4731 = vmatpush1.bf16.msra.mxu0 0
        %4732 = vmatprep.subr.bf16.mxu0 0
        %4733 = vmatpush1.bf16.msra.mxu0 0
        %4734 = vmatprep.subr.bf16.mxu0 0
        %4735 = vmatpush1.bf16.msra.mxu0 0
        %4736 = vmatprep.subr.bf16.mxu0 0
        %4737 = vmatpush1.bf16.msra.mxu0 0
        %4738 = vmatprep.subr.bf16.mxu0 0
        %4739 = vmatpush1.bf16.msra.mxu0 0
        %4740 = vmatprep.subr.bf16.mxu0 0
        %4741 = vmatpush1.bf16.msra.mxu0 0
        %4742 = vmatprep.subr.bf16.mxu0 0
        %4743 = vmatpush1.bf16.msra.mxu0 0
        %4744 = vmatprep.subr.bf16.mxu0 0
        %4745 = vmatpush1.bf16.msra.mxu0 0
        %4746 = vmatprep.subr.bf16.mxu0 0
        %4747 = vmatpush1.bf16.msra.mxu0 0
        %4748 = vmatprep.subr.bf16.mxu0 0
        %4749 = vmatpush1.bf16.msra.mxu0 0
        %4750 = vmatprep.mubr.bf16.mxu0 0
        %4751 = vmatmul.mubr.bf16.gmra.mrb[0].mxu0 %v4569
        %v4752 = vpop.f32.mrb[0].mxu0
        %v4753 = vadd.f32 %v4566, %v4752
        %v4754 = vpop.f32.mrb[0].mxu0
        %v4755 = vadd.f32 %v4566, %v4754
        %v4756 = vpop.f32.mrb[0].mxu0
        %v4757 = vpop.f32.mrb[0].mxu0
        %4758 = vdwg.mxu0
        %v4759 = vadd.f32 %v4630, %v3909
        %v4760 = vadd.f32 %v4632, %v3910
        %v4761 = vadd.f32 %v4671, %v3911
        %v4762 = vadd.f32 %v4673, %v3912
        %v4763 = vadd.f32 %v4712, %v3913
        %v4764 = vadd.f32 %v4714, %v3914
        %v4765 = vadd.f32 %v4753, %v3915
        %v4766 = vadd.f32 %v4755, %v3916
        %s4767 = scalar_lea.vmem %s2, 20
        %v4768 = vld [vmem:[%s4767] sm:$0xf]
        %v4769 = vpack.c.bf16 %v4759, %v4759
        %v4770 = vpack.c.bf16 %v4760, %v4760
        %v4771 = vpack.c.bf16 %v4761, %v4761
        %v4772 = vpack.c.bf16 %v4762, %v4762
        %v4773 = vpack.c.bf16 %v4763, %v4763
        %v4774 = vpack.c.bf16 %v4764, %v4764
        %v4775 = vpack.c.bf16 %v4765, %v4765
        %v4776 = vpack.c.bf16 %v4766, %v4766
        %s4777 = scalar_lea.vmem %s3, 40
        %v4778 = vld [vmem:[%s4777] sm:$0xff]
        %4780 = vset.pattern.permute.xlu0 0
        %4781 = vperm.xlu0 %4780, %v4778
        %v4782 = vpop.permute.xlu0 %4781
        %v4785 = vsel %vm407, %v4768, 0
        %v4788 = vsel %vm411, %v4769, 0
        %v4791 = vsel %vm411, %v4770, 0
        %v4794 = vsel %vm411, %v4771, 0
        %v4797 = vsel %vm411, %v4772, 0
        %v4800 = vsel %vm411, %v4773, 0
        %v4803 = vsel %vm411, %v4774, 0
        %v4806 = vsel %vm411, %v4775, 0
        %v4809 = vsel %vm411, %v4776, 0
        %4811 = vmatprep.subr.bf16.mxu0 %v4791
        %4812 = vmatpush1.bf16.msra.mxu0 %v4788
        %4813 = vmatprep.subr.bf16.mxu0 0
        %4814 = vmatpush1.bf16.msra.mxu0 0
        %4815 = vmatprep.subr.bf16.mxu0 0
        %4816 = vmatpush1.bf16.msra.mxu0 0
        %4817 = vmatprep.subr.bf16.mxu0 0
        %4818 = vmatpush1.bf16.msra.mxu0 0
        %4819 = vmatprep.subr.bf16.mxu0 0
        %4820 = vmatpush1.bf16.msra.mxu0 0
        %4821 = vmatprep.subr.bf16.mxu0 0
        %4822 = vmatpush1.bf16.msra.mxu0 0
        %4823 = vmatprep.subr.bf16.mxu0 0
        %4824 = vmatpush1.bf16.msra.mxu0 0
        %4825 = vmatprep.subr.bf16.mxu0 0
        %4826 = vmatpush1.bf16.msra.mxu0 0
        %4827 = vmatprep.subr.bf16.mxu0 0
        %4828 = vmatpush1.bf16.msra.mxu0 0
        %4829 = vmatprep.subr.bf16.mxu0 0
        %4830 = vmatpush1.bf16.msra.mxu0 0
        %4831 = vmatprep.subr.bf16.mxu0 0
        %4832 = vmatpush1.bf16.msra.mxu0 0
        %4833 = vmatprep.subr.bf16.mxu0 0
        %4834 = vmatpush1.bf16.msra.mxu0 0
        %4835 = vmatprep.subr.bf16.mxu0 0
        %4836 = vmatpush1.bf16.msra.mxu0 0
        %4837 = vmatprep.subr.bf16.mxu0 0
        %4838 = vmatpush1.bf16.msra.mxu0 0
        %4839 = vmatprep.subr.bf16.mxu0 0
        %4840 = vmatpush1.bf16.msra.mxu0 0
        %4841 = vmatprep.subr.bf16.mxu0 0
        %4842 = vmatpush1.bf16.msra.mxu0 0
        %4843 = vmatprep.mubr.bf16.mxu0 0
        %4844 = vmatmul.mubr.bf16.gmra.mrb[0].mxu0 %v4785
        %v4845 = vpop.f32.mrb[0].mxu0
        %v4846 = vadd.f32 %v4782, %v4845
        %v4847 = vpop.f32.mrb[0].mxu0
        %v4848 = vadd.f32 %v4782, %v4847
        %v4849 = vpop.f32.mrb[0].mxu0
        %v4850 = vpop.f32.mrb[0].mxu0
        %4851 = vdwg.mxu0
        %4852 = vmatprep.subr.bf16.mxu0 %v4797
        %4853 = vmatpush1.bf16.msra.mxu0 %v4794
        %4854 = vmatprep.subr.bf16.mxu0 0
        %4855 = vmatpush1.bf16.msra.mxu0 0
        %4856 = vmatprep.subr.bf16.mxu0 0
        %4857 = vmatpush1.bf16.msra.mxu0 0
        %4858 = vmatprep.subr.bf16.mxu0 0
        %4859 = vmatpush1.bf16.msra.mxu0 0
        %4860 = vmatprep.subr.bf16.mxu0 0
        %4861 = vmatpush1.bf16.msra.mxu0 0
        %4862 = vmatprep.subr.bf16.mxu0 0
        %4863 = vmatpush1.bf16.msra.mxu0 0
        %4864 = vmatprep.subr.bf16.mxu0 0
        %4865 = vmatpush1.bf16.msra.mxu0 0
        %4866 = vmatprep.subr.bf16.mxu0 0
        %4867 = vmatpush1.bf16.msra.mxu0 0
        %4868 = vmatprep.subr.bf16.mxu0 0
        %4869 = vmatpush1.bf16.msra.mxu0 0
        %4870 = vmatprep.subr.bf16.mxu0 0
        %4871 = vmatpush1.bf16.msra.mxu0 0
        %4872 = vmatprep.subr.bf16.mxu0 0
        %4873 = vmatpush1.bf16.msra.mxu0 0
        %4874 = vmatprep.subr.bf16.mxu0 0
        %4875 = vmatpush1.bf16.msra.mxu0 0
        %4876 = vmatprep.subr.bf16.mxu0 0
        %4877 = vmatpush1.bf16.msra.mxu0 0
        %4878 = vmatprep.subr.bf16.mxu0 0
        %4879 = vmatpush1.bf16.msra.mxu0 0
        %4880 = vmatprep.subr.bf16.mxu0 0
        %4881 = vmatpush1.bf16.msra.mxu0 0
        %4882 = vmatprep.subr.bf16.mxu0 0
        %4883 = vmatpush1.bf16.msra.mxu0 0
        %4884 = vmatprep.mubr.bf16.mxu0 0
        %4885 = vmatmul.mubr.bf16.gmra.mrb[0].mxu0 %v4785
        %v4886 = vpop.f32.mrb[0].mxu0
        %v4887 = vadd.f32 %v4782, %v4886
        %v4888 = vpop.f32.mrb[0].mxu0
        %v4889 = vadd.f32 %v4782, %v4888
        %v4890 = vpop.f32.mrb[0].mxu0
        %v4891 = vpop.f32.mrb[0].mxu0
        %4892 = vdwg.mxu0
        %4893 = vmatprep.subr.bf16.mxu0 %v4803
        %4894 = vmatpush1.bf16.msra.mxu0 %v4800
        %4895 = vmatprep.subr.bf16.mxu0 0
        %4896 = vmatpush1.bf16.msra.mxu0 0
        %4897 = vmatprep.subr.bf16.mxu0 0
        %4898 = vmatpush1.bf16.msra.mxu0 0
        %4899 = vmatprep.subr.bf16.mxu0 0
        %4900 = vmatpush1.bf16.msra.mxu0 0
        %4901 = vmatprep.subr.bf16.mxu0 0
        %4902 = vmatpush1.bf16.msra.mxu0 0
        %4903 = vmatprep.subr.bf16.mxu0 0
        %4904 = vmatpush1.bf16.msra.mxu0 0
        %4905 = vmatprep.subr.bf16.mxu0 0
        %4906 = vmatpush1.bf16.msra.mxu0 0
        %4907 = vmatprep.subr.bf16.mxu0 0
        %4908 = vmatpush1.bf16.msra.mxu0 0
        %4909 = vmatprep.subr.bf16.mxu0 0
        %4910 = vmatpush1.bf16.msra.mxu0 0
        %4911 = vmatprep.subr.bf16.mxu0 0
        %4912 = vmatpush1.bf16.msra.mxu0 0
        %4913 = vmatprep.subr.bf16.mxu0 0
        %4914 = vmatpush1.bf16.msra.mxu0 0
        %4915 = vmatprep.subr.bf16.mxu0 0
        %4916 = vmatpush1.bf16.msra.mxu0 0
        %4917 = vmatprep.subr.bf16.mxu0 0
        %4918 = vmatpush1.bf16.msra.mxu0 0
        %4919 = vmatprep.subr.bf16.mxu0 0
        %4920 = vmatpush1.bf16.msra.mxu0 0
        %4921 = vmatprep.subr.bf16.mxu0 0
        %4922 = vmatpush1.bf16.msra.mxu0 0
        %4923 = vmatprep.subr.bf16.mxu0 0
        %4924 = vmatpush1.bf16.msra.mxu0 0
        %4925 = vmatprep.mubr.bf16.mxu0 0
        %4926 = vmatmul.mubr.bf16.gmra.mrb[0].mxu0 %v4785
        %v4927 = vpop.f32.mrb[0].mxu0
        %v4928 = vadd.f32 %v4782, %v4927
        %v4929 = vpop.f32.mrb[0].mxu0
        %v4930 = vadd.f32 %v4782, %v4929
        %v4931 = vpop.f32.mrb[0].mxu0
        %v4932 = vpop.f32.mrb[0].mxu0
        %4933 = vdwg.mxu0
        %4934 = vmatprep.subr.bf16.mxu0 %v4809
        %4935 = vmatpush1.bf16.msra.mxu0 %v4806
        %4936 = vmatprep.subr.bf16.mxu0 0
        %4937 = vmatpush1.bf16.msra.mxu0 0
        %4938 = vmatprep.subr.bf16.mxu0 0
        %4939 = vmatpush1.bf16.msra.mxu0 0
        %4940 = vmatprep.subr.bf16.mxu0 0
        %4941 = vmatpush1.bf16.msra.mxu0 0
        %4942 = vmatprep.subr.bf16.mxu0 0
        %4943 = vmatpush1.bf16.msra.mxu0 0
        %4944 = vmatprep.subr.bf16.mxu0 0
        %4945 = vmatpush1.bf16.msra.mxu0 0
        %4946 = vmatprep.subr.bf16.mxu0 0
        %4947 = vmatpush1.bf16.msra.mxu0 0
        %4948 = vmatprep.subr.bf16.mxu0 0
        %4949 = vmatpush1.bf16.msra.mxu0 0
        %4950 = vmatprep.subr.bf16.mxu0 0
        %4951 = vmatpush1.bf16.msra.mxu0 0
        %4952 = vmatprep.subr.bf16.mxu0 0
        %4953 = vmatpush1.bf16.msra.mxu0 0
        %4954 = vmatprep.subr.bf16.mxu0 0
        %4955 = vmatpush1.bf16.msra.mxu0 0
        %4956 = vmatprep.subr.bf16.mxu0 0
        %4957 = vmatpush1.bf16.msra.mxu0 0
        %4958 = vmatprep.subr.bf16.mxu0 0
        %4959 = vmatpush1.bf16.msra.mxu0 0
        %4960 = vmatprep.subr.bf16.mxu0 0
        %4961 = vmatpush1.bf16.msra.mxu0 0
        %4962 = vmatprep.subr.bf16.mxu0 0
        %4963 = vmatpush1.bf16.msra.mxu0 0
        %4964 = vmatprep.subr.bf16.mxu0 0
        %4965 = vmatpush1.bf16.msra.mxu0 0
        %4966 = vmatprep.mubr.bf16.mxu0 0
        %4967 = vmatmul.mubr.bf16.gmra.mrb[0].mxu0 %v4785
        %v4968 = vpop.f32.mrb[0].mxu0
        %v4969 = vadd.f32 %v4782, %v4968
        %v4970 = vpop.f32.mrb[0].mxu0
        %v4971 = vadd.f32 %v4782, %v4970
        %v4972 = vpop.f32.mrb[0].mxu0
        %v4973 = vpop.f32.mrb[0].mxu0
        %4974 = vdwg.mxu0
        %vm4975 = vcmp.ge.f32.partialorder %v4846, 0.0
        %vm4976 = vcmp.ge.f32.partialorder %v4848, 0.0
        %vm4977 = vcmp.ge.f32.partialorder %v4887, 0.0
        %vm4978 = vcmp.ge.f32.partialorder %v4889, 0.0
        %vm4979 = vcmp.ge.f32.partialorder %v4928, 0.0
        %vm4980 = vcmp.ge.f32.partialorder %v4930, 0.0
        %vm4981 = vcmp.ge.f32.partialorder %v4969, 0.0
        %vm4982 = vcmp.ge.f32.partialorder %v4971, 0.0
        %s4983 = scalar_lea.vmem %s4, 40
        %v4984 = vld [vmem:[%s4983] sm:$0xff]
        %4986 = vset.pattern.permute.xlu0 0
        %4987 = vperm.xlu0 %4986, %v4984
        %v4988 = vpop.permute.xlu0 %4987
        %v4990 = vmul.f32 %v4988, %v4846
        %v4991 = vmul.f32 %v4988, %v4848
        %v4992 = vmul.f32 %v4988, %v4887
        %v4993 = vmul.f32 %v4988, %v4889
        %v4994 = vmul.f32 %v4988, %v4928
        %v4995 = vmul.f32 %v4988, %v4930
        %v4996 = vmul.f32 %v4988, %v4969
        %v4997 = vmul.f32 %v4988, %v4971
        %v4998 = vsel %vm4975, %v4846, %v4990
        %v4999 = vsel %vm4976, %v4848, %v4991
        %v5000 = vsel %vm4977, %v4887, %v4992
        %v5001 = vsel %vm4978, %v4889, %v4993
        %v5002 = vsel %vm4979, %v4928, %v4994
        %v5003 = vsel %vm4980, %v4930, %v4995
        %v5004 = vsel %vm4981, %v4969, %v4996
        %v5005 = vsel %vm4982, %v4971, %v4997
        %5006 = vrot.lane.b32.xlu0 %v4998, 64
        %v5007 = vpop.permute.xlu0 %5006
        %5008 = vrot.lane.b32.xlu0 %v4999, 64
        %v5009 = vpop.permute.xlu0 %5008
        %5010 = vrot.lane.b32.xlu0 %v5000, 64
        %v5011 = vpop.permute.xlu0 %5010
        %5012 = vrot.lane.b32.xlu0 %v5001, 64
        %v5013 = vpop.permute.xlu0 %5012
        %5014 = vrot.lane.b32.xlu0 %v5002, 64
        %v5015 = vpop.permute.xlu0 %5014
        %5016 = vrot.lane.b32.xlu0 %v5003, 64
        %v5017 = vpop.permute.xlu0 %5016
        %5018 = vrot.lane.b32.xlu0 %v5004, 64
        %v5019 = vpop.permute.xlu0 %5018
        %5020 = vrot.lane.b32.xlu0 %v5005, 64
        %v5021 = vpop.permute.xlu0 %5020
        %v5022 = vsel %vm648, %v5019, %v5021
        %v5023 = vsel %vm648, %v5017, %v5019
        %v5024 = vsel %vm648, %v5015, %v5017
        %v5025 = vsel %vm648, %v5013, %v5015
        %v5026 = vsel %vm648, %v5011, %v5013
        %v5027 = vsel %vm648, %v5009, %v5011
        %v5028 = vsel %vm648, %v5007, %v5009
        %v5029 = vsel %vm648, %v5021, %v5007
        %v5030 = vmul.f32 %v661, %v5029
        %v5031 = vmul.f32 %v665, %v5028
        %v5032 = vmul.f32 %v669, %v5027
        %v5033 = vmul.f32 %v673, %v5026
        %v5034 = vmul.f32 %v677, %v5025
        %v5035 = vmul.f32 %v681, %v5024
        %v5036 = vmul.f32 %v685, %v5023
        %v5037 = vmul.f32 %v689, %v5022
        %v5038 = vmul.f32 %v710, %v5028
        %v5039 = vmul.f32 %v714, %v5027
        %v5040 = vmul.f32 %v718, %v5026
        %v5041 = vmul.f32 %v722, %v5025
        %v5042 = vmul.f32 %v726, %v5024
        %v5043 = vmul.f32 %v730, %v5023
        %v5044 = vmul.f32 %v734, %v5022
        %v5045 = vmul.f32 %v738, %v5029
        %s5046 = scalar_lea.vmem %s5, 368
        %v5047 = vld [vmem:[%s5046] sm:$0xff]
        %5049 = vset.pattern.permute.xlu0 0
        %5050 = vperm.xlu0 %5049, %v5047
        %v5051 = vpop.permute.xlu0 %5050
        %v5053 = vmul.f32 %v5051, %v5030
        %v5054 = vmul.f32 %v5051, %v5031
        %v5055 = vmul.f32 %v5051, %v5032
        %v5056 = vmul.f32 %v5051, %v5033
        %v5057 = vmul.f32 %v5051, %v5034
        %v5058 = vmul.f32 %v5051, %v5035
        %v5059 = vmul.f32 %v5051, %v5036
        %v5060 = vmul.f32 %v5051, %v5037
        %s5061 = scalar_lea.vmem %s5, 392
        %v5062 = vld [vmem:[%s5061] sm:$0xff]
        %5064 = vset.pattern.permute.xlu0 0
        %5065 = vperm.xlu0 %5064, %v5062
        %v5066 = vpop.permute.xlu0 %5065
        %v5068 = vmul.f32 %v5066, %v4998
        %v5069 = vmul.f32 %v5066, %v4999
        %v5070 = vmul.f32 %v5066, %v5000
        %v5071 = vmul.f32 %v5066, %v5001
        %v5072 = vmul.f32 %v5066, %v5002
        %v5073 = vmul.f32 %v5066, %v5003
        %v5074 = vmul.f32 %v5066, %v5004
        %v5075 = vmul.f32 %v5066, %v5005
        %v5076 = vadd.f32 %v5053, %v5068
        %v5077 = vadd.f32 %v5054, %v5069
        %v5078 = vadd.f32 %v5055, %v5070
        %v5079 = vadd.f32 %v5056, %v5071
        %v5080 = vadd.f32 %v5057, %v5072
        %v5081 = vadd.f32 %v5058, %v5073
        %v5082 = vadd.f32 %v5059, %v5074
        %v5083 = vadd.f32 %v5060, %v5075
        %s5084 = scalar_lea.vmem %s5, 416
        %v5085 = vld [vmem:[%s5084] sm:$0xff]
        %5087 = vset.pattern.permute.xlu0 0
        %5088 = vperm.xlu0 %5087, %v5085
        %v5089 = vpop.permute.xlu0 %5088
        %v5091 = vmul.f32 %v5089, %v5038
        %v5092 = vmul.f32 %v5089, %v5039
        %v5093 = vmul.f32 %v5089, %v5040
        %v5094 = vmul.f32 %v5089, %v5041
        %v5095 = vmul.f32 %v5089, %v5042
        %v5096 = vmul.f32 %v5089, %v5043
        %v5097 = vmul.f32 %v5089, %v5044
        %v5098 = vmul.f32 %v5089, %v5045
        %v5099 = vadd.f32 %v5076, %v5091
        %v5100 = vadd.f32 %v5077, %v5092
        %v5101 = vadd.f32 %v5078, %v5093
        %v5102 = vadd.f32 %v5079, %v5094
        %v5103 = vadd.f32 %v5080, %v5095
        %v5104 = vadd.f32 %v5081, %v5096
        %v5105 = vadd.f32 %v5082, %v5097
        %v5106 = vadd.f32 %v5083, %v5098
        %5107 = vrot.lane.b32.xlu0 %v5099, 32
        %v5108 = vpop.permute.xlu0 %5107
        %5109 = vrot.lane.b32.xlu0 %v5100, 32
        %v5110 = vpop.permute.xlu0 %5109
        %5111 = vrot.lane.b32.xlu0 %v5101, 32
        %v5112 = vpop.permute.xlu0 %5111
        %5113 = vrot.lane.b32.xlu0 %v5102, 32
        %v5114 = vpop.permute.xlu0 %5113
        %5115 = vrot.lane.b32.xlu0 %v5103, 32
        %v5116 = vpop.permute.xlu0 %5115
        %5117 = vrot.lane.b32.xlu0 %v5104, 32
        %v5118 = vpop.permute.xlu0 %5117
        %5119 = vrot.lane.b32.xlu0 %v5105, 32
        %v5120 = vpop.permute.xlu0 %5119
        %5121 = vrot.lane.b32.xlu0 %v5106, 32
        %v5122 = vpop.permute.xlu0 %5121
        %v5123 = vsel %vm4273, %v5120, %v5122
        %v5124 = vsel %vm4273, %v5118, %v5120
        %v5125 = vsel %vm4273, %v5116, %v5118
        %v5126 = vsel %vm4273, %v5114, %v5116
        %v5127 = vsel %vm4273, %v5112, %v5114
        %v5128 = vsel %vm4273, %v5110, %v5112
        %v5129 = vsel %vm4273, %v5108, %v5110
        %v5130 = vsel %vm4273, %v5122, %v5108
        %v5131 = vmul.f32 %v5130, %v4290
        %v5132 = vmul.f32 %v5129, %v4294
        %v5133 = vmul.f32 %v5128, %v4298
        %v5134 = vmul.f32 %v5127, %v4302
        %v5135 = vmul.f32 %v5126, %v4306
        %v5136 = vmul.f32 %v5125, %v4310
        %v5137 = vmul.f32 %v5124, %v4314
        %v5138 = vmul.f32 %v5123, %v4318
        %s5139 = scalar_lea.vmem %s5, 376
        %v5140 = vld [vmem:[%s5139] sm:$0xff]
        %5142 = vset.pattern.permute.xlu0 0
        %5143 = vperm.xlu0 %5142, %v5140
        %v5144 = vpop.permute.xlu0 %5143
        %v5146 = vmul.f32 %v5144, %v5030
        %v5147 = vmul.f32 %v5144, %v5031
        %v5148 = vmul.f32 %v5144, %v5032
        %v5149 = vmul.f32 %v5144, %v5033
        %v5150 = vmul.f32 %v5144, %v5034
        %v5151 = vmul.f32 %v5144, %v5035
        %v5152 = vmul.f32 %v5144, %v5036
        %v5153 = vmul.f32 %v5144, %v5037
        %s5154 = scalar_lea.vmem %s5, 400
        %v5155 = vld [vmem:[%s5154] sm:$0xff]
        %5157 = vset.pattern.permute.xlu0 0
        %5158 = vperm.xlu0 %5157, %v5155
        %v5159 = vpop.permute.xlu0 %5158
        %v5161 = vmul.f32 %v5159, %v4998
        %v5162 = vmul.f32 %v5159, %v4999
        %v5163 = vmul.f32 %v5159, %v5000
        %v5164 = vmul.f32 %v5159, %v5001
        %v5165 = vmul.f32 %v5159, %v5002
        %v5166 = vmul.f32 %v5159, %v5003
        %v5167 = vmul.f32 %v5159, %v5004
        %v5168 = vmul.f32 %v5159, %v5005
        %v5169 = vadd.f32 %v5146, %v5161
        %v5170 = vadd.f32 %v5147, %v5162
        %v5171 = vadd.f32 %v5148, %v5163
        %v5172 = vadd.f32 %v5149, %v5164
        %v5173 = vadd.f32 %v5150, %v5165
        %v5174 = vadd.f32 %v5151, %v5166
        %v5175 = vadd.f32 %v5152, %v5167
        %v5176 = vadd.f32 %v5153, %v5168
        %s5177 = scalar_lea.vmem %s5, 424
        %v5178 = vld [vmem:[%s5177] sm:$0xff]
        %5180 = vset.pattern.permute.xlu0 0
        %5181 = vperm.xlu0 %5180, %v5178
        %v5182 = vpop.permute.xlu0 %5181
        %v5184 = vmul.f32 %v5182, %v5038
        %v5185 = vmul.f32 %v5182, %v5039
        %v5186 = vmul.f32 %v5182, %v5040
        %v5187 = vmul.f32 %v5182, %v5041
        %v5188 = vmul.f32 %v5182, %v5042
        %v5189 = vmul.f32 %v5182, %v5043
        %v5190 = vmul.f32 %v5182, %v5044
        %v5191 = vmul.f32 %v5182, %v5045
        %v5192 = vadd.f32 %v5169, %v5184
        %v5193 = vadd.f32 %v5170, %v5185
        %v5194 = vadd.f32 %v5171, %v5186
        %v5195 = vadd.f32 %v5172, %v5187
        %v5196 = vadd.f32 %v5173, %v5188
        %v5197 = vadd.f32 %v5174, %v5189
        %v5198 = vadd.f32 %v5175, %v5190
        %v5199 = vadd.f32 %v5176, %v5191
        %v5200 = vadd.f32 %v5131, %v5192
        %v5201 = vadd.f32 %v5132, %v5193
        %v5202 = vadd.f32 %v5133, %v5194
        %v5203 = vadd.f32 %v5134, %v5195
        %v5204 = vadd.f32 %v5135, %v5196
        %v5205 = vadd.f32 %v5136, %v5197
        %v5206 = vadd.f32 %v5137, %v5198
        %v5207 = vadd.f32 %v5138, %v5199
        %s5208 = scalar_lea.vmem %s6, 40
        %v5209 = vld [vmem:[%s5208] sm:$0xff]
        %5211 = vset.pattern.permute.xlu0 0
        %5212 = vperm.xlu0 %5211, %v5209
        %v5213 = vpop.permute.xlu0 %5212
        %v5215 = vadd.f32 %v5200, %v5213
        %v5216 = vadd.f32 %v5201, %v5213
        %v5217 = vadd.f32 %v5202, %v5213
        %v5218 = vadd.f32 %v5203, %v5213
        %v5219 = vadd.f32 %v5204, %v5213
        %v5220 = vadd.f32 %v5205, %v5213
        %v5221 = vadd.f32 %v5206, %v5213
        %v5222 = vadd.f32 %v5207, %v5213
        %vm5223 = vcmp.ge.f32.partialorder %v5215, 0.0
        %vm5224 = vcmp.ge.f32.partialorder %v5216, 0.0
        %vm5225 = vcmp.ge.f32.partialorder %v5217, 0.0
        %vm5226 = vcmp.ge.f32.partialorder %v5218, 0.0
        %vm5227 = vcmp.ge.f32.partialorder %v5219, 0.0
        %vm5228 = vcmp.ge.f32.partialorder %v5220, 0.0
        %vm5229 = vcmp.ge.f32.partialorder %v5221, 0.0
        %vm5230 = vcmp.ge.f32.partialorder %v5222, 0.0
        %s5231 = scalar_lea.vmem %s7, 40
        %v5232 = vld [vmem:[%s5231] sm:$0xff]
        %5234 = vset.pattern.permute.xlu0 0
        %5235 = vperm.xlu0 %5234, %v5232
        %v5236 = vpop.permute.xlu0 %5235
        %v5238 = vmul.f32 %v5236, %v5215
        %v5239 = vmul.f32 %v5236, %v5216
        %v5240 = vmul.f32 %v5236, %v5217
        %v5241 = vmul.f32 %v5236, %v5218
        %v5242 = vmul.f32 %v5236, %v5219
        %v5243 = vmul.f32 %v5236, %v5220
        %v5244 = vmul.f32 %v5236, %v5221
        %v5245 = vmul.f32 %v5236, %v5222
        %v5246 = vsel %vm5223, %v5215, %v5238
        %v5247 = vsel %vm5224, %v5216, %v5239
        %v5248 = vsel %vm5225, %v5217, %v5240
        %v5249 = vsel %vm5226, %v5218, %v5241
        %v5250 = vsel %vm5227, %v5219, %v5242
        %v5251 = vsel %vm5228, %v5220, %v5243
        %v5252 = vsel %vm5229, %v5221, %v5244
        %v5253 = vsel %vm5230, %v5222, %v5245
        %s5254 = scalar_lea.vmem %s8, 20
        %v5255 = vld [vmem:[%s5254] sm:$0xf]
        %v5256 = vpack.c.bf16 %v5246, %v5246
        %v5257 = vpack.c.bf16 %v5247, %v5247
        %v5258 = vpack.c.bf16 %v5248, %v5248
        %v5259 = vpack.c.bf16 %v5249, %v5249
        %v5260 = vpack.c.bf16 %v5250, %v5250
        %v5261 = vpack.c.bf16 %v5251, %v5251
        %v5262 = vpack.c.bf16 %v5252, %v5252
        %v5263 = vpack.c.bf16 %v5253, %v5253
        %s5264 = scalar_lea.vmem %s9, 40
        %v5265 = vld [vmem:[%s5264] sm:$0xff]
        %5267 = vset.pattern.permute.xlu0 0
        %5268 = vperm.xlu0 %5267, %v5265
        %v5269 = vpop.permute.xlu0 %5268
        %v5272 = vsel %vm407, %v5255, 0
        %v5275 = vsel %vm411, %v5256, 0
        %v5278 = vsel %vm411, %v5257, 0
        %v5281 = vsel %vm411, %v5258, 0
        %v5284 = vsel %vm411, %v5259, 0
        %v5287 = vsel %vm411, %v5260, 0
        %v5290 = vsel %vm411, %v5261, 0
        %v5293 = vsel %vm411, %v5262, 0
        %v5296 = vsel %vm411, %v5263, 0
        %5298 = vmatprep.subr.bf16.mxu0 %v5278
        %5299 = vmatpush1.bf16.msra.mxu0 %v5275
        %5300 = vmatprep.subr.bf16.mxu0 0
        %5301 = vmatpush1.bf16.msra.mxu0 0
        %5302 = vmatprep.subr.bf16.mxu0 0
        %5303 = vmatpush1.bf16.msra.mxu0 0
        %5304 = vmatprep.subr.bf16.mxu0 0
        %5305 = vmatpush1.bf16.msra.mxu0 0
        %5306 = vmatprep.subr.bf16.mxu0 0
        %5307 = vmatpush1.bf16.msra.mxu0 0
        %5308 = vmatprep.subr.bf16.mxu0 0
        %5309 = vmatpush1.bf16.msra.mxu0 0
        %5310 = vmatprep.subr.bf16.mxu0 0
        %5311 = vmatpush1.bf16.msra.mxu0 0
        %5312 = vmatprep.subr.bf16.mxu0 0
        %5313 = vmatpush1.bf16.msra.mxu0 0
        %5314 = vmatprep.subr.bf16.mxu0 0
        %5315 = vmatpush1.bf16.msra.mxu0 0
        %5316 = vmatprep.subr.bf16.mxu0 0
        %5317 = vmatpush1.bf16.msra.mxu0 0
        %5318 = vmatprep.subr.bf16.mxu0 0
        %5319 = vmatpush1.bf16.msra.mxu0 0
        %5320 = vmatprep.subr.bf16.mxu0 0
        %5321 = vmatpush1.bf16.msra.mxu0 0
        %5322 = vmatprep.subr.bf16.mxu0 0
        %5323 = vmatpush1.bf16.msra.mxu0 0
        %5324 = vmatprep.subr.bf16.mxu0 0
        %5325 = vmatpush1.bf16.msra.mxu0 0
        %5326 = vmatprep.subr.bf16.mxu0 0
        %5327 = vmatpush1.bf16.msra.mxu0 0
        %5328 = vmatprep.subr.bf16.mxu0 0
        %5329 = vmatpush1.bf16.msra.mxu0 0
        %5330 = vmatprep.mubr.bf16.mxu0 0
        %5331 = vmatmul.mubr.bf16.gmra.mrb[0].mxu0 %v5272
        %v5332 = vpop.f32.mrb[0].mxu0
        %v5333 = vadd.f32 %v5269, %v5332
        %v5334 = vpop.f32.mrb[0].mxu0
        %v5335 = vadd.f32 %v5269, %v5334
        %v5336 = vpop.f32.mrb[0].mxu0
        %v5337 = vpop.f32.mrb[0].mxu0
        %5338 = vdwg.mxu0
        %5339 = vmatprep.subr.bf16.mxu0 %v5284
        %5340 = vmatpush1.bf16.msra.mxu0 %v5281
        %5341 = vmatprep.subr.bf16.mxu0 0
        %5342 = vmatpush1.bf16.msra.mxu0 0
        %5343 = vmatprep.subr.bf16.mxu0 0
        %5344 = vmatpush1.bf16.msra.mxu0 0
        %5345 = vmatprep.subr.bf16.mxu0 0
        %5346 = vmatpush1.bf16.msra.mxu0 0
        %5347 = vmatprep.subr.bf16.mxu0 0
        %5348 = vmatpush1.bf16.msra.mxu0 0
        %5349 = vmatprep.subr.bf16.mxu0 0
        %5350 = vmatpush1.bf16.msra.mxu0 0
        %5351 = vmatprep.subr.bf16.mxu0 0
        %5352 = vmatpush1.bf16.msra.mxu0 0
        %5353 = vmatprep.subr.bf16.mxu0 0
        %5354 = vmatpush1.bf16.msra.mxu0 0
        %5355 = vmatprep.subr.bf16.mxu0 0
        %5356 = vmatpush1.bf16.msra.mxu0 0
        %5357 = vmatprep.subr.bf16.mxu0 0
        %5358 = vmatpush1.bf16.msra.mxu0 0
        %5359 = vmatprep.subr.bf16.mxu0 0
        %5360 = vmatpush1.bf16.msra.mxu0 0
        %5361 = vmatprep.subr.bf16.mxu0 0
        %5362 = vmatpush1.bf16.msra.mxu0 0
        %5363 = vmatprep.subr.bf16.mxu0 0
        %5364 = vmatpush1.bf16.msra.mxu0 0
        %5365 = vmatprep.subr.bf16.mxu0 0
        %5366 = vmatpush1.bf16.msra.mxu0 0
        %5367 = vmatprep.subr.bf16.mxu0 0
        %5368 = vmatpush1.bf16.msra.mxu0 0
        %5369 = vmatprep.subr.bf16.mxu0 0
        %5370 = vmatpush1.bf16.msra.mxu0 0
        %5371 = vmatprep.mubr.bf16.mxu0 0
        %5372 = vmatmul.mubr.bf16.gmra.mrb[0].mxu0 %v5272
        %v5373 = vpop.f32.mrb[0].mxu0
        %v5374 = vadd.f32 %v5269, %v5373
        %v5375 = vpop.f32.mrb[0].mxu0
        %v5376 = vadd.f32 %v5269, %v5375
        %v5377 = vpop.f32.mrb[0].mxu0
        %v5378 = vpop.f32.mrb[0].mxu0
        %5379 = vdwg.mxu0
        %5380 = vmatprep.subr.bf16.mxu0 %v5290
        %5381 = vmatpush1.bf16.msra.mxu0 %v5287
        %5382 = vmatprep.subr.bf16.mxu0 0
        %5383 = vmatpush1.bf16.msra.mxu0 0
        %5384 = vmatprep.subr.bf16.mxu0 0
        %5385 = vmatpush1.bf16.msra.mxu0 0
        %5386 = vmatprep.subr.bf16.mxu0 0
        %5387 = vmatpush1.bf16.msra.mxu0 0
        %5388 = vmatprep.subr.bf16.mxu0 0
        %5389 = vmatpush1.bf16.msra.mxu0 0
        %5390 = vmatprep.subr.bf16.mxu0 0
        %5391 = vmatpush1.bf16.msra.mxu0 0
        %5392 = vmatprep.subr.bf16.mxu0 0
        %5393 = vmatpush1.bf16.msra.mxu0 0
        %5394 = vmatprep.subr.bf16.mxu0 0
        %5395 = vmatpush1.bf16.msra.mxu0 0
        %5396 = vmatprep.subr.bf16.mxu0 0
        %5397 = vmatpush1.bf16.msra.mxu0 0
        %5398 = vmatprep.subr.bf16.mxu0 0
        %5399 = vmatpush1.bf16.msra.mxu0 0
        %5400 = vmatprep.subr.bf16.mxu0 0
        %5401 = vmatpush1.bf16.msra.mxu0 0
        %5402 = vmatprep.subr.bf16.mxu0 0
        %5403 = vmatpush1.bf16.msra.mxu0 0
        %5404 = vmatprep.subr.bf16.mxu0 0
        %5405 = vmatpush1.bf16.msra.mxu0 0
        %5406 = vmatprep.subr.bf16.mxu0 0
        %5407 = vmatpush1.bf16.msra.mxu0 0
        %5408 = vmatprep.subr.bf16.mxu0 0
        %5409 = vmatpush1.bf16.msra.mxu0 0
        %5410 = vmatprep.subr.bf16.mxu0 0
        %5411 = vmatpush1.bf16.msra.mxu0 0
        %5412 = vmatprep.mubr.bf16.mxu0 0
        %5413 = vmatmul.mubr.bf16.gmra.mrb[0].mxu0 %v5272
        %v5414 = vpop.f32.mrb[0].mxu0
        %v5415 = vadd.f32 %v5269, %v5414
        %v5416 = vpop.f32.mrb[0].mxu0
        %v5417 = vadd.f32 %v5269, %v5416
        %v5418 = vpop.f32.mrb[0].mxu0
        %v5419 = vpop.f32.mrb[0].mxu0
        %5420 = vdwg.mxu0
        %5421 = vmatprep.subr.bf16.mxu0 %v5296
        %5422 = vmatpush1.bf16.msra.mxu0 %v5293
        %5423 = vmatprep.subr.bf16.mxu0 0
        %5424 = vmatpush1.bf16.msra.mxu0 0
        %5425 = vmatprep.subr.bf16.mxu0 0
        %5426 = vmatpush1.bf16.msra.mxu0 0
        %5427 = vmatprep.subr.bf16.mxu0 0
        %5428 = vmatpush1.bf16.msra.mxu0 0
        %5429 = vmatprep.subr.bf16.mxu0 0
        %5430 = vmatpush1.bf16.msra.mxu0 0
        %5431 = vmatprep.subr.bf16.mxu0 0
        %5432 = vmatpush1.bf16.msra.mxu0 0
        %5433 = vmatprep.subr.bf16.mxu0 0
        %5434 = vmatpush1.bf16.msra.mxu0 0
        %5435 = vmatprep.subr.bf16.mxu0 0
        %5436 = vmatpush1.bf16.msra.mxu0 0
        %5437 = vmatprep.subr.bf16.mxu0 0
        %5438 = vmatpush1.bf16.msra.mxu0 0
        %5439 = vmatprep.subr.bf16.mxu0 0
        %5440 = vmatpush1.bf16.msra.mxu0 0
        %5441 = vmatprep.subr.bf16.mxu0 0
        %5442 = vmatpush1.bf16.msra.mxu0 0
        %5443 = vmatprep.subr.bf16.mxu0 0
        %5444 = vmatpush1.bf16.msra.mxu0 0
        %5445 = vmatprep.subr.bf16.mxu0 0
        %5446 = vmatpush1.bf16.msra.mxu0 0
        %5447 = vmatprep.subr.bf16.mxu0 0
        %5448 = vmatpush1.bf16.msra.mxu0 0
        %5449 = vmatprep.subr.bf16.mxu0 0
        %5450 = vmatpush1.bf16.msra.mxu0 0
        %5451 = vmatprep.subr.bf16.mxu0 0
        %5452 = vmatpush1.bf16.msra.mxu0 0
        %5453 = vmatprep.mubr.bf16.mxu0 0
        %5454 = vmatmul.mubr.bf16.gmra.mrb[0].mxu0 %v5272
        %v5455 = vpop.f32.mrb[0].mxu0
        %v5456 = vadd.f32 %v5269, %v5455
        %v5457 = vpop.f32.mrb[0].mxu0
        %v5458 = vadd.f32 %v5269, %v5457
        %v5459 = vpop.f32.mrb[0].mxu0
        %v5460 = vpop.f32.mrb[0].mxu0
        %5461 = vdwg.mxu0
        %v5462 = vadd.f32 %v5333, %v4759
        %v5463 = vadd.f32 %v5335, %v4760
        %v5464 = vadd.f32 %v5374, %v4761
        %v5465 = vadd.f32 %v5376, %v4762
        %v5466 = vadd.f32 %v5415, %v4763
        %v5467 = vadd.f32 %v5417, %v4764
        %v5468 = vadd.f32 %v5456, %v4765
        %v5469 = vadd.f32 %v5458, %v4766
        %5470 = vst [vmem:[%s375] sm:$0xff] %v5462
        %5471 = vst [vmem:[%s375 + $0x8] sm:$0xff] %v5463
        %5472 = vst [vmem:[%s375 + $0x10] sm:$0xff] %v5464
        %5473 = vst [vmem:[%s375 + $0x18] sm:$0xff] %v5465
        %5474 = vst [vmem:[%s375 + $0x20] sm:$0xff] %v5466
        %5475 = vst [vmem:[%s375 + $0x28] sm:$0xff] %v5467
        %5476 = vst [vmem:[%s375 + $0x30] sm:$0xff] %v5468
        %5477 = vst [vmem:[%s375 + $0x38] sm:$0xff] %v5469
        %s5478 = sand.u32 %s250, 1
        %s5479 = scalar_lea.sflag [#allocation4], %s5478
        %s5480 = sand.u32 %s250, 1
        %s5481 = smul.addr %s5480, 64
        %s5482 = scalar_lea.vmem [#allocation5], %s5481
        // Predicated region
        $region65: #{tpu_custom_call.1} parent=59 // pred_check
          %p5483 = pneg %p260
        $region66: #{tpu_custom_call.1} parent=59 // pred_check_branch
          %5485 = sbr.rel (%p5483) target = $region68
        $region67: #{tpu_custom_call.1} parent=59 // pred_region
          %s5487 = ssub.s32 1024, 1024
          %5488 = vsyncadd %s5479, %s5487
          %s5489 = smul.addr %s27, 8
          %s5490 = smul.addr %s5489, 128
          %s5491 = scalar_lea.hbm %s10, %s5490
          %s5493 = sshll.u32 %s5482, 4
          %s5494 = int_to_ptr.vmem [resolvable:$true] %s5493
          %5496 = dma.vmem_to_hbm [thread:$0]  %s5494, 1024, %s5491, %s5479
        $region68: #{tpu_custom_call.1} parent=59 // pred_fallthru
          _
      $region60: #{tpu_custom_call.1} parent=5 // pred_fallthru
        _
      %p5497 = scmp.le.s32.totalorder 2, %s22
      // Predicated region
      $region69: #{tpu_custom_call.1} parent=5 // pred_check
        %p5498 = pneg %p5497
      $region70: #{tpu_custom_call.1} parent=5 // pred_check_branch
        %5500 = sbr.rel (%p5498) target = $region72
      $region71: #{tpu_custom_call.1} parent=5 // pred_region
        %s5501 = ssub.s32 %s22, 2
        // Predicated region
        $region73: #{tpu_custom_call.1} parent=71 // pred_check
          %p5502 = pneg %p266
        $region74: #{tpu_custom_call.1} parent=71 // pred_check_branch
          %5504 = sbr.rel (%p5502) target = $region76
        $region75: #{tpu_custom_call.1} parent=71 // pred_region
          %s5505 = sand.u32 %s251, 1
          %s5506 = scalar_lea.sflag [#allocation4], %s5505
          %s5507 = sand.u32 %s251, 1
          %s5508 = smul.addr %s5507, 64
          %s5509 = scalar_lea.vmem [#allocation5], %s5508
          %5510 = dma.done %s5506, 1024
        $region76: #{tpu_custom_call.1} parent=71 // pred_fallthru
          _
      $region72: #{tpu_custom_call.1} parent=5 // pred_fallthru
        _
    $region6: #{tpu_custom_call.1} parent=1 // loop_footer
      %s26 = sadd.s32 1, %s22
    $region7: #{tpu_custom_call.1} parent=1 // loop_footer_branch
      %21 = sbr.rel target = $region3
    $region8: #{tpu_custom_call.1} parent=1 // loop_exit
      _
    %5511 = vsyncpa [#allocation3], 1
    %s5512 = scalar_lea.sflag [#allocation3], 1
    %5513 = vsyncpa %s5512, 1
    %5514 = vsyncpa [#allocation4], 1
    %s5515 = scalar_lea.sflag [#allocation4], 1
    %5516 = vsyncpa %s5515, 1

</llo_original>
